<compile_context>
chip_gen: v6e
topology: v6e:2x2x1
jax: 0.10.0
libtpu: 0.0.40
codegen_flags: <defaults>
</compile_context>

<pallas_src>
from functools import partial

import jax
import jax.numpy as jnp
from jax import lax
from jax.experimental import pallas as pl
from jax.experimental.pallas import tpu as pltpu

_EPS = 1e-5
_CPARAMS = pltpu.CompilerParams(
    dimension_semantics=("arbitrary",),        # grid=(1,); see header note for scaling
    vmem_limit_bytes=32 * 1024 * 1024,         # explicit, fits v5e/v6e/v7x scoped VMEM
)


# ------------------------------ Pallas kernels -------------------------------

def _conv_bn_kernel(p_ref, w_ref, g_ref, b_ref, o_ref, *, eps, relu):
    # p:(M,K) bf16  w:(K,C) bf16  g/b:(1,C) f32  o:(M,C)
    # im2col conv (MXU, f32 accumulate) + training-mode BN (+ optional ReLU), fused.
    c = jnp.dot(p_ref[...], w_ref[...], preferred_element_type=jnp.float32)
    mean = jnp.mean(c, axis=0, keepdims=True)
    var = jnp.mean(jnp.square(c - mean), axis=0, keepdims=True)
    scale = g_ref[...] * lax.rsqrt(var + eps)
    shift = b_ref[...] - mean * scale
    y = c * scale + shift
    if relu:
        y = jnp.maximum(y, 0.0)
    o_ref[...] = y.astype(o_ref.dtype)


def _shortcut_bn_add_kernel(ps_ref, ws_ref, g_ref, b_ref, pool_ref, o_ref, *, eps):
    # Shortcut conv (MXU) + its training-mode BN (stats in-kernel) + pooled-branch
    # add.  pool_ref holds the zero-padded 3x3/stride-2 window SUM of bn2(conv2);
    # AvgPool2d(count_include_pad=True) always divides by 9, folded in here.
    cs = jnp.dot(ps_ref[...], ws_ref[...], preferred_element_type=jnp.float32)
    mean = jnp.mean(cs, axis=0, keepdims=True)
    var = jnp.mean(jnp.square(cs - mean), axis=0, keepdims=True)
    a_s = g_ref[...] * lax.rsqrt(var + eps)
    b_s = b_ref[...] - mean * a_s
    o_ref[...] = pool_ref[...] * (1.0 / 9.0) + cs * a_s + b_s


# ----------------------------- pallas_call wrappers ---------------------------

def _full_spec(shape):
    # whole array as one block (grid has a single step)
    return pl.BlockSpec(shape, lambda i: tuple(0 for _ in shape))


def conv_bn(patches, w_mat, gamma, beta, *, relu, out_dtype):
    M, K = patches.shape
    C = w_mat.shape[1]
    return pl.pallas_call(
        partial(_conv_bn_kernel, eps=_EPS, relu=relu),
        out_shape=jax.ShapeDtypeStruct((M, C), out_dtype),
        grid=(1,),
        in_specs=[_full_spec((M, K)), _full_spec((K, C)),
                  _full_spec((1, C)), _full_spec((1, C))],
        out_specs=_full_spec((M, C)),
        compiler_params=_CPARAMS,
    )(patches, w_mat,
      gamma.reshape(1, C).astype(jnp.float32),
      beta.reshape(1, C).astype(jnp.float32))


def shortcut_bn_add(patches_s, ws_mat, gamma, beta, pool_sum):
    M, K = patches_s.shape
    C = ws_mat.shape[1]
    return pl.pallas_call(
        partial(_shortcut_bn_add_kernel, eps=_EPS),
        out_shape=jax.ShapeDtypeStruct((M, C), jnp.float32),
        grid=(1,),
        in_specs=[_full_spec((M, K)), _full_spec((K, C)),
                  _full_spec((1, C)), _full_spec((1, C)),
                  _full_spec((M, C))],
        out_specs=_full_spec((M, C)),
        compiler_params=_CPARAMS,
    )(patches_s, ws_mat,
      gamma.reshape(1, C).astype(jnp.float32),
      beta.reshape(1, C).astype(jnp.float32),
      pool_sum)


# ------------------------------- JAX glue (layout) ----------------------------

def _im2col(x_nhwc, ksize, stride, pad):
    # Wrapper-side patch extraction (pure data movement; inputs here are tiny).
    # TODO(synk): at real channel counts read shifted NHWC views directly inside the
    # conv kernel (BlockSpec / manual DMA) instead of materializing 9*C-wide patches.
    n, h, w, c = x_nhwc.shape
    ho = (h + 2 * pad - ksize) // stride + 1
    wo = (w + 2 * pad - ksize) // stride + 1
    xp = jnp.pad(x_nhwc, ((0, 0), (pad, pad), (pad, pad), (0, 0)))
    cols = []
    for kh in range(ksize):
        for kw in range(ksize):
            cols.append(xp[:, kh:kh + (ho - 1) * stride + 1:stride,
                           kw:kw + (wo - 1) * stride + 1:stride, :])
    patches = jnp.stack(cols, axis=3)                  # (N, Ho, Wo, 9, C)
    return patches.reshape(n * ho * wo, ksize * ksize * c), (n, ho, wo)


def _window_sum(x_nhwc, ksize=3, stride=2, pad=1):
    # zero-padded 3x3/stride-2 window SUM (single fused pass, no (9,M,C) HBM stack)
    n, h, w, c = x_nhwc.shape
    ho = (h + 2 * pad - ksize) // stride + 1
    wo = (w + 2 * pad - ksize) // stride + 1
    xp = jnp.pad(x_nhwc, ((0, 0), (pad, pad), (pad, pad), (0, 0)))
    acc = None
    for kh in range(ksize):
        for kw in range(ksize):
            sl = xp[:, kh:kh + (ho - 1) * stride + 1:stride,
                    kw:kw + (wo - 1) * stride + 1:stride, :]
            acc = sl if acc is None else acc + sl
    return acc, (ho, wo)


def _w_to_mat(w_oihw):
    # (O, I, 3, 3) -> (kh, kw, I, O) -> (9*I, O), matching im2col column ordering
    o, i, kh, kw = w_oihw.shape
    return jnp.transpose(w_oihw, (2, 3, 1, 0)).reshape(kh * kw * i, o)


# -------------------------------- forward pass --------------------------------

def layer_type3_forward(x_nchw, params):
    x = jnp.transpose(x_nchw, (0, 2, 3, 1)).astype(jnp.float32)   # NHWC
    cout = params["w1"].shape[0]
    bf16 = jnp.bfloat16

    # --- type1: conv1 -> bn1(train) -> relu (one fused kernel; bias dropped —
    #     it is cancelled exactly by the BN batch-mean subtraction) ---
    p1, (n, h1, w1_) = _im2col(x, 3, 1, 1)
    out1 = conv_bn(p1.astype(bf16), _w_to_mat(params["w1"]).astype(bf16),
                   params["g1"], params["be1"], relu=True, out_dtype=bf16)
    out1 = out1.reshape(n, h1, w1_, cout)                         # bf16 NHWC

    # --- conv2 -> bn2(train), fused (stats in-kernel); z2 feeds the avg pool ---
    p2, (_, h2, w2_) = _im2col(out1, 3, 1, 1)                     # already bf16
    z2 = conv_bn(p2, _w_to_mat(params["w2"]).astype(bf16),
                 params["g"], params["be"], relu=False, out_dtype=jnp.float32)
    z2 = z2.reshape(n, h2, w2_, cout)                             # bn2(conv2), f32

    # --- avg-pool geometry: zero-padded window SUM of bn2(conv2); the /9 of
    #     AvgPool2d(count_include_pad=True) is applied inside kernel 3 ---
    pool_sum, (hp, wp) = _window_sum(z2, 3, 2, 1)
    pool_sum = pool_sum.reshape(n * hp * wp, cout)

    # --- shortcut conv (stride 2) + its bn(train) + pooled branch + add, fused ---
    ps, (_, hs, ws_) = _im2col(x, 3, 2, 1)
    assert (hs, ws_) == (hp, wp), "branch shapes must match (module uses stride=1)"
    out = shortcut_bn_add(ps.astype(bf16), _w_to_mat(params["ws"]).astype(bf16),
                          params["g"], params["be"], pool_sum)
    out = out.reshape(n, hp, wp, cout)
    return jnp.transpose(out, (0, 3, 1, 2))                       # back to NCHW


# ------------------------------ pure-JAX reference -----------------------------
# Faithful f32 reference (keeps the conv biases; their cancellation by training-mode
# BN is thereby verified, not assumed).

def _reference(x, params):
    def conv(inp, w, b, stride):
        y = lax.conv_general_dilated(
            inp, w, (stride, stride), ((1, 1), (1, 1)),
            dimension_numbers=("NCHW", "OIHW", "NCHW"),
            precision=lax.Precision.HIGHEST)
        return y + b[None, :, None, None]

    def bn(inp, g, b, eps=1e-5):
        mean = jnp.mean(inp, axis=(0, 2, 3), keepdims=True)
        var = jnp.mean(jnp.square(inp - mean), axis=(0, 2, 3), keepdims=True)
        return (inp - mean) / jnp.sqrt(var + eps) * g[None, :, None, None] \
            + b[None, :, None, None]

    out = jnp.maximum(bn(conv(x, params["w1"], params["b1"], 1),
                         params["g1"], params["be1"]), 0.0)
    out = bn(conv(out, params["w2"], params["b2"], 1), params["g"], params["be"])
    out = lax.reduce_window(
        out, 0.0, lax.add, (1, 1, 3, 3), (1, 1, 2, 2),
        ((0, 0), (0, 0), (1, 1), (1, 1))) / 9.0
    res = bn(conv(x, params["ws"], params["bs"], 2), params["g"], params["be"])
    return out + res


# ------------------------------------ main -------------------------------------

if __name__ == "__main__":
    N, CIN, COUT, H, W = 2, 4, 8, 16, 16

    key = jax.random.PRNGKey(0)
    ks = jax.random.split(key, 11)

    def nrm(k, shape, s=0.1):
        return (s * jax.random.normal(k, shape)).astype(jnp.float32)

    params = dict(
        w1=nrm(ks[0], (COUT, CIN, 3, 3)),
        b1=nrm(ks[1], (COUT,)),            # used by reference only (BN cancels it)
        w2=nrm(ks[2], (COUT, COUT, 3, 3)),
        b2=nrm(ks[3], (COUT,)),
        ws=nrm(ks[4], (COUT, CIN, 3, 3)),
        bs=nrm(ks[5], (COUT,)),
        g1=(1.0 + nrm(ks[6], (COUT,))),
        be1=nrm(ks[7], (COUT,)),
        g=(1.0 + nrm(ks[8], (COUT,))),
        be=nrm(ks[9], (COUT,)),
    )

    x = jax.random.normal(ks[10], (N, CIN, H, W), dtype=jnp.float32)

    fwd = jax.jit(lambda xx: layer_type3_forward(xx, params))
    out = fwd(x)
    jax.block_until_ready(out)

    ref = _reference(x, params)
    assert out.shape == ref.shape == (N, COUT, H // 2, W // 2)
    # bf16 MXU operands vs. f32-HIGHEST reference -> 3e-2 tolerance.
    assert jnp.allclose(out, ref, rtol=3e-2, atol=3e-2), (
        float(jnp.max(jnp.abs(out - ref))))

    print("KERNEL_OK")
</pallas_src>

<mosaic_0001>
module attributes {stable_mosaic.version = 11 : i64} {
  func.func @_conv_bn_kernel(%arg0: i32, %arg1: memref<512x36xbf16, #tpu.memory_space<vmem>>, %arg2: memref<36x8xbf16, #tpu.memory_space<vmem>>, %arg3: memref<1x8xf32, #tpu.memory_space<vmem>>, %arg4: memref<1x8xf32, #tpu.memory_space<vmem>>, %arg5: memref<512x8xbf16, #tpu.memory_space<vmem>>) attributes {dimension_semantics = [#tpu.dimension_semantics<arbitrary>], iteration_bounds = array<i64: 1>, scalar_prefetch = 0 : i64, scratch_operands = 0 : i64, tpu.core_type = #tpu.core_type<tc>, window_params = [{pipeline_mode = #tpu.pipeline_mode<synchronous>, transform_indices = @transform_0, window_bounds = array<i64: 512, 36>}, {pipeline_mode = #tpu.pipeline_mode<synchronous>, transform_indices = @transform_1, window_bounds = array<i64: 36, 8>}, {pipeline_mode = #tpu.pipeline_mode<synchronous>, transform_indices = @transform_2, window_bounds = array<i64: 1, 8>}, {pipeline_mode = #tpu.pipeline_mode<synchronous>, transform_indices = @transform_3, window_bounds = array<i64: 1, 8>}, {pipeline_mode = #tpu.pipeline_mode<synchronous>, transform_indices = @transform_4, window_bounds = array<i64: 512, 8>}]} {
    %c0 = arith.constant 0 : index
    %c0_0 = arith.constant 0 : index
    %0 = vector.load %arg1[%c0, %c0_0] : memref<512x36xbf16, #tpu.memory_space<vmem>>, vector<512x36xbf16>
    %c0_1 = arith.constant 0 : index
    %c0_2 = arith.constant 0 : index
    %1 = vector.load %arg2[%c0_1, %c0_2] : memref<36x8xbf16, #tpu.memory_space<vmem>>, vector<36x8xbf16>
    %cst = arith.constant dense<0.000000e+00> : vector<512x8xf32>
    %2 = tpu.matmul %0, %1, %cst {dimension_numbers = #tpu.dot_dimension_numbers<[1], [0], [0], [1], [0, 0, 1, 1], [], []>} : vector<512x36xbf16>, vector<36x8xbf16>, vector<512x8xf32> -> vector<512x8xf32>
    %cst_3 = arith.constant dense<0.000000e+00> : vector<8xf32>
    %3 = vector.multi_reduction <add>, %2, %cst_3 [0] : vector<512x8xf32> to vector<8xf32>
    %4 = vector.shape_cast %3 : vector<8xf32> to vector<1x8xf32>
    %cst_4 = arith.constant 5.120000e+02 : f32
    %5 = vector.broadcast %cst_4 : f32 to vector<1x8xf32>
    %6 = arith.divf %4, %5 : vector<1x8xf32>
    %7 = vector.broadcast %6 : vector<1x8xf32> to vector<512x8xf32>
    %8 = arith.subf %2, %7 : vector<512x8xf32>
    %9 = arith.mulf %8, %8 : vector<512x8xf32>
    %cst_5 = arith.constant dense<0.000000e+00> : vector<8xf32>
    %10 = vector.multi_reduction <add>, %9, %cst_5 [0] : vector<512x8xf32> to vector<8xf32>
    %11 = vector.shape_cast %10 : vector<8xf32> to vector<1x8xf32>
    %cst_6 = arith.constant 5.120000e+02 : f32
    %12 = vector.broadcast %cst_6 : f32 to vector<1x8xf32>
    %13 = arith.divf %11, %12 : vector<1x8xf32>
    %c0_7 = arith.constant 0 : index
    %c0_8 = arith.constant 0 : index
    %14 = vector.load %arg3[%c0_7, %c0_8] : memref<1x8xf32, #tpu.memory_space<vmem>>, vector<1x8xf32>
    %cst_9 = arith.constant 9.99999974E-6 : f32
    %15 = vector.broadcast %cst_9 : f32 to vector<1x8xf32>
    %16 = arith.addf %13, %15 : vector<1x8xf32>
    %17 = math.rsqrt %16 : vector<1x8xf32>
    %18 = arith.mulf %14, %17 : vector<1x8xf32>
    %c0_10 = arith.constant 0 : index
    %c0_11 = arith.constant 0 : index
    %19 = vector.load %arg4[%c0_10, %c0_11] : memref<1x8xf32, #tpu.memory_space<vmem>>, vector<1x8xf32>
    %20 = arith.mulf %6, %18 : vector<1x8xf32>
    %21 = arith.subf %19, %20 : vector<1x8xf32>
    %22 = vector.broadcast %18 : vector<1x8xf32> to vector<512x8xf32>
    %23 = arith.mulf %2, %22 : vector<512x8xf32>
    %24 = vector.broadcast %21 : vector<1x8xf32> to vector<512x8xf32>
    %25 = arith.addf %23, %24 : vector<512x8xf32>
    %cst_12 = arith.constant 0.000000e+00 : f32
    %26 = vector.broadcast %cst_12 : f32 to vector<512x8xf32>
    %27 = arith.maximumf %25, %26 : vector<512x8xf32>
    %28 = arith.truncf %27 : vector<512x8xf32> to vector<512x8xbf16>
    %c0_13 = arith.constant 0 : index
    %c0_14 = arith.constant 0 : index
    %29 = vector.load %arg5[%c0_13, %c0_14] : memref<512x8xbf16, #tpu.memory_space<vmem>>, vector<512x8xbf16>
    tpu.vector_store %arg5[%c0_13, %c0_14], %28 {strides = array<i32>} : memref<512x8xbf16, #tpu.memory_space<vmem>>, vector<512x8xbf16>,
    return
  }
  func.func @transform_0(%arg0: i32) -> (i32, i32) {
    %c0_i32 = arith.constant 0 : i32
    %c0_i32_0 = arith.constant 0 : i32
    %c0_i32_1 = arith.constant 0 : i32
    return %c0_i32, %c0_i32_0 : i32, i32
  }
  func.func @transform_1(%arg0: i32) -> (i32, i32) {
    %c0_i32 = arith.constant 0 : i32
    %c0_i32_0 = arith.constant 0 : i32
    %c0_i32_1 = arith.constant 0 : i32
    return %c0_i32, %c0_i32_0 : i32, i32
  }
  func.func @transform_2(%arg0: i32) -> (i32, i32) {
    %c0_i32 = arith.constant 0 : i32
    %c0_i32_0 = arith.constant 0 : i32
    %c0_i32_1 = arith.constant 0 : i32
    return %c0_i32, %c0_i32_0 : i32, i32
  }
  func.func @transform_3(%arg0: i32) -> (i32, i32) {
    %c0_i32 = arith.constant 0 : i32
    %c0_i32_0 = arith.constant 0 : i32
    %c0_i32_1 = arith.constant 0 : i32
    return %c0_i32, %c0_i32_0 : i32, i32
  }
  func.func @transform_4(%arg0: i32) -> (i32, i32) {
    %c0_i32 = arith.constant 0 : i32
    %c0_i32_0 = arith.constant 0 : i32
    %c0_i32_1 = arith.constant 0 : i32
    return %c0_i32, %c0_i32_0 : i32, i32
  }
}

module attributes {stable_mosaic.version = 11 : i64} {
  func.func @_conv_bn_kernel(%arg0: i32, %arg1: memref<512x72xbf16, #tpu.memory_space<vmem>>, %arg2: memref<72x8xbf16, #tpu.memory_space<vmem>>, %arg3: memref<1x8xf32, #tpu.memory_space<vmem>>, %arg4: memref<1x8xf32, #tpu.memory_space<vmem>>, %arg5: memref<512x8xf32, #tpu.memory_space<vmem>>) attributes {dimension_semantics = [#tpu.dimension_semantics<arbitrary>], iteration_bounds = array<i64: 1>, scalar_prefetch = 0 : i64, scratch_operands = 0 : i64, tpu.core_type = #tpu.core_type<tc>, window_params = [{pipeline_mode = #tpu.pipeline_mode<synchronous>, transform_indices = @transform_0, window_bounds = array<i64: 512, 72>}, {pipeline_mode = #tpu.pipeline_mode<synchronous>, transform_indices = @transform_1, window_bounds = array<i64: 72, 8>}, {pipeline_mode = #tpu.pipeline_mode<synchronous>, transform_indices = @transform_2, window_bounds = array<i64: 1, 8>}, {pipeline_mode = #tpu.pipeline_mode<synchronous>, transform_indices = @transform_3, window_bounds = array<i64: 1, 8>}, {pipeline_mode = #tpu.pipeline_mode<synchronous>, transform_indices = @transform_4, window_bounds = array<i64: 512, 8>}]} {
    %c0 = arith.constant 0 : index
    %c0_0 = arith.constant 0 : index
    %0 = vector.load %arg1[%c0, %c0_0] : memref<512x72xbf16, #tpu.memory_space<vmem>>, vector<512x72xbf16>
    %c0_1 = arith.constant 0 : index
    %c0_2 = arith.constant 0 : index
    %1 = vector.load %arg2[%c0_1, %c0_2] : memref<72x8xbf16, #tpu.memory_space<vmem>>, vector<72x8xbf16>
    %cst = arith.constant dense<0.000000e+00> : vector<512x8xf32>
    %2 = tpu.matmul %0, %1, %cst {dimension_numbers = #tpu.dot_dimension_numbers<[1], [0], [0], [1], [0, 0, 1, 1], [], []>} : vector<512x72xbf16>, vector<72x8xbf16>, vector<512x8xf32> -> vector<512x8xf32>
    %cst_3 = arith.constant dense<0.000000e+00> : vector<8xf32>
    %3 = vector.multi_reduction <add>, %2, %cst_3 [0] : vector<512x8xf32> to vector<8xf32>
    %4 = vector.shape_cast %3 : vector<8xf32> to vector<1x8xf32>
    %cst_4 = arith.constant 5.120000e+02 : f32
    %5 = vector.broadcast %cst_4 : f32 to vector<1x8xf32>
    %6 = arith.divf %4, %5 : vector<1x8xf32>
    %7 = vector.broadcast %6 : vector<1x8xf32> to vector<512x8xf32>
    %8 = arith.subf %2, %7 : vector<512x8xf32>
    %9 = arith.mulf %8, %8 : vector<512x8xf32>
    %cst_5 = arith.constant dense<0.000000e+00> : vector<8xf32>
    %10 = vector.multi_reduction <add>, %9, %cst_5 [0] : vector<512x8xf32> to vector<8xf32>
    %11 = vector.shape_cast %10 : vector<8xf32> to vector<1x8xf32>
    %cst_6 = arith.constant 5.120000e+02 : f32
    %12 = vector.broadcast %cst_6 : f32 to vector<1x8xf32>
    %13 = arith.divf %11, %12 : vector<1x8xf32>
    %c0_7 = arith.constant 0 : index
    %c0_8 = arith.constant 0 : index
    %14 = vector.load %arg3[%c0_7, %c0_8] : memref<1x8xf32, #tpu.memory_space<vmem>>, vector<1x8xf32>
    %cst_9 = arith.constant 9.99999974E-6 : f32
    %15 = vector.broadcast %cst_9 : f32 to vector<1x8xf32>
    %16 = arith.addf %13, %15 : vector<1x8xf32>
    %17 = math.rsqrt %16 : vector<1x8xf32>
    %18 = arith.mulf %14, %17 : vector<1x8xf32>
    %c0_10 = arith.constant 0 : index
    %c0_11 = arith.constant 0 : index
    %19 = vector.load %arg4[%c0_10, %c0_11] : memref<1x8xf32, #tpu.memory_space<vmem>>, vector<1x8xf32>
    %20 = arith.mulf %6, %18 : vector<1x8xf32>
    %21 = arith.subf %19, %20 : vector<1x8xf32>
    %22 = vector.broadcast %18 : vector<1x8xf32> to vector<512x8xf32>
    %23 = arith.mulf %2, %22 : vector<512x8xf32>
    %24 = vector.broadcast %21 : vector<1x8xf32> to vector<512x8xf32>
    %25 = arith.addf %23, %24 : vector<512x8xf32>
    %c0_12 = arith.constant 0 : index
    %c0_13 = arith.constant 0 : index
    %26 = vector.load %arg5[%c0_12, %c0_13] : memref<512x8xf32, #tpu.memory_space<vmem>>, vector<512x8xf32>
    tpu.vector_store %arg5[%c0_12, %c0_13], %25 {strides = array<i32>} : memref<512x8xf32, #tpu.memory_space<vmem>>, vector<512x8xf32>,
    return
  }
  func.func @transform_0(%arg0: i32) -> (i32, i32) {
    %c0_i32 = arith.constant 0 : i32
    %c0_i32_0 = arith.constant 0 : i32
    %c0_i32_1 = arith.constant 0 : i32
    return %c0_i32, %c0_i32_0 : i32, i32
  }
  func.func @transform_1(%arg0: i32) -> (i32, i32) {
    %c0_i32 = arith.constant 0 : i32
    %c0_i32_0 = arith.constant 0 : i32
    %c0_i32_1 = arith.constant 0 : i32
    return %c0_i32, %c0_i32_0 : i32, i32
  }
  func.func @transform_2(%arg0: i32) -> (i32, i32) {
    %c0_i32 = arith.constant 0 : i32
    %c0_i32_0 = arith.constant 0 : i32
    %c0_i32_1 = arith.constant 0 : i32
    return %c0_i32, %c0_i32_0 : i32, i32
  }
  func.func @transform_3(%arg0: i32) -> (i32, i32) {
    %c0_i32 = arith.constant 0 : i32
    %c0_i32_0 = arith.constant 0 : i32
    %c0_i32_1 = arith.constant 0 : i32
    return %c0_i32, %c0_i32_0 : i32, i32
  }
  func.func @transform_4(%arg0: i32) -> (i32, i32) {
    %c0_i32 = arith.constant 0 : i32
    %c0_i32_0 = arith.constant 0 : i32
    %c0_i32_1 = arith.constant 0 : i32
    return %c0_i32, %c0_i32_0 : i32, i32
  }
}

module attributes {stable_mosaic.version = 11 : i64} {
  func.func @_shortcut_bn_add_kernel(%arg0: i32, %arg1: memref<128x36xbf16, #tpu.memory_space<vmem>>, %arg2: memref<36x8xbf16, #tpu.memory_space<vmem>>, %arg3: memref<1x8xf32, #tpu.memory_space<vmem>>, %arg4: memref<1x8xf32, #tpu.memory_space<vmem>>, %arg5: memref<128x8xf32, #tpu.memory_space<vmem>>, %arg6: memref<128x8xf32, #tpu.memory_space<vmem>>) attributes {dimension_semantics = [#tpu.dimension_semantics<arbitrary>], iteration_bounds = array<i64: 1>, scalar_prefetch = 0 : i64, scratch_operands = 0 : i64, tpu.core_type = #tpu.core_type<tc>, window_params = [{pipeline_mode = #tpu.pipeline_mode<synchronous>, transform_indices = @transform_0, window_bounds = array<i64: 128, 36>}, {pipeline_mode = #tpu.pipeline_mode<synchronous>, transform_indices = @transform_1, window_bounds = array<i64: 36, 8>}, {pipeline_mode = #tpu.pipeline_mode<synchronous>, transform_indices = @transform_2, window_bounds = array<i64: 1, 8>}, {pipeline_mode = #tpu.pipeline_mode<synchronous>, transform_indices = @transform_3, window_bounds = array<i64: 1, 8>}, {pipeline_mode = #tpu.pipeline_mode<synchronous>, transform_indices = @transform_4, window_bounds = array<i64: 128, 8>}, {pipeline_mode = #tpu.pipeline_mode<synchronous>, transform_indices = @transform_5, window_bounds = array<i64: 128, 8>}]} {
    %c0 = arith.constant 0 : index
    %c0_0 = arith.constant 0 : index
    %0 = vector.load %arg1[%c0, %c0_0] : memref<128x36xbf16, #tpu.memory_space<vmem>>, vector<128x36xbf16>
    %c0_1 = arith.constant 0 : index
    %c0_2 = arith.constant 0 : index
    %1 = vector.load %arg2[%c0_1, %c0_2] : memref<36x8xbf16, #tpu.memory_space<vmem>>, vector<36x8xbf16>
    %cst = arith.constant dense<0.000000e+00> : vector<128x8xf32>
    %2 = tpu.matmul %0, %1, %cst {dimension_numbers = #tpu.dot_dimension_numbers<[1], [0], [0], [1], [0, 0, 1, 1], [], []>} : vector<128x36xbf16>, vector<36x8xbf16>, vector<128x8xf32> -> vector<128x8xf32>
    %cst_3 = arith.constant dense<0.000000e+00> : vector<8xf32>
    %3 = vector.multi_reduction <add>, %2, %cst_3 [0] : vector<128x8xf32> to vector<8xf32>
    %4 = vector.shape_cast %3 : vector<8xf32> to vector<1x8xf32>
    %cst_4 = arith.constant 1.280000e+02 : f32
    %5 = vector.broadcast %cst_4 : f32 to vector<1x8xf32>
    %6 = arith.divf %4, %5 : vector<1x8xf32>
    %7 = vector.broadcast %6 : vector<1x8xf32> to vector<128x8xf32>
    %8 = arith.subf %2, %7 : vector<128x8xf32>
    %9 = arith.mulf %8, %8 : vector<128x8xf32>
    %cst_5 = arith.constant dense<0.000000e+00> : vector<8xf32>
    %10 = vector.multi_reduction <add>, %9, %cst_5 [0] : vector<128x8xf32> to vector<8xf32>
    %11 = vector.shape_cast %10 : vector<8xf32> to vector<1x8xf32>
    %cst_6 = arith.constant 1.280000e+02 : f32
    %12 = vector.broadcast %cst_6 : f32 to vector<1x8xf32>
    %13 = arith.divf %11, %12 : vector<1x8xf32>
    %c0_7 = arith.constant 0 : index
    %c0_8 = arith.constant 0 : index
    %14 = vector.load %arg3[%c0_7, %c0_8] : memref<1x8xf32, #tpu.memory_space<vmem>>, vector<1x8xf32>
    %cst_9 = arith.constant 9.99999974E-6 : f32
    %15 = vector.broadcast %cst_9 : f32 to vector<1x8xf32>
    %16 = arith.addf %13, %15 : vector<1x8xf32>
    %17 = math.rsqrt %16 : vector<1x8xf32>
    %18 = arith.mulf %14, %17 : vector<1x8xf32>
    %c0_10 = arith.constant 0 : index
    %c0_11 = arith.constant 0 : index
    %19 = vector.load %arg4[%c0_10, %c0_11] : memref<1x8xf32, #tpu.memory_space<vmem>>, vector<1x8xf32>
    %20 = arith.mulf %6, %18 : vector<1x8xf32>
    %21 = arith.subf %19, %20 : vector<1x8xf32>
    %c0_12 = arith.constant 0 : index
    %c0_13 = arith.constant 0 : index
    %22 = vector.load %arg5[%c0_12, %c0_13] : memref<128x8xf32, #tpu.memory_space<vmem>>, vector<128x8xf32>
    %cst_14 = arith.constant 0.111111112 : f32
    %23 = vector.broadcast %cst_14 : f32 to vector<128x8xf32>
    %24 = arith.mulf %22, %23 : vector<128x8xf32>
    %25 = vector.broadcast %18 : vector<1x8xf32> to vector<128x8xf32>
    %26 = arith.mulf %2, %25 : vector<128x8xf32>
    %27 = arith.addf %24, %26 : vector<128x8xf32>
    %28 = vector.broadcast %21 : vector<1x8xf32> to vector<128x8xf32>
    %29 = arith.addf %27, %28 : vector<128x8xf32>
    %c0_15 = arith.constant 0 : index
    %c0_16 = arith.constant 0 : index
    %30 = vector.load %arg6[%c0_15, %c0_16] : memref<128x8xf32, #tpu.memory_space<vmem>>, vector<128x8xf32>
    tpu.vector_store %arg6[%c0_15, %c0_16], %29 {strides = array<i32>} : memref<128x8xf32, #tpu.memory_space<vmem>>, vector<128x8xf32>,
    return
  }
  func.func @transform_0(%arg0: i32) -> (i32, i32) {
    %c0_i32 = arith.constant 0 : i32
    %c0_i32_0 = arith.constant 0 : i32
    %c0_i32_1 = arith.constant 0 : i32
    return %c0_i32, %c0_i32_0 : i32, i32
  }
  func.func @transform_1(%arg0: i32) -> (i32, i32) {
    %c0_i32 = arith.constant 0 : i32
    %c0_i32_0 = arith.constant 0 : i32
    %c0_i32_1 = arith.constant 0 : i32
    return %c0_i32, %c0_i32_0 : i32, i32
  }
  func.func @transform_2(%arg0: i32) -> (i32, i32) {
    %c0_i32 = arith.constant 0 : i32
    %c0_i32_0 = arith.constant 0 : i32
    %c0_i32_1 = arith.constant 0 : i32
    return %c0_i32, %c0_i32_0 : i32, i32
  }
  func.func @transform_3(%arg0: i32) -> (i32, i32) {
    %c0_i32 = arith.constant 0 : i32
    %c0_i32_0 = arith.constant 0 : i32
    %c0_i32_1 = arith.constant 0 : i32
    return %c0_i32, %c0_i32_0 : i32, i32
  }
  func.func @transform_4(%arg0: i32) -> (i32, i32) {
    %c0_i32 = arith.constant 0 : i32
    %c0_i32_0 = arith.constant 0 : i32
    %c0_i32_1 = arith.constant 0 : i32
    return %c0_i32, %c0_i32_0 : i32, i32
  }
  func.func @transform_5(%arg0: i32) -> (i32, i32) {
    %c0_i32 = arith.constant 0 : i32
    %c0_i32_0 = arith.constant 0 : i32
    %c0_i32_1 = arith.constant 0 : i32
    return %c0_i32, %c0_i32_0 : i32, i32
  }
}

</mosaic_0001>

<llo_original>
// kernel: _lambda_.3
$region0: #{_lambda_.3}
  #allocation0 [shape = 'u32[]', space=smem, size = 0x4, offset = 0x4, fixed_abs, tag = 'smem constant byte address 0x4 - core index']
  #allocation1 [shape = 'u32[144,128]{1,0:T(1,128)}', space=vmem, size = 0x12000, scoped, tag = 'internal scratch']
  %s0 = inlined_call_operand.vmem [shape: bf16[512,36], index: 0, kind: input, shape index: {}]
  %s1 = inlined_call_operand.vmem [shape: bf16[36,8], index: 1, kind: input, shape index: {}]
  %s2 = inlined_call_operand.vmem [shape: f32[1,8], index: 2, kind: input, shape index: {}]
  %s3 = inlined_call_operand.vmem [shape: f32[1,8], index: 3, kind: input, shape index: {}]
  %s4 = inlined_call_operand.vmem [shape: bf16[512,8], index: 4, kind: output, shape index: {}]
  %s5 = sld [smem:[#allocation0]]
  $region26: #{_lambda_.3} parent=0
    _
  %s7 = ssub.s32 1, %s5
  %s8 = scalar_select 0, %s7, %s5
  // Predicated region
  $region2: #{_lambda_.3} parent=0 // pred_check
    _
  $region3: #{_lambda_.3} parent=0 // pred_check_branch
    %10 = sbr.rel (0) target = $region5
  $region4: #{_lambda_.3} parent=0 // pred_region
    _
  $region5: #{_lambda_.3} parent=0 // pred_fallthru
    _
  // Predicated region
  $region6: #{_lambda_.3} parent=0 // pred_check
    _
  $region7: #{_lambda_.3} parent=0 // pred_check_branch
    %12 = sbr.rel (0) target = $region9
  $region8: #{_lambda_.3} parent=0 // pred_region
    _
  $region9: #{_lambda_.3} parent=0 // pred_fallthru
    _
  // Predicated region
  $region10: #{_lambda_.3} parent=0 // pred_check
    _
  $region11: #{_lambda_.3} parent=0 // pred_check_branch
    %14 = sbr.rel (0) target = $region13
  $region12: #{_lambda_.3} parent=0 // pred_region
    _
  $region13: #{_lambda_.3} parent=0 // pred_fallthru
    _
  // Predicated region
  $region14: #{_lambda_.3} parent=0 // pred_check
    _
  $region15: #{_lambda_.3} parent=0 // pred_check_branch
    %16 = sbr.rel (0) target = $region17
  $region16: #{_lambda_.3} parent=0 // pred_region
    _
  $region17: #{_lambda_.3} parent=0 // pred_fallthru
    _
  %v18 = vld [vmem:[%s0] sm:$0xf]
  %v19 = vld [vmem:[%s0 + $0x4] sm:$0xf]
  %v20 = vld [vmem:[%s0 + $0x8] sm:$0xf]
  %v21 = vld [vmem:[%s0 + $0xc] sm:$0xf]
  %v22 = vld [vmem:[%s0 + $0x10] sm:$0xf]
  %v23 = vld [vmem:[%s0 + $0x14] sm:$0xf]
  %v24 = vld [vmem:[%s0 + $0x18] sm:$0xf]
  %v25 = vld [vmem:[%s0 + $0x1c] sm:$0xf]
  %v26 = vld [vmem:[%s0 + $0x20] sm:$0xf]
  %v27 = vld [vmem:[%s0 + $0x24] sm:$0xf]
  %v28 = vld [vmem:[%s0 + $0x28] sm:$0xf]
  %v29 = vld [vmem:[%s0 + $0x2c] sm:$0xf]
  %v30 = vld [vmem:[%s0 + $0x30] sm:$0xf]
  %v31 = vld [vmem:[%s0 + $0x34] sm:$0xf]
  %v32 = vld [vmem:[%s0 + $0x38] sm:$0xf]
  %v33 = vld [vmem:[%s0 + $0x3c] sm:$0xf]
  %v34 = vld [vmem:[%s0 + $0x40] sm:$0xf]
  %v35 = vld [vmem:[%s0 + $0x44] sm:$0xf]
  %v36 = vld [vmem:[%s0 + $0x48] sm:$0xf]
  %v37 = vld [vmem:[%s0 + $0x4c] sm:$0xf]
  %v38 = vld [vmem:[%s0 + $0x50] sm:$0xf]
  %v39 = vld [vmem:[%s0 + $0x54] sm:$0xf]
  %v40 = vld [vmem:[%s0 + $0x58] sm:$0xf]
  %v41 = vld [vmem:[%s0 + $0x5c] sm:$0xf]
  %v42 = vld [vmem:[%s0 + $0x60] sm:$0xf]
  %v43 = vld [vmem:[%s0 + $0x64] sm:$0xf]
  %v44 = vld [vmem:[%s0 + $0x68] sm:$0xf]
  %v45 = vld [vmem:[%s0 + $0x6c] sm:$0xf]
  %v46 = vld [vmem:[%s0 + $0x70] sm:$0xf]
  %v47 = vld [vmem:[%s0 + $0x74] sm:$0xf]
  %v48 = vld [vmem:[%s0 + $0x78] sm:$0xf]
  %v49 = vld [vmem:[%s0 + $0x7c] sm:$0xf]
  %v50 = vld [vmem:[%s0 + $0x80] sm:$0xf]
  %v51 = vld [vmem:[%s0 + $0x84] sm:$0xf]
  %v52 = vld [vmem:[%s0 + $0x88] sm:$0xf]
  %v53 = vld [vmem:[%s0 + $0x8c] sm:$0xf]
  %v54 = vld [vmem:[%s0 + $0x90] sm:$0xf]
  %v55 = vld [vmem:[%s0 + $0x94] sm:$0xf]
  %v56 = vld [vmem:[%s0 + $0x98] sm:$0xf]
  %v57 = vld [vmem:[%s0 + $0x9c] sm:$0xf]
  %v58 = vld [vmem:[%s0 + $0xa0] sm:$0xf]
  %v59 = vld [vmem:[%s0 + $0xa4] sm:$0xf]
  %v60 = vld [vmem:[%s0 + $0xa8] sm:$0xf]
  %v61 = vld [vmem:[%s0 + $0xac] sm:$0xf]
  %v62 = vld [vmem:[%s0 + $0xb0] sm:$0xf]
  %v63 = vld [vmem:[%s0 + $0xb4] sm:$0xf]
  %v64 = vld [vmem:[%s0 + $0xb8] sm:$0xf]
  %v65 = vld [vmem:[%s0 + $0xbc] sm:$0xf]
  %v66 = vld [vmem:[%s0 + $0xc0] sm:$0xf]
  %v67 = vld [vmem:[%s0 + $0xc4] sm:$0xf]
  %v68 = vld [vmem:[%s0 + $0xc8] sm:$0xf]
  %v69 = vld [vmem:[%s0 + $0xcc] sm:$0xf]
  %v70 = vld [vmem:[%s0 + $0xd0] sm:$0xf]
  %v71 = vld [vmem:[%s0 + $0xd4] sm:$0xf]
  %v72 = vld [vmem:[%s0 + $0xd8] sm:$0xf]
  %v73 = vld [vmem:[%s0 + $0xdc] sm:$0xf]
  %v74 = vld [vmem:[%s0 + $0xe0] sm:$0xf]
  %v75 = vld [vmem:[%s0 + $0xe4] sm:$0xf]
  %v76 = vld [vmem:[%s0 + $0xe8] sm:$0xf]
  %v77 = vld [vmem:[%s0 + $0xec] sm:$0xf]
  %v78 = vld [vmem:[%s0 + $0xf0] sm:$0xf]
  %v79 = vld [vmem:[%s0 + $0xf4] sm:$0xf]
  %v80 = vld [vmem:[%s0 + $0xf8] sm:$0xf]
  %v81 = vld [vmem:[%s0 + $0xfc] sm:$0xf]
  %v82 = vld [vmem:[%s1] sm:$0xf]
  %v83 = vld [vmem:[%s1 + $0x4] sm:$0xf]
  %v84 = vld [vmem:[%s1 + $0x8] sm:$0xf]
  %v85 = vld [vmem:[%s1 + $0xc] sm:$0xf]
  %v86 = vld [vmem:[%s1 + $0x10] sm:$0x3]
  %v151 = vunpack.c.l.b16 %v18
  %v152 = vunpack.c.l.b16 %v19
  %v153 = vunpack.c.l.b16 %v20
  %v154 = vunpack.c.l.b16 %v21
  %v155 = vunpack.c.l.b16 %v22
  %v156 = vunpack.c.l.b16 %v23
  %v157 = vunpack.c.l.b16 %v24
  %v158 = vunpack.c.l.b16 %v25
  %v159 = vunpack.c.l.b16 %v26
  %v160 = vunpack.c.l.b16 %v27
  %v161 = vunpack.c.l.b16 %v28
  %v162 = vunpack.c.l.b16 %v29
  %v163 = vunpack.c.l.b16 %v30
  %v164 = vunpack.c.l.b16 %v31
  %v165 = vunpack.c.l.b16 %v32
  %v166 = vunpack.c.l.b16 %v33
  %v167 = vunpack.c.l.b16 %v34
  %v168 = vunpack.c.l.b16 %v35
  %v169 = vunpack.c.l.b16 %v36
  %v170 = vunpack.c.l.b16 %v37
  %v171 = vunpack.c.l.b16 %v38
  %v172 = vunpack.c.l.b16 %v39
  %v173 = vunpack.c.l.b16 %v40
  %v174 = vunpack.c.l.b16 %v41
  %v175 = vunpack.c.l.b16 %v42
  %v176 = vunpack.c.l.b16 %v43
  %v177 = vunpack.c.l.b16 %v44
  %v178 = vunpack.c.l.b16 %v45
  %v179 = vunpack.c.l.b16 %v46
  %v180 = vunpack.c.l.b16 %v47
  %v181 = vunpack.c.l.b16 %v48
  %v182 = vunpack.c.l.b16 %v49
  %v183 = vunpack.c.l.b16 %v50
  %v184 = vunpack.c.l.b16 %v51
  %v185 = vunpack.c.l.b16 %v52
  %v186 = vunpack.c.l.b16 %v53
  %v187 = vunpack.c.l.b16 %v54
  %v188 = vunpack.c.l.b16 %v55
  %v189 = vunpack.c.l.b16 %v56
  %v190 = vunpack.c.l.b16 %v57
  %v191 = vunpack.c.l.b16 %v58
  %v192 = vunpack.c.l.b16 %v59
  %v193 = vunpack.c.l.b16 %v60
  %v194 = vunpack.c.l.b16 %v61
  %v195 = vunpack.c.l.b16 %v62
  %v196 = vunpack.c.l.b16 %v63
  %v197 = vunpack.c.l.b16 %v64
  %v198 = vunpack.c.l.b16 %v65
  %v199 = vunpack.c.l.b16 %v66
  %v200 = vunpack.c.l.b16 %v67
  %v201 = vunpack.c.l.b16 %v68
  %v202 = vunpack.c.l.b16 %v69
  %v203 = vunpack.c.l.b16 %v70
  %v204 = vunpack.c.l.b16 %v71
  %v205 = vunpack.c.l.b16 %v72
  %v206 = vunpack.c.l.b16 %v73
  %v207 = vunpack.c.l.b16 %v74
  %v208 = vunpack.c.l.b16 %v75
  %v209 = vunpack.c.l.b16 %v76
  %v210 = vunpack.c.l.b16 %v77
  %v211 = vunpack.c.l.b16 %v78
  %v212 = vunpack.c.l.b16 %v79
  %v213 = vunpack.c.l.b16 %v80
  %v214 = vunpack.c.l.b16 %v81
  %v215 = vpack.c.b16 %v152, %v151
  %v216 = vpack.c.b16 %v154, %v153
  %v217 = vpack.c.b16 %v156, %v155
  %v218 = vpack.c.b16 %v158, %v157
  %v219 = vpack.c.b16 %v160, %v159
  %v220 = vpack.c.b16 %v162, %v161
  %v221 = vpack.c.b16 %v164, %v163
  %v222 = vpack.c.b16 %v166, %v165
  %v223 = vpack.c.b16 %v168, %v167
  %v224 = vpack.c.b16 %v170, %v169
  %v225 = vpack.c.b16 %v172, %v171
  %v226 = vpack.c.b16 %v174, %v173
  %v227 = vpack.c.b16 %v176, %v175
  %v228 = vpack.c.b16 %v178, %v177
  %v229 = vpack.c.b16 %v180, %v179
  %v230 = vpack.c.b16 %v182, %v181
  %v231 = vpack.c.b16 %v184, %v183
  %v232 = vpack.c.b16 %v186, %v185
  %v233 = vpack.c.b16 %v188, %v187
  %v234 = vpack.c.b16 %v190, %v189
  %v235 = vpack.c.b16 %v192, %v191
  %v236 = vpack.c.b16 %v194, %v193
  %v237 = vpack.c.b16 %v196, %v195
  %v238 = vpack.c.b16 %v198, %v197
  %v239 = vpack.c.b16 %v200, %v199
  %v240 = vpack.c.b16 %v202, %v201
  %v241 = vpack.c.b16 %v204, %v203
  %v242 = vpack.c.b16 %v206, %v205
  %v243 = vpack.c.b16 %v208, %v207
  %v244 = vpack.c.b16 %v210, %v209
  %v245 = vpack.c.b16 %v212, %v211
  %v246 = vpack.c.b16 %v214, %v213
  %v252 = vunpack.c.l.b16 %v82
  %v253 = vunpack.c.l.b16 %v83
  %v254 = vunpack.c.l.b16 %v84
  %v255 = vunpack.c.l.b16 %v85
  %v256 = vunpack.c.l.b16 %v86
  %v257 = vpack.c.b16 %v253, %v252
  %v258 = vpack.c.b16 %v255, %v254
  %v259 = vpack.c.b16 %v256, %v256
  %vm262 = vcmask 293888
  %v264 = vsel %vm262, %v215, 0
  %v267 = vsel %vm262, %v216, 0
  %v270 = vsel %vm262, %v217, 0
  %v273 = vsel %vm262, %v218, 0
  %v276 = vsel %vm262, %v219, 0
  %v279 = vsel %vm262, %v220, 0
  %v282 = vsel %vm262, %v221, 0
  %v285 = vsel %vm262, %v222, 0
  %v288 = vsel %vm262, %v223, 0
  %v291 = vsel %vm262, %v224, 0
  %v294 = vsel %vm262, %v225, 0
  %v297 = vsel %vm262, %v226, 0
  %v300 = vsel %vm262, %v227, 0
  %v303 = vsel %vm262, %v228, 0
  %v306 = vsel %vm262, %v229, 0
  %v309 = vsel %vm262, %v230, 0
  %v312 = vsel %vm262, %v231, 0
  %v315 = vsel %vm262, %v232, 0
  %v318 = vsel %vm262, %v233, 0
  %v321 = vsel %vm262, %v234, 0
  %v324 = vsel %vm262, %v235, 0
  %v327 = vsel %vm262, %v236, 0
  %v330 = vsel %vm262, %v237, 0
  %v333 = vsel %vm262, %v238, 0
  %v336 = vsel %vm262, %v239, 0
  %v339 = vsel %vm262, %v240, 0
  %v342 = vsel %vm262, %v241, 0
  %v345 = vsel %vm262, %v242, 0
  %v348 = vsel %vm262, %v243, 0
  %v351 = vsel %vm262, %v244, 0
  %v354 = vsel %vm262, %v245, 0
  %v357 = vsel %vm262, %v246, 0
  %vm359 = vcmask 1041408
  %v361 = vsel %vm359, %v259, 0
  %363 = vmatprep.subr.bf16.mxu0 0
  %364 = vmatpush1.bf16.msra.mxu0 0
  %365 = vmatprep.subr.bf16.mxu0 0
  %366 = vmatpush1.bf16.msra.mxu0 0
  %367 = vmatprep.subr.bf16.mxu0 0
  %368 = vmatpush1.bf16.msra.mxu0 0
  %369 = vmatprep.subr.bf16.mxu0 0
  %370 = vmatpush1.bf16.msra.mxu0 0
  %371 = vmatprep.subr.bf16.mxu0 0
  %372 = vmatpush1.bf16.msra.mxu0 0
  %373 = vmatprep.subr.bf16.mxu0 0
  %374 = vmatpush1.bf16.msra.mxu0 %v361
  %375 = vmatprep.subr.bf16.mxu0 0
  %376 = vmatpush1.bf16.msra.mxu0 %v258
  %377 = vmatprep.subr.bf16.mxu0 0
  %378 = vmatpush1.bf16.msra.mxu0 %v257
  %379 = vmatprep.subr.bf16.mxu0 0
  %380 = vmatpush2.bf16.msra.mxu0 0
  %381 = vmatprep.subr.bf16.mxu0 0
  %382 = vmatpush2.bf16.msra.mxu0 0
  %383 = vmatprep.subr.bf16.mxu0 0
  %384 = vmatpush2.bf16.msra.mxu0 0
  %385 = vmatprep.subr.bf16.mxu0 0
  %386 = vmatpush2.bf16.msra.mxu0 0
  %387 = vmatprep.subr.bf16.mxu0 0
  %388 = vmatpush2.bf16.msra.mxu0 0
  %389 = vmatprep.subr.bf16.mxu0 0
  %390 = vmatpush2.bf16.msra.mxu0 0
  %391 = vmatprep.subr.bf16.mxu0 0
  %392 = vmatpush2.bf16.msra.mxu0 0
  %393 = vmatprep.subr.bf16.mxu0 0
  %394 = vmatpush2.bf16.msra.mxu0 0
  %395 = vmatprep.mubr.bf16.mxu0 0
  %396 = vmatmul.mubr.bf16.gmra.mxu0 %v264
  %v397 = vpop.f32.mrf.mxu0
  %v398 = vadd.f32 0.0, %v397
  %v399 = vpop.f32.mrf.mxu0
  %v400 = vpop.f32.mrf.mxu0
  %v401 = vadd.f32 0.0, %v400
  %v402 = vpop.f32.mrf.mxu0
  %403 = vmatprep.mubr.bf16.mxu0 0
  %404 = vmatmul.mubr.bf16.gmra.mxu0 %v267
  %v405 = vpop.f32.mrf.mxu0
  %v406 = vadd.f32 0.0, %v405
  %v407 = vpop.f32.mrf.mxu0
  %v408 = vpop.f32.mrf.mxu0
  %v409 = vadd.f32 0.0, %v408
  %v410 = vpop.f32.mrf.mxu0
  %411 = vmatprep.mubr.bf16.mxu0 0
  %412 = vmatmul.mubr.bf16.gmra.mxu0 %v270
  %v413 = vpop.f32.mrf.mxu0
  %v414 = vadd.f32 0.0, %v413
  %v415 = vpop.f32.mrf.mxu0
  %v416 = vpop.f32.mrf.mxu0
  %v417 = vadd.f32 0.0, %v416
  %v418 = vpop.f32.mrf.mxu0
  %419 = vmatprep.mubr.bf16.mxu0 0
  %420 = vmatmul.mubr.bf16.gmra.mxu0 %v273
  %v421 = vpop.f32.mrf.mxu0
  %v422 = vadd.f32 0.0, %v421
  %v423 = vpop.f32.mrf.mxu0
  %v424 = vpop.f32.mrf.mxu0
  %v425 = vadd.f32 0.0, %v424
  %v426 = vpop.f32.mrf.mxu0
  %427 = vmatprep.mubr.bf16.mxu0 0
  %428 = vmatmul.mubr.bf16.gmra.mxu0 %v276
  %v429 = vpop.f32.mrf.mxu0
  %v430 = vadd.f32 0.0, %v429
  %v431 = vpop.f32.mrf.mxu0
  %v432 = vpop.f32.mrf.mxu0
  %v433 = vadd.f32 0.0, %v432
  %v434 = vpop.f32.mrf.mxu0
  %435 = vmatprep.mubr.bf16.mxu0 0
  %436 = vmatmul.mubr.bf16.gmra.mxu0 %v279
  %v437 = vpop.f32.mrf.mxu0
  %v438 = vadd.f32 0.0, %v437
  %v439 = vpop.f32.mrf.mxu0
  %v440 = vpop.f32.mrf.mxu0
  %v441 = vadd.f32 0.0, %v440
  %v442 = vpop.f32.mrf.mxu0
  %443 = vmatprep.mubr.bf16.mxu0 0
  %444 = vmatmul.mubr.bf16.gmra.mxu0 %v282
  %v445 = vpop.f32.mrf.mxu0
  %v446 = vadd.f32 0.0, %v445
  %v447 = vpop.f32.mrf.mxu0
  %v448 = vpop.f32.mrf.mxu0
  %v449 = vadd.f32 0.0, %v448
  %v450 = vpop.f32.mrf.mxu0
  %451 = vmatprep.mubr.bf16.mxu0 0
  %452 = vmatmul.mubr.bf16.gmra.mxu0 %v285
  %v453 = vpop.f32.mrf.mxu0
  %v454 = vadd.f32 0.0, %v453
  %v455 = vpop.f32.mrf.mxu0
  %v456 = vpop.f32.mrf.mxu0
  %v457 = vadd.f32 0.0, %v456
  %v458 = vpop.f32.mrf.mxu0
  %459 = vmatprep.mubr.bf16.mxu0 0
  %460 = vmatmul.mubr.bf16.gmra.mxu0 %v288
  %v461 = vpop.f32.mrf.mxu0
  %v462 = vadd.f32 0.0, %v461
  %v463 = vpop.f32.mrf.mxu0
  %v464 = vpop.f32.mrf.mxu0
  %v465 = vadd.f32 0.0, %v464
  %v466 = vpop.f32.mrf.mxu0
  %467 = vmatprep.mubr.bf16.mxu0 0
  %468 = vmatmul.mubr.bf16.gmra.mxu0 %v291
  %v469 = vpop.f32.mrf.mxu0
  %v470 = vadd.f32 0.0, %v469
  %v471 = vpop.f32.mrf.mxu0
  %v472 = vpop.f32.mrf.mxu0
  %v473 = vadd.f32 0.0, %v472
  %v474 = vpop.f32.mrf.mxu0
  %475 = vmatprep.mubr.bf16.mxu0 0
  %476 = vmatmul.mubr.bf16.gmra.mxu0 %v294
  %v477 = vpop.f32.mrf.mxu0
  %v478 = vadd.f32 0.0, %v477
  %v479 = vpop.f32.mrf.mxu0
  %v480 = vpop.f32.mrf.mxu0
  %v481 = vadd.f32 0.0, %v480
  %v482 = vpop.f32.mrf.mxu0
  %483 = vmatprep.mubr.bf16.mxu0 0
  %484 = vmatmul.mubr.bf16.gmra.mxu0 %v297
  %v485 = vpop.f32.mrf.mxu0
  %v486 = vadd.f32 0.0, %v485
  %v487 = vpop.f32.mrf.mxu0
  %v488 = vpop.f32.mrf.mxu0
  %v489 = vadd.f32 0.0, %v488
  %v490 = vpop.f32.mrf.mxu0
  %491 = vmatprep.mubr.bf16.mxu0 0
  %492 = vmatmul.mubr.bf16.gmra.mxu0 %v300
  %v493 = vpop.f32.mrf.mxu0
  %v494 = vadd.f32 0.0, %v493
  %v495 = vpop.f32.mrf.mxu0
  %v496 = vpop.f32.mrf.mxu0
  %v497 = vadd.f32 0.0, %v496
  %v498 = vpop.f32.mrf.mxu0
  %499 = vmatprep.mubr.bf16.mxu0 0
  %500 = vmatmul.mubr.bf16.gmra.mxu0 %v303
  %v501 = vpop.f32.mrf.mxu0
  %v502 = vadd.f32 0.0, %v501
  %v503 = vpop.f32.mrf.mxu0
  %v504 = vpop.f32.mrf.mxu0
  %v505 = vadd.f32 0.0, %v504
  %v506 = vpop.f32.mrf.mxu0
  %507 = vmatprep.mubr.bf16.mxu0 0
  %508 = vmatmul.mubr.bf16.gmra.mxu0 %v306
  %v509 = vpop.f32.mrf.mxu0
  %v510 = vadd.f32 0.0, %v509
  %v511 = vpop.f32.mrf.mxu0
  %v512 = vpop.f32.mrf.mxu0
  %v513 = vadd.f32 0.0, %v512
  %v514 = vpop.f32.mrf.mxu0
  %515 = vmatprep.mubr.bf16.mxu0 0
  %516 = vmatmul.mubr.bf16.gmra.mxu0 %v309
  %v517 = vpop.f32.mrf.mxu0
  %v518 = vadd.f32 0.0, %v517
  %v519 = vpop.f32.mrf.mxu0
  %v520 = vpop.f32.mrf.mxu0
  %v521 = vadd.f32 0.0, %v520
  %v522 = vpop.f32.mrf.mxu0
  %523 = vmatprep.mubr.bf16.mxu0 0
  %524 = vmatmul.mubr.bf16.gmra.mxu0 %v312
  %v525 = vpop.f32.mrf.mxu0
  %v526 = vadd.f32 0.0, %v525
  %v527 = vpop.f32.mrf.mxu0
  %v528 = vpop.f32.mrf.mxu0
  %v529 = vadd.f32 0.0, %v528
  %v530 = vpop.f32.mrf.mxu0
  %531 = vmatprep.mubr.bf16.mxu0 0
  %532 = vmatmul.mubr.bf16.gmra.mxu0 %v315
  %v533 = vpop.f32.mrf.mxu0
  %v534 = vadd.f32 0.0, %v533
  %v535 = vpop.f32.mrf.mxu0
  %v536 = vpop.f32.mrf.mxu0
  %v537 = vadd.f32 0.0, %v536
  %v538 = vpop.f32.mrf.mxu0
  %539 = vmatprep.mubr.bf16.mxu0 0
  %540 = vmatmul.mubr.bf16.gmra.mxu0 %v318
  %v541 = vpop.f32.mrf.mxu0
  %v542 = vadd.f32 0.0, %v541
  %v543 = vpop.f32.mrf.mxu0
  %v544 = vpop.f32.mrf.mxu0
  %v545 = vadd.f32 0.0, %v544
  %v546 = vpop.f32.mrf.mxu0
  %547 = vmatprep.mubr.bf16.mxu0 0
  %548 = vmatmul.mubr.bf16.gmra.mxu0 %v321
  %v549 = vpop.f32.mrf.mxu0
  %v550 = vadd.f32 0.0, %v549
  %v551 = vpop.f32.mrf.mxu0
  %v552 = vpop.f32.mrf.mxu0
  %v553 = vadd.f32 0.0, %v552
  %v554 = vpop.f32.mrf.mxu0
  %555 = vmatprep.mubr.bf16.mxu0 0
  %556 = vmatmul.mubr.bf16.gmra.mxu0 %v324
  %v557 = vpop.f32.mrf.mxu0
  %v558 = vadd.f32 0.0, %v557
  %v559 = vpop.f32.mrf.mxu0
  %v560 = vpop.f32.mrf.mxu0
  %v561 = vadd.f32 0.0, %v560
  %v562 = vpop.f32.mrf.mxu0
  %563 = vmatprep.mubr.bf16.mxu0 0
  %564 = vmatmul.mubr.bf16.gmra.mxu0 %v327
  %v565 = vpop.f32.mrf.mxu0
  %v566 = vadd.f32 0.0, %v565
  %v567 = vpop.f32.mrf.mxu0
  %v568 = vpop.f32.mrf.mxu0
  %v569 = vadd.f32 0.0, %v568
  %v570 = vpop.f32.mrf.mxu0
  %571 = vmatprep.mubr.bf16.mxu0 0
  %572 = vmatmul.mubr.bf16.gmra.mxu0 %v330
  %v573 = vpop.f32.mrf.mxu0
  %v574 = vadd.f32 0.0, %v573
  %v575 = vpop.f32.mrf.mxu0
  %v576 = vpop.f32.mrf.mxu0
  %v577 = vadd.f32 0.0, %v576
  %v578 = vpop.f32.mrf.mxu0
  %579 = vmatprep.mubr.bf16.mxu0 0
  %580 = vmatmul.mubr.bf16.gmra.mxu0 %v333
  %v581 = vpop.f32.mrf.mxu0
  %v582 = vadd.f32 0.0, %v581
  %v583 = vpop.f32.mrf.mxu0
  %v584 = vpop.f32.mrf.mxu0
  %v585 = vadd.f32 0.0, %v584
  %v586 = vpop.f32.mrf.mxu0
  %587 = vmatprep.mubr.bf16.mxu0 0
  %588 = vmatmul.mubr.bf16.gmra.mxu0 %v336
  %v589 = vpop.f32.mrf.mxu0
  %v590 = vadd.f32 0.0, %v589
  %v591 = vpop.f32.mrf.mxu0
  %v592 = vpop.f32.mrf.mxu0
  %v593 = vadd.f32 0.0, %v592
  %v594 = vpop.f32.mrf.mxu0
  %595 = vmatprep.mubr.bf16.mxu0 0
  %596 = vmatmul.mubr.bf16.gmra.mxu0 %v339
  %v597 = vpop.f32.mrf.mxu0
  %v598 = vadd.f32 0.0, %v597
  %v599 = vpop.f32.mrf.mxu0
  %v600 = vpop.f32.mrf.mxu0
  %v601 = vadd.f32 0.0, %v600
  %v602 = vpop.f32.mrf.mxu0
  %603 = vmatprep.mubr.bf16.mxu0 0
  %604 = vmatmul.mubr.bf16.gmra.mxu0 %v342
  %v605 = vpop.f32.mrf.mxu0
  %v606 = vadd.f32 0.0, %v605
  %v607 = vpop.f32.mrf.mxu0
  %v608 = vpop.f32.mrf.mxu0
  %v609 = vadd.f32 0.0, %v608
  %v610 = vpop.f32.mrf.mxu0
  %611 = vmatprep.mubr.bf16.mxu0 0
  %612 = vmatmul.mubr.bf16.gmra.mxu0 %v345
  %v613 = vpop.f32.mrf.mxu0
  %v614 = vadd.f32 0.0, %v613
  %v615 = vpop.f32.mrf.mxu0
  %v616 = vpop.f32.mrf.mxu0
  %v617 = vadd.f32 0.0, %v616
  %v618 = vpop.f32.mrf.mxu0
  %619 = vmatprep.mubr.bf16.mxu0 0
  %620 = vmatmul.mubr.bf16.gmra.mxu0 %v348
  %v621 = vpop.f32.mrf.mxu0
  %v622 = vadd.f32 0.0, %v621
  %v623 = vpop.f32.mrf.mxu0
  %v624 = vpop.f32.mrf.mxu0
  %v625 = vadd.f32 0.0, %v624
  %v626 = vpop.f32.mrf.mxu0
  %627 = vmatprep.mubr.bf16.mxu0 0
  %628 = vmatmul.mubr.bf16.gmra.mxu0 %v351
  %v629 = vpop.f32.mrf.mxu0
  %v630 = vadd.f32 0.0, %v629
  %v631 = vpop.f32.mrf.mxu0
  %v632 = vpop.f32.mrf.mxu0
  %v633 = vadd.f32 0.0, %v632
  %v634 = vpop.f32.mrf.mxu0
  %635 = vmatprep.mubr.bf16.mxu0 0
  %636 = vmatmul.mubr.bf16.gmra.mxu0 %v354
  %v637 = vpop.f32.mrf.mxu0
  %v638 = vadd.f32 0.0, %v637
  %v639 = vpop.f32.mrf.mxu0
  %v640 = vpop.f32.mrf.mxu0
  %v641 = vadd.f32 0.0, %v640
  %v642 = vpop.f32.mrf.mxu0
  %643 = vmatprep.mubr.bf16.mxu0 0
  %644 = vmatmul.mubr.bf16.gmra.mxu0 %v357
  %v645 = vpop.f32.mrf.mxu0
  %v646 = vadd.f32 0.0, %v645
  %v647 = vpop.f32.mrf.mxu0
  %v648 = vpop.f32.mrf.mxu0
  %v649 = vadd.f32 0.0, %v648
  %v650 = vpop.f32.mrf.mxu0
  %651 = vdwg.mxu0
  %vm652 = vcmask 64512
  %v653 = vsel %vm652, %v398, 0.0
  %v654 = vsel %vm652, %v401, 0.0
  %v655 = vadd.f32 %v653, %v654
  %v656 = vsel %vm652, %v406, 0.0
  %v657 = vadd.f32 %v655, %v656
  %v658 = vsel %vm652, %v409, 0.0
  %v659 = vadd.f32 %v657, %v658
  %v660 = vsel %vm652, %v414, 0.0
  %v661 = vadd.f32 %v659, %v660
  %v662 = vsel %vm652, %v417, 0.0
  %v663 = vadd.f32 %v661, %v662
  %v664 = vsel %vm652, %v422, 0.0
  %v665 = vadd.f32 %v663, %v664
  %v666 = vsel %vm652, %v425, 0.0
  %v667 = vadd.f32 %v665, %v666
  %v668 = vsel %vm652, %v430, 0.0
  %v669 = vadd.f32 %v667, %v668
  %v670 = vsel %vm652, %v433, 0.0
  %v671 = vadd.f32 %v669, %v670
  %v672 = vsel %vm652, %v438, 0.0
  %v673 = vadd.f32 %v671, %v672
  %v674 = vsel %vm652, %v441, 0.0
  %v675 = vadd.f32 %v673, %v674
  %v676 = vsel %vm652, %v446, 0.0
  %v677 = vadd.f32 %v675, %v676
  %v678 = vsel %vm652, %v449, 0.0
  %v679 = vadd.f32 %v677, %v678
  %v680 = vsel %vm652, %v454, 0.0
  %v681 = vadd.f32 %v679, %v680
  %v682 = vsel %vm652, %v457, 0.0
  %v683 = vadd.f32 %v681, %v682
  %v684 = vsel %vm652, %v462, 0.0
  %v685 = vadd.f32 %v683, %v684
  %v686 = vsel %vm652, %v465, 0.0
  %v687 = vadd.f32 %v685, %v686
  %v688 = vsel %vm652, %v470, 0.0
  %v689 = vadd.f32 %v687, %v688
  %v690 = vsel %vm652, %v473, 0.0
  %v691 = vadd.f32 %v689, %v690
  %v692 = vsel %vm652, %v478, 0.0
  %v693 = vadd.f32 %v691, %v692
  %v694 = vsel %vm652, %v481, 0.0
  %v695 = vadd.f32 %v693, %v694
  %v696 = vsel %vm652, %v486, 0.0
  %v697 = vadd.f32 %v695, %v696
  %v698 = vsel %vm652, %v489, 0.0
  %v699 = vadd.f32 %v697, %v698
  %v700 = vsel %vm652, %v494, 0.0
  %v701 = vadd.f32 %v699, %v700
  %v702 = vsel %vm652, %v497, 0.0
  %v703 = vadd.f32 %v701, %v702
  %v704 = vsel %vm652, %v502, 0.0
  %v705 = vadd.f32 %v703, %v704
  %v706 = vsel %vm652, %v505, 0.0
  %v707 = vadd.f32 %v705, %v706
  %v708 = vsel %vm652, %v510, 0.0
  %v709 = vadd.f32 %v707, %v708
  %v710 = vsel %vm652, %v513, 0.0
  %v711 = vadd.f32 %v709, %v710
  %v712 = vsel %vm652, %v518, 0.0
  %v713 = vadd.f32 %v711, %v712
  %v714 = vsel %vm652, %v521, 0.0
  %v715 = vadd.f32 %v713, %v714
  %v716 = vsel %vm652, %v526, 0.0
  %v717 = vadd.f32 %v715, %v716
  %v718 = vsel %vm652, %v529, 0.0
  %v719 = vadd.f32 %v717, %v718
  %v720 = vsel %vm652, %v534, 0.0
  %v721 = vadd.f32 %v719, %v720
  %v722 = vsel %vm652, %v537, 0.0
  %v723 = vadd.f32 %v721, %v722
  %v724 = vsel %vm652, %v542, 0.0
  %v725 = vadd.f32 %v723, %v724
  %v726 = vsel %vm652, %v545, 0.0
  %v727 = vadd.f32 %v725, %v726
  %v728 = vsel %vm652, %v550, 0.0
  %v729 = vadd.f32 %v727, %v728
  %v730 = vsel %vm652, %v553, 0.0
  %v731 = vadd.f32 %v729, %v730
  %v732 = vsel %vm652, %v558, 0.0
  %v733 = vadd.f32 %v731, %v732
  %v734 = vsel %vm652, %v561, 0.0
  %v735 = vadd.f32 %v733, %v734
  %v736 = vsel %vm652, %v566, 0.0
  %v737 = vadd.f32 %v735, %v736
  %v738 = vsel %vm652, %v569, 0.0
  %v739 = vadd.f32 %v737, %v738
  %v740 = vsel %vm652, %v574, 0.0
  %v741 = vadd.f32 %v739, %v740
  %v742 = vsel %vm652, %v577, 0.0
  %v743 = vadd.f32 %v741, %v742
  %v744 = vsel %vm652, %v582, 0.0
  %v745 = vadd.f32 %v743, %v744
  %v746 = vsel %vm652, %v585, 0.0
  %v747 = vadd.f32 %v745, %v746
  %v748 = vsel %vm652, %v590, 0.0
  %v749 = vadd.f32 %v747, %v748
  %v750 = vsel %vm652, %v593, 0.0
  %v751 = vadd.f32 %v749, %v750
  %v752 = vsel %vm652, %v598, 0.0
  %v753 = vadd.f32 %v751, %v752
  %v754 = vsel %vm652, %v601, 0.0
  %v755 = vadd.f32 %v753, %v754
  %v756 = vsel %vm652, %v606, 0.0
  %v757 = vadd.f32 %v755, %v756
  %v758 = vsel %vm652, %v609, 0.0
  %v759 = vadd.f32 %v757, %v758
  %v760 = vsel %vm652, %v614, 0.0
  %v761 = vadd.f32 %v759, %v760
  %v762 = vsel %vm652, %v617, 0.0
  %v763 = vadd.f32 %v761, %v762
  %v764 = vsel %vm652, %v622, 0.0
  %v765 = vadd.f32 %v763, %v764
  %v766 = vsel %vm652, %v625, 0.0
  %v767 = vadd.f32 %v765, %v766
  %v768 = vsel %vm652, %v630, 0.0
  %v769 = vadd.f32 %v767, %v768
  %v770 = vsel %vm652, %v633, 0.0
  %v771 = vadd.f32 %v769, %v770
  %v772 = vsel %vm652, %v638, 0.0
  %v773 = vadd.f32 %v771, %v772
  %v774 = vsel %vm652, %v641, 0.0
  %v775 = vadd.f32 %v773, %v774
  %v776 = vsel %vm652, %v646, 0.0
  %v777 = vadd.f32 %v775, %v776
  %v778 = vsel %vm652, %v649, 0.0
  %v779 = vadd.f32 %v777, %v778
  %v780 = vrot.slane %v779, 4
  %v781 = vadd.f32 %v779, %v780
  %v782 = vrot.slane %v781, 2
  %v783 = vadd.f32 %v781, %v782
  %v784 = vrot.slane %v783, 1
  %v785 = vadd.f32 %v783, %v784
  %v786 = vrcp.pop 512.0
  %v787 = vmul.f32 %v785, %v786
  %v788 = vsub.f32 %v398, %v787
  %v789 = vsub.f32 %v401, %v787
  %v790 = vsub.f32 %v406, %v787
  %v791 = vsub.f32 %v409, %v787
  %v792 = vsub.f32 %v414, %v787
  %v793 = vsub.f32 %v417, %v787
  %v794 = vsub.f32 %v422, %v787
  %v795 = vsub.f32 %v425, %v787
  %v796 = vsub.f32 %v430, %v787
  %v797 = vsub.f32 %v433, %v787
  %v798 = vsub.f32 %v438, %v787
  %v799 = vsub.f32 %v441, %v787
  %v800 = vsub.f32 %v446, %v787
  %v801 = vsub.f32 %v449, %v787
  %v802 = vsub.f32 %v454, %v787
  %v803 = vsub.f32 %v457, %v787
  %v804 = vsub.f32 %v462, %v787
  %v805 = vsub.f32 %v465, %v787
  %v806 = vsub.f32 %v470, %v787
  %v807 = vsub.f32 %v473, %v787
  %v808 = vsub.f32 %v478, %v787
  %v809 = vsub.f32 %v481, %v787
  %v810 = vsub.f32 %v486, %v787
  %v811 = vsub.f32 %v489, %v787
  %v812 = vsub.f32 %v494, %v787
  %v813 = vsub.f32 %v497, %v787
  %v814 = vsub.f32 %v502, %v787
  %v815 = vsub.f32 %v505, %v787
  %v816 = vsub.f32 %v510, %v787
  %v817 = vsub.f32 %v513, %v787
  %v818 = vsub.f32 %v518, %v787
  %v819 = vsub.f32 %v521, %v787
  %v820 = vsub.f32 %v526, %v787
  %v821 = vsub.f32 %v529, %v787
  %v822 = vsub.f32 %v534, %v787
  %v823 = vsub.f32 %v537, %v787
  %v824 = vsub.f32 %v542, %v787
  %v825 = vsub.f32 %v545, %v787
  %v826 = vsub.f32 %v550, %v787
  %v827 = vsub.f32 %v553, %v787
  %v828 = vsub.f32 %v558, %v787
  %v829 = vsub.f32 %v561, %v787
  %v830 = vsub.f32 %v566, %v787
  %v831 = vsub.f32 %v569, %v787
  %v832 = vsub.f32 %v574, %v787
  %v833 = vsub.f32 %v577, %v787
  %v834 = vsub.f32 %v582, %v787
  %v835 = vsub.f32 %v585, %v787
  %v836 = vsub.f32 %v590, %v787
  %v837 = vsub.f32 %v593, %v787
  %v838 = vsub.f32 %v598, %v787
  %v839 = vsub.f32 %v601, %v787
  %v840 = vsub.f32 %v606, %v787
  %v841 = vsub.f32 %v609, %v787
  %v842 = vsub.f32 %v614, %v787
  %v843 = vsub.f32 %v617, %v787
  %v844 = vsub.f32 %v622, %v787
  %v845 = vsub.f32 %v625, %v787
  %v846 = vsub.f32 %v630, %v787
  %v847 = vsub.f32 %v633, %v787
  %v848 = vsub.f32 %v638, %v787
  %v849 = vsub.f32 %v641, %v787
  %v850 = vsub.f32 %v646, %v787
  %v851 = vsub.f32 %v649, %v787
  %v852 = vmul.f32 %v788, %v788
  %v853 = vmul.f32 %v789, %v789
  %v854 = vmul.f32 %v790, %v790
  %v855 = vmul.f32 %v791, %v791
  %v856 = vmul.f32 %v792, %v792
  %v857 = vmul.f32 %v793, %v793
  %v858 = vmul.f32 %v794, %v794
  %v859 = vmul.f32 %v795, %v795
  %v860 = vmul.f32 %v796, %v796
  %v861 = vmul.f32 %v797, %v797
  %v862 = vmul.f32 %v798, %v798
  %v863 = vmul.f32 %v799, %v799
  %v864 = vmul.f32 %v800, %v800
  %v865 = vmul.f32 %v801, %v801
  %v866 = vmul.f32 %v802, %v802
  %v867 = vmul.f32 %v803, %v803
  %v868 = vmul.f32 %v804, %v804
  %v869 = vmul.f32 %v805, %v805
  %v870 = vmul.f32 %v806, %v806
  %v871 = vmul.f32 %v807, %v807
  %v872 = vmul.f32 %v808, %v808
  %v873 = vmul.f32 %v809, %v809
  %v874 = vmul.f32 %v810, %v810
  %v875 = vmul.f32 %v811, %v811
  %v876 = vmul.f32 %v812, %v812
  %v877 = vmul.f32 %v813, %v813
  %v878 = vmul.f32 %v814, %v814
  %v879 = vmul.f32 %v815, %v815
  %v880 = vmul.f32 %v816, %v816
  %v881 = vmul.f32 %v817, %v817
  %v882 = vmul.f32 %v818, %v818
  %v883 = vmul.f32 %v819, %v819
  %v884 = vmul.f32 %v820, %v820
  %v885 = vmul.f32 %v821, %v821
  %v886 = vmul.f32 %v822, %v822
  %v887 = vmul.f32 %v823, %v823
  %v888 = vmul.f32 %v824, %v824
  %v889 = vmul.f32 %v825, %v825
  %v890 = vmul.f32 %v826, %v826
  %v891 = vmul.f32 %v827, %v827
  %v892 = vmul.f32 %v828, %v828
  %v893 = vmul.f32 %v829, %v829
  %v894 = vmul.f32 %v830, %v830
  %v895 = vmul.f32 %v831, %v831
  %v896 = vmul.f32 %v832, %v832
  %v897 = vmul.f32 %v833, %v833
  %v898 = vmul.f32 %v834, %v834
  %v899 = vmul.f32 %v835, %v835
  %v900 = vmul.f32 %v836, %v836
  %v901 = vmul.f32 %v837, %v837
  %v902 = vmul.f32 %v838, %v838
  %v903 = vmul.f32 %v839, %v839
  %v904 = vmul.f32 %v840, %v840
  %v905 = vmul.f32 %v841, %v841
  %v906 = vmul.f32 %v842, %v842
  %v907 = vmul.f32 %v843, %v843
  %v908 = vmul.f32 %v844, %v844
  %v909 = vmul.f32 %v845, %v845
  %v910 = vmul.f32 %v846, %v846
  %v911 = vmul.f32 %v847, %v847
  %v912 = vmul.f32 %v848, %v848
  %v913 = vmul.f32 %v849, %v849
  %v914 = vmul.f32 %v850, %v850
  %v915 = vmul.f32 %v851, %v851
  %v916 = vsel %vm652, %v852, 0.0
  %v917 = vsel %vm652, %v853, 0.0
  %v918 = vadd.f32 %v916, %v917
  %v919 = vsel %vm652, %v854, 0.0
  %v920 = vadd.f32 %v918, %v919
  %v921 = vsel %vm652, %v855, 0.0
  %v922 = vadd.f32 %v920, %v921
  %v923 = vsel %vm652, %v856, 0.0
  %v924 = vadd.f32 %v922, %v923
  %v925 = vsel %vm652, %v857, 0.0
  %v926 = vadd.f32 %v924, %v925
  %v927 = vsel %vm652, %v858, 0.0
  %v928 = vadd.f32 %v926, %v927
  %v929 = vsel %vm652, %v859, 0.0
  %v930 = vadd.f32 %v928, %v929
  %v931 = vsel %vm652, %v860, 0.0
  %v932 = vadd.f32 %v930, %v931
  %v933 = vsel %vm652, %v861, 0.0
  %v934 = vadd.f32 %v932, %v933
  %v935 = vsel %vm652, %v862, 0.0
  %v936 = vadd.f32 %v934, %v935
  %v937 = vsel %vm652, %v863, 0.0
  %v938 = vadd.f32 %v936, %v937
  %v939 = vsel %vm652, %v864, 0.0
  %v940 = vadd.f32 %v938, %v939
  %v941 = vsel %vm652, %v865, 0.0
  %v942 = vadd.f32 %v940, %v941
  %v943 = vsel %vm652, %v866, 0.0
  %v944 = vadd.f32 %v942, %v943
  %v945 = vsel %vm652, %v867, 0.0
  %v946 = vadd.f32 %v944, %v945
  %v947 = vsel %vm652, %v868, 0.0
  %v948 = vadd.f32 %v946, %v947
  %v949 = vsel %vm652, %v869, 0.0
  %v950 = vadd.f32 %v948, %v949
  %v951 = vsel %vm652, %v870, 0.0
  %v952 = vadd.f32 %v950, %v951
  %v953 = vsel %vm652, %v871, 0.0
  %v954 = vadd.f32 %v952, %v953
  %v955 = vsel %vm652, %v872, 0.0
  %v956 = vadd.f32 %v954, %v955
  %v957 = vsel %vm652, %v873, 0.0
  %v958 = vadd.f32 %v956, %v957
  %v959 = vsel %vm652, %v874, 0.0
  %v960 = vadd.f32 %v958, %v959
  %v961 = vsel %vm652, %v875, 0.0
  %v962 = vadd.f32 %v960, %v961
  %v963 = vsel %vm652, %v876, 0.0
  %v964 = vadd.f32 %v962, %v963
  %v965 = vsel %vm652, %v877, 0.0
  %v966 = vadd.f32 %v964, %v965
  %v967 = vsel %vm652, %v878, 0.0
  %v968 = vadd.f32 %v966, %v967
  %v969 = vsel %vm652, %v879, 0.0
  %v970 = vadd.f32 %v968, %v969
  %v971 = vsel %vm652, %v880, 0.0
  %v972 = vadd.f32 %v970, %v971
  %v973 = vsel %vm652, %v881, 0.0
  %v974 = vadd.f32 %v972, %v973
  %v975 = vsel %vm652, %v882, 0.0
  %v976 = vadd.f32 %v974, %v975
  %v977 = vsel %vm652, %v883, 0.0
  %v978 = vadd.f32 %v976, %v977
  %v979 = vsel %vm652, %v884, 0.0
  %v980 = vadd.f32 %v978, %v979
  %v981 = vsel %vm652, %v885, 0.0
  %v982 = vadd.f32 %v980, %v981
  %v983 = vsel %vm652, %v886, 0.0
  %v984 = vadd.f32 %v982, %v983
  %v985 = vsel %vm652, %v887, 0.0
  %v986 = vadd.f32 %v984, %v985
  %v987 = vsel %vm652, %v888, 0.0
  %v988 = vadd.f32 %v986, %v987
  %v989 = vsel %vm652, %v889, 0.0
  %v990 = vadd.f32 %v988, %v989
  %v991 = vsel %vm652, %v890, 0.0
  %v992 = vadd.f32 %v990, %v991
  %v993 = vsel %vm652, %v891, 0.0
  %v994 = vadd.f32 %v992, %v993
  %v995 = vsel %vm652, %v892, 0.0
  %v996 = vadd.f32 %v994, %v995
  %v997 = vsel %vm652, %v893, 0.0
  %v998 = vadd.f32 %v996, %v997
  %v999 = vsel %vm652, %v894, 0.0
  %v1000 = vadd.f32 %v998, %v999
  %v1001 = vsel %vm652, %v895, 0.0
  %v1002 = vadd.f32 %v1000, %v1001
  %v1003 = vsel %vm652, %v896, 0.0
  %v1004 = vadd.f32 %v1002, %v1003
  %v1005 = vsel %vm652, %v897, 0.0
  %v1006 = vadd.f32 %v1004, %v1005
  %v1007 = vsel %vm652, %v898, 0.0
  %v1008 = vadd.f32 %v1006, %v1007
  %v1009 = vsel %vm652, %v899, 0.0
  %v1010 = vadd.f32 %v1008, %v1009
  %v1011 = vsel %vm652, %v900, 0.0
  %v1012 = vadd.f32 %v1010, %v1011
  %v1013 = vsel %vm652, %v901, 0.0
  %v1014 = vadd.f32 %v1012, %v1013
  %v1015 = vsel %vm652, %v902, 0.0
  %v1016 = vadd.f32 %v1014, %v1015
  %v1017 = vsel %vm652, %v903, 0.0
  %v1018 = vadd.f32 %v1016, %v1017
  %v1019 = vsel %vm652, %v904, 0.0
  %v1020 = vadd.f32 %v1018, %v1019
  %v1021 = vsel %vm652, %v905, 0.0
  %v1022 = vadd.f32 %v1020, %v1021
  %v1023 = vsel %vm652, %v906, 0.0
  %v1024 = vadd.f32 %v1022, %v1023
  %v1025 = vsel %vm652, %v907, 0.0
  %v1026 = vadd.f32 %v1024, %v1025
  %v1027 = vsel %vm652, %v908, 0.0
  %v1028 = vadd.f32 %v1026, %v1027
  %v1029 = vsel %vm652, %v909, 0.0
  %v1030 = vadd.f32 %v1028, %v1029
  %v1031 = vsel %vm652, %v910, 0.0
  %v1032 = vadd.f32 %v1030, %v1031
  %v1033 = vsel %vm652, %v911, 0.0
  %v1034 = vadd.f32 %v1032, %v1033
  %v1035 = vsel %vm652, %v912, 0.0
  %v1036 = vadd.f32 %v1034, %v1035
  %v1037 = vsel %vm652, %v913, 0.0
  %v1038 = vadd.f32 %v1036, %v1037
  %v1039 = vsel %vm652, %v914, 0.0
  %v1040 = vadd.f32 %v1038, %v1039
  %v1041 = vsel %vm652, %v915, 0.0
  %v1042 = vadd.f32 %v1040, %v1041
  %v1043 = vrot.slane %v1042, 4
  %v1044 = vadd.f32 %v1042, %v1043
  %v1045 = vrot.slane %v1044, 2
  %v1046 = vadd.f32 %v1044, %v1045
  %v1047 = vrot.slane %v1046, 1
  %v1048 = vadd.f32 %v1046, %v1047
  %v1049 = vmul.f32 %v1048, %v786
  %v1050 = vld [vmem:[%s2] sm:$0x1]
  %v1051 = vadd.f32 %v1049, 1e-05
  %v1052 = vrsqrt.pop %v1051
  %v1053 = vmul.f32 %v1050, %v1052
  %v1054 = vld [vmem:[%s3] sm:$0x1]
  %v1055 = vmul.f32 %v787, %v1053
  %v1056 = vsub.f32 %v1054, %v1055
  %v1058 = vlaneseq
  %v1059 = vshrl.u32 %v1058, 7
  %v1060 = vsub.s32 0, %v1059
  %v1061 = vrot.slane %v1053, %v1060
  %v1063 = vmul.f32 %v398, %v1061
  %v1064 = vmul.f32 %v401, %v1061
  %v1065 = vmul.f32 %v406, %v1061
  %v1066 = vmul.f32 %v409, %v1061
  %v1067 = vmul.f32 %v414, %v1061
  %v1068 = vmul.f32 %v417, %v1061
  %v1069 = vmul.f32 %v422, %v1061
  %v1070 = vmul.f32 %v425, %v1061
  %v1071 = vmul.f32 %v430, %v1061
  %v1072 = vmul.f32 %v433, %v1061
  %v1073 = vmul.f32 %v438, %v1061
  %v1074 = vmul.f32 %v441, %v1061
  %v1075 = vmul.f32 %v446, %v1061
  %v1076 = vmul.f32 %v449, %v1061
  %v1077 = vmul.f32 %v454, %v1061
  %v1078 = vmul.f32 %v457, %v1061
  %v1079 = vmul.f32 %v462, %v1061
  %v1080 = vmul.f32 %v465, %v1061
  %v1081 = vmul.f32 %v470, %v1061
  %v1082 = vmul.f32 %v473, %v1061
  %v1083 = vmul.f32 %v478, %v1061
  %v1084 = vmul.f32 %v481, %v1061
  %v1085 = vmul.f32 %v486, %v1061
  %v1086 = vmul.f32 %v489, %v1061
  %v1087 = vmul.f32 %v494, %v1061
  %v1088 = vmul.f32 %v497, %v1061
  %v1089 = vmul.f32 %v502, %v1061
  %v1090 = vmul.f32 %v505, %v1061
  %v1091 = vmul.f32 %v510, %v1061
  %v1092 = vmul.f32 %v513, %v1061
  %v1093 = vmul.f32 %v518, %v1061
  %v1094 = vmul.f32 %v521, %v1061
  %v1095 = vmul.f32 %v526, %v1061
  %v1096 = vmul.f32 %v529, %v1061
  %v1097 = vmul.f32 %v534, %v1061
  %v1098 = vmul.f32 %v537, %v1061
  %v1099 = vmul.f32 %v542, %v1061
  %v1100 = vmul.f32 %v545, %v1061
  %v1101 = vmul.f32 %v550, %v1061
  %v1102 = vmul.f32 %v553, %v1061
  %v1103 = vmul.f32 %v558, %v1061
  %v1104 = vmul.f32 %v561, %v1061
  %v1105 = vmul.f32 %v566, %v1061
  %v1106 = vmul.f32 %v569, %v1061
  %v1107 = vmul.f32 %v574, %v1061
  %v1108 = vmul.f32 %v577, %v1061
  %v1109 = vmul.f32 %v582, %v1061
  %v1110 = vmul.f32 %v585, %v1061
  %v1111 = vmul.f32 %v590, %v1061
  %v1112 = vmul.f32 %v593, %v1061
  %v1113 = vmul.f32 %v598, %v1061
  %v1114 = vmul.f32 %v601, %v1061
  %v1115 = vmul.f32 %v606, %v1061
  %v1116 = vmul.f32 %v609, %v1061
  %v1117 = vmul.f32 %v614, %v1061
  %v1118 = vmul.f32 %v617, %v1061
  %v1119 = vmul.f32 %v622, %v1061
  %v1120 = vmul.f32 %v625, %v1061
  %v1121 = vmul.f32 %v630, %v1061
  %v1122 = vmul.f32 %v633, %v1061
  %v1123 = vmul.f32 %v638, %v1061
  %v1124 = vmul.f32 %v641, %v1061
  %v1125 = vmul.f32 %v646, %v1061
  %v1126 = vmul.f32 %v649, %v1061
  %v1128 = vlaneseq
  %v1129 = vshrl.u32 %v1128, 7
  %v1130 = vsub.s32 0, %v1129
  %v1131 = vrot.slane %v1056, %v1130
  %v1133 = vadd.f32 %v1063, %v1131
  %v1134 = vadd.f32 %v1064, %v1131
  %v1135 = vadd.f32 %v1065, %v1131
  %v1136 = vadd.f32 %v1066, %v1131
  %v1137 = vadd.f32 %v1067, %v1131
  %v1138 = vadd.f32 %v1068, %v1131
  %v1139 = vadd.f32 %v1069, %v1131
  %v1140 = vadd.f32 %v1070, %v1131
  %v1141 = vadd.f32 %v1071, %v1131
  %v1142 = vadd.f32 %v1072, %v1131
  %v1143 = vadd.f32 %v1073, %v1131
  %v1144 = vadd.f32 %v1074, %v1131
  %v1145 = vadd.f32 %v1075, %v1131
  %v1146 = vadd.f32 %v1076, %v1131
  %v1147 = vadd.f32 %v1077, %v1131
  %v1148 = vadd.f32 %v1078, %v1131
  %v1149 = vadd.f32 %v1079, %v1131
  %v1150 = vadd.f32 %v1080, %v1131
  %v1151 = vadd.f32 %v1081, %v1131
  %v1152 = vadd.f32 %v1082, %v1131
  %v1153 = vadd.f32 %v1083, %v1131
  %v1154 = vadd.f32 %v1084, %v1131
  %v1155 = vadd.f32 %v1085, %v1131
  %v1156 = vadd.f32 %v1086, %v1131
  %v1157 = vadd.f32 %v1087, %v1131
  %v1158 = vadd.f32 %v1088, %v1131
  %v1159 = vadd.f32 %v1089, %v1131
  %v1160 = vadd.f32 %v1090, %v1131
  %v1161 = vadd.f32 %v1091, %v1131
  %v1162 = vadd.f32 %v1092, %v1131
  %v1163 = vadd.f32 %v1093, %v1131
  %v1164 = vadd.f32 %v1094, %v1131
  %v1165 = vadd.f32 %v1095, %v1131
  %v1166 = vadd.f32 %v1096, %v1131
  %v1167 = vadd.f32 %v1097, %v1131
  %v1168 = vadd.f32 %v1098, %v1131
  %v1169 = vadd.f32 %v1099, %v1131
  %v1170 = vadd.f32 %v1100, %v1131
  %v1171 = vadd.f32 %v1101, %v1131
  %v1172 = vadd.f32 %v1102, %v1131
  %v1173 = vadd.f32 %v1103, %v1131
  %v1174 = vadd.f32 %v1104, %v1131
  %v1175 = vadd.f32 %v1105, %v1131
  %v1176 = vadd.f32 %v1106, %v1131
  %v1177 = vadd.f32 %v1107, %v1131
  %v1178 = vadd.f32 %v1108, %v1131
  %v1179 = vadd.f32 %v1109, %v1131
  %v1180 = vadd.f32 %v1110, %v1131
  %v1181 = vadd.f32 %v1111, %v1131
  %v1182 = vadd.f32 %v1112, %v1131
  %v1183 = vadd.f32 %v1113, %v1131
  %v1184 = vadd.f32 %v1114, %v1131
  %v1185 = vadd.f32 %v1115, %v1131
  %v1186 = vadd.f32 %v1116, %v1131
  %v1187 = vadd.f32 %v1117, %v1131
  %v1188 = vadd.f32 %v1118, %v1131
  %v1189 = vadd.f32 %v1119, %v1131
  %v1190 = vadd.f32 %v1120, %v1131
  %v1191 = vadd.f32 %v1121, %v1131
  %v1192 = vadd.f32 %v1122, %v1131
  %v1193 = vadd.f32 %v1123, %v1131
  %v1194 = vadd.f32 %v1124, %v1131
  %v1195 = vadd.f32 %v1125, %v1131
  %v1196 = vadd.f32 %v1126, %v1131
  %v1197 = vmax.f32 %v1133, 0.0
  %v1198 = vmax.f32 %v1134, 0.0
  %v1199 = vmax.f32 %v1135, 0.0
  %v1200 = vmax.f32 %v1136, 0.0
  %v1201 = vmax.f32 %v1137, 0.0
  %v1202 = vmax.f32 %v1138, 0.0
  %v1203 = vmax.f32 %v1139, 0.0
  %v1204 = vmax.f32 %v1140, 0.0
  %v1205 = vmax.f32 %v1141, 0.0
  %v1206 = vmax.f32 %v1142, 0.0
  %v1207 = vmax.f32 %v1143, 0.0
  %v1208 = vmax.f32 %v1144, 0.0
  %v1209 = vmax.f32 %v1145, 0.0
  %v1210 = vmax.f32 %v1146, 0.0
  %v1211 = vmax.f32 %v1147, 0.0
  %v1212 = vmax.f32 %v1148, 0.0
  %v1213 = vmax.f32 %v1149, 0.0
  %v1214 = vmax.f32 %v1150, 0.0
  %v1215 = vmax.f32 %v1151, 0.0
  %v1216 = vmax.f32 %v1152, 0.0
  %v1217 = vmax.f32 %v1153, 0.0
  %v1218 = vmax.f32 %v1154, 0.0
  %v1219 = vmax.f32 %v1155, 0.0
  %v1220 = vmax.f32 %v1156, 0.0
  %v1221 = vmax.f32 %v1157, 0.0
  %v1222 = vmax.f32 %v1158, 0.0
  %v1223 = vmax.f32 %v1159, 0.0
  %v1224 = vmax.f32 %v1160, 0.0
  %v1225 = vmax.f32 %v1161, 0.0
  %v1226 = vmax.f32 %v1162, 0.0
  %v1227 = vmax.f32 %v1163, 0.0
  %v1228 = vmax.f32 %v1164, 0.0
  %v1229 = vmax.f32 %v1165, 0.0
  %v1230 = vmax.f32 %v1166, 0.0
  %v1231 = vmax.f32 %v1167, 0.0
  %v1232 = vmax.f32 %v1168, 0.0
  %v1233 = vmax.f32 %v1169, 0.0
  %v1234 = vmax.f32 %v1170, 0.0
  %v1235 = vmax.f32 %v1171, 0.0
  %v1236 = vmax.f32 %v1172, 0.0
  %v1237 = vmax.f32 %v1173, 0.0
  %v1238 = vmax.f32 %v1174, 0.0
  %v1239 = vmax.f32 %v1175, 0.0
  %v1240 = vmax.f32 %v1176, 0.0
  %v1241 = vmax.f32 %v1177, 0.0
  %v1242 = vmax.f32 %v1178, 0.0
  %v1243 = vmax.f32 %v1179, 0.0
  %v1244 = vmax.f32 %v1180, 0.0
  %v1245 = vmax.f32 %v1181, 0.0
  %v1246 = vmax.f32 %v1182, 0.0
  %v1247 = vmax.f32 %v1183, 0.0
  %v1248 = vmax.f32 %v1184, 0.0
  %v1249 = vmax.f32 %v1185, 0.0
  %v1250 = vmax.f32 %v1186, 0.0
  %v1251 = vmax.f32 %v1187, 0.0
  %v1252 = vmax.f32 %v1188, 0.0
  %v1253 = vmax.f32 %v1189, 0.0
  %v1254 = vmax.f32 %v1190, 0.0
  %v1255 = vmax.f32 %v1191, 0.0
  %v1256 = vmax.f32 %v1192, 0.0
  %v1257 = vmax.f32 %v1193, 0.0
  %v1258 = vmax.f32 %v1194, 0.0
  %v1259 = vmax.f32 %v1195, 0.0
  %v1260 = vmax.f32 %v1196, 0.0
  %v1261 = vpack.c.bf16 %v1198, %v1197
  %v1262 = vpack.c.bf16 %v1200, %v1199
  %v1263 = vpack.c.bf16 %v1202, %v1201
  %v1264 = vpack.c.bf16 %v1204, %v1203
  %v1265 = vpack.c.bf16 %v1206, %v1205
  %v1266 = vpack.c.bf16 %v1208, %v1207
  %v1267 = vpack.c.bf16 %v1210, %v1209
  %v1268 = vpack.c.bf16 %v1212, %v1211
  %v1269 = vpack.c.bf16 %v1214, %v1213
  %v1270 = vpack.c.bf16 %v1216, %v1215
  %v1271 = vpack.c.bf16 %v1218, %v1217
  %v1272 = vpack.c.bf16 %v1220, %v1219
  %v1273 = vpack.c.bf16 %v1222, %v1221
  %v1274 = vpack.c.bf16 %v1224, %v1223
  %v1275 = vpack.c.bf16 %v1226, %v1225
  %v1276 = vpack.c.bf16 %v1228, %v1227
  %v1277 = vpack.c.bf16 %v1230, %v1229
  %v1278 = vpack.c.bf16 %v1232, %v1231
  %v1279 = vpack.c.bf16 %v1234, %v1233
  %v1280 = vpack.c.bf16 %v1236, %v1235
  %v1281 = vpack.c.bf16 %v1238, %v1237
  %v1282 = vpack.c.bf16 %v1240, %v1239
  %v1283 = vpack.c.bf16 %v1242, %v1241
  %v1284 = vpack.c.bf16 %v1244, %v1243
  %v1285 = vpack.c.bf16 %v1246, %v1245
  %v1286 = vpack.c.bf16 %v1248, %v1247
  %v1287 = vpack.c.bf16 %v1250, %v1249
  %v1288 = vpack.c.bf16 %v1252, %v1251
  %v1289 = vpack.c.bf16 %v1254, %v1253
  %v1290 = vpack.c.bf16 %v1256, %v1255
  %v1291 = vpack.c.bf16 %v1258, %v1257
  %v1292 = vpack.c.bf16 %v1260, %v1259
  %v1325 = vunpack.c.l.b16 %v1261
  %v1326 = vunpack.c.h.b16 %v1261
  %v1327 = vunpack.c.l.b16 %v1262
  %v1328 = vunpack.c.h.b16 %v1262
  %v1329 = vunpack.c.l.b16 %v1263
  %v1330 = vunpack.c.h.b16 %v1263
  %v1331 = vunpack.c.l.b16 %v1264
  %v1332 = vunpack.c.h.b16 %v1264
  %v1333 = vunpack.c.l.b16 %v1265
  %v1334 = vunpack.c.h.b16 %v1265
  %v1335 = vunpack.c.l.b16 %v1266
  %v1336 = vunpack.c.h.b16 %v1266
  %v1337 = vunpack.c.l.b16 %v1267
  %v1338 = vunpack.c.h.b16 %v1267
  %v1339 = vunpack.c.l.b16 %v1268
  %v1340 = vunpack.c.h.b16 %v1268
  %v1341 = vunpack.c.l.b16 %v1269
  %v1342 = vunpack.c.h.b16 %v1269
  %v1343 = vunpack.c.l.b16 %v1270
  %v1344 = vunpack.c.h.b16 %v1270
  %v1345 = vunpack.c.l.b16 %v1271
  %v1346 = vunpack.c.h.b16 %v1271
  %v1347 = vunpack.c.l.b16 %v1272
  %v1348 = vunpack.c.h.b16 %v1272
  %v1349 = vunpack.c.l.b16 %v1273
  %v1350 = vunpack.c.h.b16 %v1273
  %v1351 = vunpack.c.l.b16 %v1274
  %v1352 = vunpack.c.h.b16 %v1274
  %v1353 = vunpack.c.l.b16 %v1275
  %v1354 = vunpack.c.h.b16 %v1275
  %v1355 = vunpack.c.l.b16 %v1276
  %v1356 = vunpack.c.h.b16 %v1276
  %v1357 = vunpack.c.l.b16 %v1277
  %v1358 = vunpack.c.h.b16 %v1277
  %v1359 = vunpack.c.l.b16 %v1278
  %v1360 = vunpack.c.h.b16 %v1278
  %v1361 = vunpack.c.l.b16 %v1279
  %v1362 = vunpack.c.h.b16 %v1279
  %v1363 = vunpack.c.l.b16 %v1280
  %v1364 = vunpack.c.h.b16 %v1280
  %v1365 = vunpack.c.l.b16 %v1281
  %v1366 = vunpack.c.h.b16 %v1281
  %v1367 = vunpack.c.l.b16 %v1282
  %v1368 = vunpack.c.h.b16 %v1282
  %v1369 = vunpack.c.l.b16 %v1283
  %v1370 = vunpack.c.h.b16 %v1283
  %v1371 = vunpack.c.l.b16 %v1284
  %v1372 = vunpack.c.h.b16 %v1284
  %v1373 = vunpack.c.l.b16 %v1285
  %v1374 = vunpack.c.h.b16 %v1285
  %v1375 = vunpack.c.l.b16 %v1286
  %v1376 = vunpack.c.h.b16 %v1286
  %v1377 = vunpack.c.l.b16 %v1287
  %v1378 = vunpack.c.h.b16 %v1287
  %v1379 = vunpack.c.l.b16 %v1288
  %v1380 = vunpack.c.h.b16 %v1288
  %v1381 = vunpack.c.l.b16 %v1289
  %v1382 = vunpack.c.h.b16 %v1289
  %v1383 = vunpack.c.l.b16 %v1290
  %v1384 = vunpack.c.h.b16 %v1290
  %v1385 = vunpack.c.l.b16 %v1291
  %v1386 = vunpack.c.h.b16 %v1291
  %v1387 = vunpack.c.l.b16 %v1292
  %v1388 = vunpack.c.h.b16 %v1292
  %v1389 = vpack.c.b16 %v1325, %v1325
  %v1390 = vpack.c.b16 %v1326, %v1326
  %v1391 = vpack.c.b16 %v1327, %v1327
  %v1392 = vpack.c.b16 %v1328, %v1328
  %v1393 = vpack.c.b16 %v1329, %v1329
  %v1394 = vpack.c.b16 %v1330, %v1330
  %v1395 = vpack.c.b16 %v1331, %v1331
  %v1396 = vpack.c.b16 %v1332, %v1332
  %v1397 = vpack.c.b16 %v1333, %v1333
  %v1398 = vpack.c.b16 %v1334, %v1334
  %v1399 = vpack.c.b16 %v1335, %v1335
  %v1400 = vpack.c.b16 %v1336, %v1336
  %v1401 = vpack.c.b16 %v1337, %v1337
  %v1402 = vpack.c.b16 %v1338, %v1338
  %v1403 = vpack.c.b16 %v1339, %v1339
  %v1404 = vpack.c.b16 %v1340, %v1340
  %v1405 = vpack.c.b16 %v1341, %v1341
  %v1406 = vpack.c.b16 %v1342, %v1342
  %v1407 = vpack.c.b16 %v1343, %v1343
  %v1408 = vpack.c.b16 %v1344, %v1344
  %v1409 = vpack.c.b16 %v1345, %v1345
  %v1410 = vpack.c.b16 %v1346, %v1346
  %v1411 = vpack.c.b16 %v1347, %v1347
  %v1412 = vpack.c.b16 %v1348, %v1348
  %v1413 = vpack.c.b16 %v1349, %v1349
  %v1414 = vpack.c.b16 %v1350, %v1350
  %v1415 = vpack.c.b16 %v1351, %v1351
  %v1416 = vpack.c.b16 %v1352, %v1352
  %v1417 = vpack.c.b16 %v1353, %v1353
  %v1418 = vpack.c.b16 %v1354, %v1354
  %v1419 = vpack.c.b16 %v1355, %v1355
  %v1420 = vpack.c.b16 %v1356, %v1356
  %v1421 = vpack.c.b16 %v1357, %v1357
  %v1422 = vpack.c.b16 %v1358, %v1358
  %v1423 = vpack.c.b16 %v1359, %v1359
  %v1424 = vpack.c.b16 %v1360, %v1360
  %v1425 = vpack.c.b16 %v1361, %v1361
  %v1426 = vpack.c.b16 %v1362, %v1362
  %v1427 = vpack.c.b16 %v1363, %v1363
  %v1428 = vpack.c.b16 %v1364, %v1364
  %v1429 = vpack.c.b16 %v1365, %v1365
  %v1430 = vpack.c.b16 %v1366, %v1366
  %v1431 = vpack.c.b16 %v1367, %v1367
  %v1432 = vpack.c.b16 %v1368, %v1368
  %v1433 = vpack.c.b16 %v1369, %v1369
  %v1434 = vpack.c.b16 %v1370, %v1370
  %v1435 = vpack.c.b16 %v1371, %v1371
  %v1436 = vpack.c.b16 %v1372, %v1372
  %v1437 = vpack.c.b16 %v1373, %v1373
  %v1438 = vpack.c.b16 %v1374, %v1374
  %v1439 = vpack.c.b16 %v1375, %v1375
  %v1440 = vpack.c.b16 %v1376, %v1376
  %v1441 = vpack.c.b16 %v1377, %v1377
  %v1442 = vpack.c.b16 %v1378, %v1378
  %v1443 = vpack.c.b16 %v1379, %v1379
  %v1444 = vpack.c.b16 %v1380, %v1380
  %v1445 = vpack.c.b16 %v1381, %v1381
  %v1446 = vpack.c.b16 %v1382, %v1382
  %v1447 = vpack.c.b16 %v1383, %v1383
  %v1448 = vpack.c.b16 %v1384, %v1384
  %v1449 = vpack.c.b16 %v1385, %v1385
  %v1450 = vpack.c.b16 %v1386, %v1386
  %v1451 = vpack.c.b16 %v1387, %v1387
  %v1452 = vpack.c.b16 %v1388, %v1388
  %vm1517 = vcmask 60416
  %1518 = vst.msk [vmem:[%s4] sm:$0xf] %vm1517, %v1389
  %1519 = vst.msk [vmem:[%s4 + $0x4] sm:$0xf] %vm1517, %v1390
  %1520 = vst.msk [vmem:[%s4 + $0x8] sm:$0xf] %vm1517, %v1391
  %1521 = vst.msk [vmem:[%s4 + $0xc] sm:$0xf] %vm1517, %v1392
  %1522 = vst.msk [vmem:[%s4 + $0x10] sm:$0xf] %vm1517, %v1393
  %1523 = vst.msk [vmem:[%s4 + $0x14] sm:$0xf] %vm1517, %v1394
  %1524 = vst.msk [vmem:[%s4 + $0x18] sm:$0xf] %vm1517, %v1395
  %1525 = vst.msk [vmem:[%s4 + $0x1c] sm:$0xf] %vm1517, %v1396
  %1526 = vst.msk [vmem:[%s4 + $0x20] sm:$0xf] %vm1517, %v1397
  %1527 = vst.msk [vmem:[%s4 + $0x24] sm:$0xf] %vm1517, %v1398
  %1528 = vst.msk [vmem:[%s4 + $0x28] sm:$0xf] %vm1517, %v1399
  %1529 = vst.msk [vmem:[%s4 + $0x2c] sm:$0xf] %vm1517, %v1400
  %1530 = vst.msk [vmem:[%s4 + $0x30] sm:$0xf] %vm1517, %v1401
  %1531 = vst.msk [vmem:[%s4 + $0x34] sm:$0xf] %vm1517, %v1402
  %1532 = vst.msk [vmem:[%s4 + $0x38] sm:$0xf] %vm1517, %v1403
  %1533 = vst.msk [vmem:[%s4 + $0x3c] sm:$0xf] %vm1517, %v1404
  %1534 = vst.msk [vmem:[%s4 + $0x40] sm:$0xf] %vm1517, %v1405
  %1535 = vst.msk [vmem:[%s4 + $0x44] sm:$0xf] %vm1517, %v1406
  %1536 = vst.msk [vmem:[%s4 + $0x48] sm:$0xf] %vm1517, %v1407
  %1537 = vst.msk [vmem:[%s4 + $0x4c] sm:$0xf] %vm1517, %v1408
  %1538 = vst.msk [vmem:[%s4 + $0x50] sm:$0xf] %vm1517, %v1409
  %1539 = vst.msk [vmem:[%s4 + $0x54] sm:$0xf] %vm1517, %v1410
  %1540 = vst.msk [vmem:[%s4 + $0x58] sm:$0xf] %vm1517, %v1411
  %1541 = vst.msk [vmem:[%s4 + $0x5c] sm:$0xf] %vm1517, %v1412
  %1542 = vst.msk [vmem:[%s4 + $0x60] sm:$0xf] %vm1517, %v1413
  %1543 = vst.msk [vmem:[%s4 + $0x64] sm:$0xf] %vm1517, %v1414
  %1544 = vst.msk [vmem:[%s4 + $0x68] sm:$0xf] %vm1517, %v1415
  %1545 = vst.msk [vmem:[%s4 + $0x6c] sm:$0xf] %vm1517, %v1416
  %1546 = vst.msk [vmem:[%s4 + $0x70] sm:$0xf] %vm1517, %v1417
  %1547 = vst.msk [vmem:[%s4 + $0x74] sm:$0xf] %vm1517, %v1418
  %1548 = vst.msk [vmem:[%s4 + $0x78] sm:$0xf] %vm1517, %v1419
  %1549 = vst.msk [vmem:[%s4 + $0x7c] sm:$0xf] %vm1517, %v1420
  %1550 = vst.msk [vmem:[%s4 + $0x80] sm:$0xf] %vm1517, %v1421
  %1551 = vst.msk [vmem:[%s4 + $0x84] sm:$0xf] %vm1517, %v1422
  %1552 = vst.msk [vmem:[%s4 + $0x88] sm:$0xf] %vm1517, %v1423
  %1553 = vst.msk [vmem:[%s4 + $0x8c] sm:$0xf] %vm1517, %v1424
  %1554 = vst.msk [vmem:[%s4 + $0x90] sm:$0xf] %vm1517, %v1425
  %1555 = vst.msk [vmem:[%s4 + $0x94] sm:$0xf] %vm1517, %v1426
  %1556 = vst.msk [vmem:[%s4 + $0x98] sm:$0xf] %vm1517, %v1427
  %1557 = vst.msk [vmem:[%s4 + $0x9c] sm:$0xf] %vm1517, %v1428
  %1558 = vst.msk [vmem:[%s4 + $0xa0] sm:$0xf] %vm1517, %v1429
  %1559 = vst.msk [vmem:[%s4 + $0xa4] sm:$0xf] %vm1517, %v1430
  %1560 = vst.msk [vmem:[%s4 + $0xa8] sm:$0xf] %vm1517, %v1431
  %1561 = vst.msk [vmem:[%s4 + $0xac] sm:$0xf] %vm1517, %v1432
  %1562 = vst.msk [vmem:[%s4 + $0xb0] sm:$0xf] %vm1517, %v1433
  %1563 = vst.msk [vmem:[%s4 + $0xb4] sm:$0xf] %vm1517, %v1434
  %1564 = vst.msk [vmem:[%s4 + $0xb8] sm:$0xf] %vm1517, %v1435
  %1565 = vst.msk [vmem:[%s4 + $0xbc] sm:$0xf] %vm1517, %v1436
  %1566 = vst.msk [vmem:[%s4 + $0xc0] sm:$0xf] %vm1517, %v1437
  %1567 = vst.msk [vmem:[%s4 + $0xc4] sm:$0xf] %vm1517, %v1438
  %1568 = vst.msk [vmem:[%s4 + $0xc8] sm:$0xf] %vm1517, %v1439
  %1569 = vst.msk [vmem:[%s4 + $0xcc] sm:$0xf] %vm1517, %v1440
  %1570 = vst.msk [vmem:[%s4 + $0xd0] sm:$0xf] %vm1517, %v1441
  %1571 = vst.msk [vmem:[%s4 + $0xd4] sm:$0xf] %vm1517, %v1442
  %1572 = vst.msk [vmem:[%s4 + $0xd8] sm:$0xf] %vm1517, %v1443
  %1573 = vst.msk [vmem:[%s4 + $0xdc] sm:$0xf] %vm1517, %v1444
  %1574 = vst.msk [vmem:[%s4 + $0xe0] sm:$0xf] %vm1517, %v1445
  %1575 = vst.msk [vmem:[%s4 + $0xe4] sm:$0xf] %vm1517, %v1446
  %1576 = vst.msk [vmem:[%s4 + $0xe8] sm:$0xf] %vm1517, %v1447
  %1577 = vst.msk [vmem:[%s4 + $0xec] sm:$0xf] %vm1517, %v1448
  %1578 = vst.msk [vmem:[%s4 + $0xf0] sm:$0xf] %vm1517, %v1449
  %1579 = vst.msk [vmem:[%s4 + $0xf4] sm:$0xf] %vm1517, %v1450
  %1580 = vst.msk [vmem:[%s4 + $0xf8] sm:$0xf] %vm1517, %v1451
  %1581 = vst.msk [vmem:[%s4 + $0xfc] sm:$0xf] %vm1517, %v1452
  // Predicated region
  $region18: #{_lambda_.3} parent=0 // pred_check
    _
  $region19: #{_lambda_.3} parent=0 // pred_check_branch
    %1583 = sbr.rel (0) target = $region21
  $region20: #{_lambda_.3} parent=0 // pred_region
    _
  $region21: #{_lambda_.3} parent=0 // pred_fallthru
    _
  // Predicated region
  $region22: #{_lambda_.3} parent=0 // pred_check
    _
  $region23: #{_lambda_.3} parent=0 // pred_check_branch
    %1585 = sbr.rel (0) target = $region25
  $region24: #{_lambda_.3} parent=0 // pred_region
    _
  $region25: #{_lambda_.3} parent=0 // pred_fallthru
    _

// kernel: _lambda_.4
$region0: #{_lambda_.4}
  #allocation0 [shape = 'u32[]', space=smem, size = 0x4, offset = 0x4, fixed_abs, tag = 'smem constant byte address 0x4 - core index']
  #allocation1 [shape = 'u32[144,128]{1,0:T(1,128)}', space=vmem, size = 0x12000, scoped, tag = 'internal scratch']
  %s0 = inlined_call_operand.vmem [shape: bf16[512,72], index: 0, kind: input, shape index: {}]
  %s1 = inlined_call_operand.vmem [shape: bf16[72,8], index: 1, kind: input, shape index: {}]
  %s2 = inlined_call_operand.vmem [shape: f32[1,8], index: 2, kind: input, shape index: {}]
  %s3 = inlined_call_operand.vmem [shape: f32[1,8], index: 3, kind: input, shape index: {}]
  %s4 = inlined_call_operand.vmem [shape: f32[512,8], index: 4, kind: output, shape index: {}]
  %s5 = sld [smem:[#allocation0]]
  $region26: #{_lambda_.4} parent=0
    _
  %s7 = ssub.s32 1, %s5
  %s8 = scalar_select 0, %s7, %s5
  // Predicated region
  $region2: #{_lambda_.4} parent=0 // pred_check
    _
  $region3: #{_lambda_.4} parent=0 // pred_check_branch
    %10 = sbr.rel (0) target = $region5
  $region4: #{_lambda_.4} parent=0 // pred_region
    _
  $region5: #{_lambda_.4} parent=0 // pred_fallthru
    _
  // Predicated region
  $region6: #{_lambda_.4} parent=0 // pred_check
    _
  $region7: #{_lambda_.4} parent=0 // pred_check_branch
    %12 = sbr.rel (0) target = $region9
  $region8: #{_lambda_.4} parent=0 // pred_region
    _
  $region9: #{_lambda_.4} parent=0 // pred_fallthru
    _
  // Predicated region
  $region10: #{_lambda_.4} parent=0 // pred_check
    _
  $region11: #{_lambda_.4} parent=0 // pred_check_branch
    %14 = sbr.rel (0) target = $region13
  $region12: #{_lambda_.4} parent=0 // pred_region
    _
  $region13: #{_lambda_.4} parent=0 // pred_fallthru
    _
  // Predicated region
  $region14: #{_lambda_.4} parent=0 // pred_check
    _
  $region15: #{_lambda_.4} parent=0 // pred_check_branch
    %16 = sbr.rel (0) target = $region17
  $region16: #{_lambda_.4} parent=0 // pred_region
    _
  $region17: #{_lambda_.4} parent=0 // pred_fallthru
    _
  %v18 = vld [vmem:[%s0] sm:$0xf]
  %v19 = vld [vmem:[%s0 + $0x4] sm:$0xf]
  %v20 = vld [vmem:[%s0 + $0x8] sm:$0xf]
  %v21 = vld [vmem:[%s0 + $0xc] sm:$0xf]
  %v22 = vld [vmem:[%s0 + $0x10] sm:$0xf]
  %v23 = vld [vmem:[%s0 + $0x14] sm:$0xf]
  %v24 = vld [vmem:[%s0 + $0x18] sm:$0xf]
  %v25 = vld [vmem:[%s0 + $0x1c] sm:$0xf]
  %v26 = vld [vmem:[%s0 + $0x20] sm:$0xf]
  %v27 = vld [vmem:[%s0 + $0x24] sm:$0xf]
  %v28 = vld [vmem:[%s0 + $0x28] sm:$0xf]
  %v29 = vld [vmem:[%s0 + $0x2c] sm:$0xf]
  %v30 = vld [vmem:[%s0 + $0x30] sm:$0xf]
  %v31 = vld [vmem:[%s0 + $0x34] sm:$0xf]
  %v32 = vld [vmem:[%s0 + $0x38] sm:$0xf]
  %v33 = vld [vmem:[%s0 + $0x3c] sm:$0xf]
  %v34 = vld [vmem:[%s0 + $0x40] sm:$0xf]
  %v35 = vld [vmem:[%s0 + $0x44] sm:$0xf]
  %v36 = vld [vmem:[%s0 + $0x48] sm:$0xf]
  %v37 = vld [vmem:[%s0 + $0x4c] sm:$0xf]
  %v38 = vld [vmem:[%s0 + $0x50] sm:$0xf]
  %v39 = vld [vmem:[%s0 + $0x54] sm:$0xf]
  %v40 = vld [vmem:[%s0 + $0x58] sm:$0xf]
  %v41 = vld [vmem:[%s0 + $0x5c] sm:$0xf]
  %v42 = vld [vmem:[%s0 + $0x60] sm:$0xf]
  %v43 = vld [vmem:[%s0 + $0x64] sm:$0xf]
  %v44 = vld [vmem:[%s0 + $0x68] sm:$0xf]
  %v45 = vld [vmem:[%s0 + $0x6c] sm:$0xf]
  %v46 = vld [vmem:[%s0 + $0x70] sm:$0xf]
  %v47 = vld [vmem:[%s0 + $0x74] sm:$0xf]
  %v48 = vld [vmem:[%s0 + $0x78] sm:$0xf]
  %v49 = vld [vmem:[%s0 + $0x7c] sm:$0xf]
  %v50 = vld [vmem:[%s0 + $0x80] sm:$0xf]
  %v51 = vld [vmem:[%s0 + $0x84] sm:$0xf]
  %v52 = vld [vmem:[%s0 + $0x88] sm:$0xf]
  %v53 = vld [vmem:[%s0 + $0x8c] sm:$0xf]
  %v54 = vld [vmem:[%s0 + $0x90] sm:$0xf]
  %v55 = vld [vmem:[%s0 + $0x94] sm:$0xf]
  %v56 = vld [vmem:[%s0 + $0x98] sm:$0xf]
  %v57 = vld [vmem:[%s0 + $0x9c] sm:$0xf]
  %v58 = vld [vmem:[%s0 + $0xa0] sm:$0xf]
  %v59 = vld [vmem:[%s0 + $0xa4] sm:$0xf]
  %v60 = vld [vmem:[%s0 + $0xa8] sm:$0xf]
  %v61 = vld [vmem:[%s0 + $0xac] sm:$0xf]
  %v62 = vld [vmem:[%s0 + $0xb0] sm:$0xf]
  %v63 = vld [vmem:[%s0 + $0xb4] sm:$0xf]
  %v64 = vld [vmem:[%s0 + $0xb8] sm:$0xf]
  %v65 = vld [vmem:[%s0 + $0xbc] sm:$0xf]
  %v66 = vld [vmem:[%s0 + $0xc0] sm:$0xf]
  %v67 = vld [vmem:[%s0 + $0xc4] sm:$0xf]
  %v68 = vld [vmem:[%s0 + $0xc8] sm:$0xf]
  %v69 = vld [vmem:[%s0 + $0xcc] sm:$0xf]
  %v70 = vld [vmem:[%s0 + $0xd0] sm:$0xf]
  %v71 = vld [vmem:[%s0 + $0xd4] sm:$0xf]
  %v72 = vld [vmem:[%s0 + $0xd8] sm:$0xf]
  %v73 = vld [vmem:[%s0 + $0xdc] sm:$0xf]
  %v74 = vld [vmem:[%s0 + $0xe0] sm:$0xf]
  %v75 = vld [vmem:[%s0 + $0xe4] sm:$0xf]
  %v76 = vld [vmem:[%s0 + $0xe8] sm:$0xf]
  %v77 = vld [vmem:[%s0 + $0xec] sm:$0xf]
  %v78 = vld [vmem:[%s0 + $0xf0] sm:$0xf]
  %v79 = vld [vmem:[%s0 + $0xf4] sm:$0xf]
  %v80 = vld [vmem:[%s0 + $0xf8] sm:$0xf]
  %v81 = vld [vmem:[%s0 + $0xfc] sm:$0xf]
  %v82 = vld [vmem:[%s1] sm:$0xf]
  %v83 = vld [vmem:[%s1 + $0x4] sm:$0xf]
  %v84 = vld [vmem:[%s1 + $0x8] sm:$0xf]
  %v85 = vld [vmem:[%s1 + $0xc] sm:$0xf]
  %v86 = vld [vmem:[%s1 + $0x10] sm:$0xf]
  %v87 = vld [vmem:[%s1 + $0x14] sm:$0xf]
  %v88 = vld [vmem:[%s1 + $0x18] sm:$0xf]
  %v89 = vld [vmem:[%s1 + $0x1c] sm:$0xf]
  %v90 = vld [vmem:[%s1 + $0x20] sm:$0xf]
  %v155 = vunpack.c.l.b16 %v18
  %v156 = vunpack.c.l.b16 %v19
  %v157 = vunpack.c.l.b16 %v20
  %v158 = vunpack.c.l.b16 %v21
  %v159 = vunpack.c.l.b16 %v22
  %v160 = vunpack.c.l.b16 %v23
  %v161 = vunpack.c.l.b16 %v24
  %v162 = vunpack.c.l.b16 %v25
  %v163 = vunpack.c.l.b16 %v26
  %v164 = vunpack.c.l.b16 %v27
  %v165 = vunpack.c.l.b16 %v28
  %v166 = vunpack.c.l.b16 %v29
  %v167 = vunpack.c.l.b16 %v30
  %v168 = vunpack.c.l.b16 %v31
  %v169 = vunpack.c.l.b16 %v32
  %v170 = vunpack.c.l.b16 %v33
  %v171 = vunpack.c.l.b16 %v34
  %v172 = vunpack.c.l.b16 %v35
  %v173 = vunpack.c.l.b16 %v36
  %v174 = vunpack.c.l.b16 %v37
  %v175 = vunpack.c.l.b16 %v38
  %v176 = vunpack.c.l.b16 %v39
  %v177 = vunpack.c.l.b16 %v40
  %v178 = vunpack.c.l.b16 %v41
  %v179 = vunpack.c.l.b16 %v42
  %v180 = vunpack.c.l.b16 %v43
  %v181 = vunpack.c.l.b16 %v44
  %v182 = vunpack.c.l.b16 %v45
  %v183 = vunpack.c.l.b16 %v46
  %v184 = vunpack.c.l.b16 %v47
  %v185 = vunpack.c.l.b16 %v48
  %v186 = vunpack.c.l.b16 %v49
  %v187 = vunpack.c.l.b16 %v50
  %v188 = vunpack.c.l.b16 %v51
  %v189 = vunpack.c.l.b16 %v52
  %v190 = vunpack.c.l.b16 %v53
  %v191 = vunpack.c.l.b16 %v54
  %v192 = vunpack.c.l.b16 %v55
  %v193 = vunpack.c.l.b16 %v56
  %v194 = vunpack.c.l.b16 %v57
  %v195 = vunpack.c.l.b16 %v58
  %v196 = vunpack.c.l.b16 %v59
  %v197 = vunpack.c.l.b16 %v60
  %v198 = vunpack.c.l.b16 %v61
  %v199 = vunpack.c.l.b16 %v62
  %v200 = vunpack.c.l.b16 %v63
  %v201 = vunpack.c.l.b16 %v64
  %v202 = vunpack.c.l.b16 %v65
  %v203 = vunpack.c.l.b16 %v66
  %v204 = vunpack.c.l.b16 %v67
  %v205 = vunpack.c.l.b16 %v68
  %v206 = vunpack.c.l.b16 %v69
  %v207 = vunpack.c.l.b16 %v70
  %v208 = vunpack.c.l.b16 %v71
  %v209 = vunpack.c.l.b16 %v72
  %v210 = vunpack.c.l.b16 %v73
  %v211 = vunpack.c.l.b16 %v74
  %v212 = vunpack.c.l.b16 %v75
  %v213 = vunpack.c.l.b16 %v76
  %v214 = vunpack.c.l.b16 %v77
  %v215 = vunpack.c.l.b16 %v78
  %v216 = vunpack.c.l.b16 %v79
  %v217 = vunpack.c.l.b16 %v80
  %v218 = vunpack.c.l.b16 %v81
  %v219 = vpack.c.b16 %v156, %v155
  %v220 = vpack.c.b16 %v158, %v157
  %v221 = vpack.c.b16 %v160, %v159
  %v222 = vpack.c.b16 %v162, %v161
  %v223 = vpack.c.b16 %v164, %v163
  %v224 = vpack.c.b16 %v166, %v165
  %v225 = vpack.c.b16 %v168, %v167
  %v226 = vpack.c.b16 %v170, %v169
  %v227 = vpack.c.b16 %v172, %v171
  %v228 = vpack.c.b16 %v174, %v173
  %v229 = vpack.c.b16 %v176, %v175
  %v230 = vpack.c.b16 %v178, %v177
  %v231 = vpack.c.b16 %v180, %v179
  %v232 = vpack.c.b16 %v182, %v181
  %v233 = vpack.c.b16 %v184, %v183
  %v234 = vpack.c.b16 %v186, %v185
  %v235 = vpack.c.b16 %v188, %v187
  %v236 = vpack.c.b16 %v190, %v189
  %v237 = vpack.c.b16 %v192, %v191
  %v238 = vpack.c.b16 %v194, %v193
  %v239 = vpack.c.b16 %v196, %v195
  %v240 = vpack.c.b16 %v198, %v197
  %v241 = vpack.c.b16 %v200, %v199
  %v242 = vpack.c.b16 %v202, %v201
  %v243 = vpack.c.b16 %v204, %v203
  %v244 = vpack.c.b16 %v206, %v205
  %v245 = vpack.c.b16 %v208, %v207
  %v246 = vpack.c.b16 %v210, %v209
  %v247 = vpack.c.b16 %v212, %v211
  %v248 = vpack.c.b16 %v214, %v213
  %v249 = vpack.c.b16 %v216, %v215
  %v250 = vpack.c.b16 %v218, %v217
  %v260 = vunpack.c.l.b16 %v82
  %v261 = vunpack.c.l.b16 %v83
  %v262 = vunpack.c.l.b16 %v84
  %v263 = vunpack.c.l.b16 %v85
  %v264 = vunpack.c.l.b16 %v86
  %v265 = vunpack.c.l.b16 %v87
  %v266 = vunpack.c.l.b16 %v88
  %v267 = vunpack.c.l.b16 %v89
  %v268 = vunpack.c.l.b16 %v90
  %v269 = vpack.c.b16 %v261, %v260
  %v270 = vpack.c.b16 %v263, %v262
  %v271 = vpack.c.b16 %v265, %v264
  %v272 = vpack.c.b16 %v267, %v266
  %v273 = vpack.c.b16 %v268, %v268
  %vm278 = vcmask 588800
  %v280 = vsel %vm278, %v219, 0
  %v283 = vsel %vm278, %v220, 0
  %v286 = vsel %vm278, %v221, 0
  %v289 = vsel %vm278, %v222, 0
  %v292 = vsel %vm278, %v223, 0
  %v295 = vsel %vm278, %v224, 0
  %v298 = vsel %vm278, %v225, 0
  %v301 = vsel %vm278, %v226, 0
  %v304 = vsel %vm278, %v227, 0
  %v307 = vsel %vm278, %v228, 0
  %v310 = vsel %vm278, %v229, 0
  %v313 = vsel %vm278, %v230, 0
  %v316 = vsel %vm278, %v231, 0
  %v319 = vsel %vm278, %v232, 0
  %v322 = vsel %vm278, %v233, 0
  %v325 = vsel %vm278, %v234, 0
  %v328 = vsel %vm278, %v235, 0
  %v331 = vsel %vm278, %v236, 0
  %v334 = vsel %vm278, %v237, 0
  %v337 = vsel %vm278, %v238, 0
  %v340 = vsel %vm278, %v239, 0
  %v343 = vsel %vm278, %v240, 0
  %v346 = vsel %vm278, %v241, 0
  %v349 = vsel %vm278, %v242, 0
  %v352 = vsel %vm278, %v243, 0
  %v355 = vsel %vm278, %v244, 0
  %v358 = vsel %vm278, %v245, 0
  %v361 = vsel %vm278, %v246, 0
  %v364 = vsel %vm278, %v247, 0
  %v367 = vsel %vm278, %v248, 0
  %v370 = vsel %vm278, %v249, 0
  %v373 = vsel %vm278, %v250, 0
  %vm375 = vcmask 1043456
  %v377 = vsel %vm375, %v273, 0
  %379 = vmatprep.subr.bf16.mxu0 0
  %380 = vmatpush1.bf16.msra.mxu0 0
  %381 = vmatprep.subr.bf16.mxu0 0
  %382 = vmatpush1.bf16.msra.mxu0 0
  %383 = vmatprep.subr.bf16.mxu0 0
  %384 = vmatpush1.bf16.msra.mxu0 0
  %385 = vmatprep.subr.bf16.mxu0 0
  %386 = vmatpush1.bf16.msra.mxu0 %v377
  %387 = vmatprep.subr.bf16.mxu0 0
  %388 = vmatpush1.bf16.msra.mxu0 %v272
  %389 = vmatprep.subr.bf16.mxu0 0
  %390 = vmatpush1.bf16.msra.mxu0 %v271
  %391 = vmatprep.subr.bf16.mxu0 0
  %392 = vmatpush1.bf16.msra.mxu0 %v270
  %393 = vmatprep.subr.bf16.mxu0 0
  %394 = vmatpush1.bf16.msra.mxu0 %v269
  %395 = vmatprep.subr.bf16.mxu0 0
  %396 = vmatpush2.bf16.msra.mxu0 0
  %397 = vmatprep.subr.bf16.mxu0 0
  %398 = vmatpush2.bf16.msra.mxu0 0
  %399 = vmatprep.subr.bf16.mxu0 0
  %400 = vmatpush2.bf16.msra.mxu0 0
  %401 = vmatprep.subr.bf16.mxu0 0
  %402 = vmatpush2.bf16.msra.mxu0 0
  %403 = vmatprep.subr.bf16.mxu0 0
  %404 = vmatpush2.bf16.msra.mxu0 0
  %405 = vmatprep.subr.bf16.mxu0 0
  %406 = vmatpush2.bf16.msra.mxu0 0
  %407 = vmatprep.subr.bf16.mxu0 0
  %408 = vmatpush2.bf16.msra.mxu0 0
  %409 = vmatprep.subr.bf16.mxu0 0
  %410 = vmatpush2.bf16.msra.mxu0 0
  %411 = vmatprep.mubr.bf16.mxu0 0
  %412 = vmatmul.mubr.bf16.gmra.mxu0 %v280
  %v413 = vpop.f32.mrf.mxu0
  %v414 = vadd.f32 0.0, %v413
  %v415 = vpop.f32.mrf.mxu0
  %v416 = vpop.f32.mrf.mxu0
  %v417 = vadd.f32 0.0, %v416
  %v418 = vpop.f32.mrf.mxu0
  %419 = vmatprep.mubr.bf16.mxu0 0
  %420 = vmatmul.mubr.bf16.gmra.mxu0 %v283
  %v421 = vpop.f32.mrf.mxu0
  %v422 = vadd.f32 0.0, %v421
  %v423 = vpop.f32.mrf.mxu0
  %v424 = vpop.f32.mrf.mxu0
  %v425 = vadd.f32 0.0, %v424
  %v426 = vpop.f32.mrf.mxu0
  %427 = vmatprep.mubr.bf16.mxu0 0
  %428 = vmatmul.mubr.bf16.gmra.mxu0 %v286
  %v429 = vpop.f32.mrf.mxu0
  %v430 = vadd.f32 0.0, %v429
  %v431 = vpop.f32.mrf.mxu0
  %v432 = vpop.f32.mrf.mxu0
  %v433 = vadd.f32 0.0, %v432
  %v434 = vpop.f32.mrf.mxu0
  %435 = vmatprep.mubr.bf16.mxu0 0
  %436 = vmatmul.mubr.bf16.gmra.mxu0 %v289
  %v437 = vpop.f32.mrf.mxu0
  %v438 = vadd.f32 0.0, %v437
  %v439 = vpop.f32.mrf.mxu0
  %v440 = vpop.f32.mrf.mxu0
  %v441 = vadd.f32 0.0, %v440
  %v442 = vpop.f32.mrf.mxu0
  %443 = vmatprep.mubr.bf16.mxu0 0
  %444 = vmatmul.mubr.bf16.gmra.mxu0 %v292
  %v445 = vpop.f32.mrf.mxu0
  %v446 = vadd.f32 0.0, %v445
  %v447 = vpop.f32.mrf.mxu0
  %v448 = vpop.f32.mrf.mxu0
  %v449 = vadd.f32 0.0, %v448
  %v450 = vpop.f32.mrf.mxu0
  %451 = vmatprep.mubr.bf16.mxu0 0
  %452 = vmatmul.mubr.bf16.gmra.mxu0 %v295
  %v453 = vpop.f32.mrf.mxu0
  %v454 = vadd.f32 0.0, %v453
  %v455 = vpop.f32.mrf.mxu0
  %v456 = vpop.f32.mrf.mxu0
  %v457 = vadd.f32 0.0, %v456
  %v458 = vpop.f32.mrf.mxu0
  %459 = vmatprep.mubr.bf16.mxu0 0
  %460 = vmatmul.mubr.bf16.gmra.mxu0 %v298
  %v461 = vpop.f32.mrf.mxu0
  %v462 = vadd.f32 0.0, %v461
  %v463 = vpop.f32.mrf.mxu0
  %v464 = vpop.f32.mrf.mxu0
  %v465 = vadd.f32 0.0, %v464
  %v466 = vpop.f32.mrf.mxu0
  %467 = vmatprep.mubr.bf16.mxu0 0
  %468 = vmatmul.mubr.bf16.gmra.mxu0 %v301
  %v469 = vpop.f32.mrf.mxu0
  %v470 = vadd.f32 0.0, %v469
  %v471 = vpop.f32.mrf.mxu0
  %v472 = vpop.f32.mrf.mxu0
  %v473 = vadd.f32 0.0, %v472
  %v474 = vpop.f32.mrf.mxu0
  %475 = vmatprep.mubr.bf16.mxu0 0
  %476 = vmatmul.mubr.bf16.gmra.mxu0 %v304
  %v477 = vpop.f32.mrf.mxu0
  %v478 = vadd.f32 0.0, %v477
  %v479 = vpop.f32.mrf.mxu0
  %v480 = vpop.f32.mrf.mxu0
  %v481 = vadd.f32 0.0, %v480
  %v482 = vpop.f32.mrf.mxu0
  %483 = vmatprep.mubr.bf16.mxu0 0
  %484 = vmatmul.mubr.bf16.gmra.mxu0 %v307
  %v485 = vpop.f32.mrf.mxu0
  %v486 = vadd.f32 0.0, %v485
  %v487 = vpop.f32.mrf.mxu0
  %v488 = vpop.f32.mrf.mxu0
  %v489 = vadd.f32 0.0, %v488
  %v490 = vpop.f32.mrf.mxu0
  %491 = vmatprep.mubr.bf16.mxu0 0
  %492 = vmatmul.mubr.bf16.gmra.mxu0 %v310
  %v493 = vpop.f32.mrf.mxu0
  %v494 = vadd.f32 0.0, %v493
  %v495 = vpop.f32.mrf.mxu0
  %v496 = vpop.f32.mrf.mxu0
  %v497 = vadd.f32 0.0, %v496
  %v498 = vpop.f32.mrf.mxu0
  %499 = vmatprep.mubr.bf16.mxu0 0
  %500 = vmatmul.mubr.bf16.gmra.mxu0 %v313
  %v501 = vpop.f32.mrf.mxu0
  %v502 = vadd.f32 0.0, %v501
  %v503 = vpop.f32.mrf.mxu0
  %v504 = vpop.f32.mrf.mxu0
  %v505 = vadd.f32 0.0, %v504
  %v506 = vpop.f32.mrf.mxu0
  %507 = vmatprep.mubr.bf16.mxu0 0
  %508 = vmatmul.mubr.bf16.gmra.mxu0 %v316
  %v509 = vpop.f32.mrf.mxu0
  %v510 = vadd.f32 0.0, %v509
  %v511 = vpop.f32.mrf.mxu0
  %v512 = vpop.f32.mrf.mxu0
  %v513 = vadd.f32 0.0, %v512
  %v514 = vpop.f32.mrf.mxu0
  %515 = vmatprep.mubr.bf16.mxu0 0
  %516 = vmatmul.mubr.bf16.gmra.mxu0 %v319
  %v517 = vpop.f32.mrf.mxu0
  %v518 = vadd.f32 0.0, %v517
  %v519 = vpop.f32.mrf.mxu0
  %v520 = vpop.f32.mrf.mxu0
  %v521 = vadd.f32 0.0, %v520
  %v522 = vpop.f32.mrf.mxu0
  %523 = vmatprep.mubr.bf16.mxu0 0
  %524 = vmatmul.mubr.bf16.gmra.mxu0 %v322
  %v525 = vpop.f32.mrf.mxu0
  %v526 = vadd.f32 0.0, %v525
  %v527 = vpop.f32.mrf.mxu0
  %v528 = vpop.f32.mrf.mxu0
  %v529 = vadd.f32 0.0, %v528
  %v530 = vpop.f32.mrf.mxu0
  %531 = vmatprep.mubr.bf16.mxu0 0
  %532 = vmatmul.mubr.bf16.gmra.mxu0 %v325
  %v533 = vpop.f32.mrf.mxu0
  %v534 = vadd.f32 0.0, %v533
  %v535 = vpop.f32.mrf.mxu0
  %v536 = vpop.f32.mrf.mxu0
  %v537 = vadd.f32 0.0, %v536
  %v538 = vpop.f32.mrf.mxu0
  %539 = vmatprep.mubr.bf16.mxu0 0
  %540 = vmatmul.mubr.bf16.gmra.mxu0 %v328
  %v541 = vpop.f32.mrf.mxu0
  %v542 = vadd.f32 0.0, %v541
  %v543 = vpop.f32.mrf.mxu0
  %v544 = vpop.f32.mrf.mxu0
  %v545 = vadd.f32 0.0, %v544
  %v546 = vpop.f32.mrf.mxu0
  %547 = vmatprep.mubr.bf16.mxu0 0
  %548 = vmatmul.mubr.bf16.gmra.mxu0 %v331
  %v549 = vpop.f32.mrf.mxu0
  %v550 = vadd.f32 0.0, %v549
  %v551 = vpop.f32.mrf.mxu0
  %v552 = vpop.f32.mrf.mxu0
  %v553 = vadd.f32 0.0, %v552
  %v554 = vpop.f32.mrf.mxu0
  %555 = vmatprep.mubr.bf16.mxu0 0
  %556 = vmatmul.mubr.bf16.gmra.mxu0 %v334
  %v557 = vpop.f32.mrf.mxu0
  %v558 = vadd.f32 0.0, %v557
  %v559 = vpop.f32.mrf.mxu0
  %v560 = vpop.f32.mrf.mxu0
  %v561 = vadd.f32 0.0, %v560
  %v562 = vpop.f32.mrf.mxu0
  %563 = vmatprep.mubr.bf16.mxu0 0
  %564 = vmatmul.mubr.bf16.gmra.mxu0 %v337
  %v565 = vpop.f32.mrf.mxu0
  %v566 = vadd.f32 0.0, %v565
  %v567 = vpop.f32.mrf.mxu0
  %v568 = vpop.f32.mrf.mxu0
  %v569 = vadd.f32 0.0, %v568
  %v570 = vpop.f32.mrf.mxu0
  %571 = vmatprep.mubr.bf16.mxu0 0
  %572 = vmatmul.mubr.bf16.gmra.mxu0 %v340
  %v573 = vpop.f32.mrf.mxu0
  %v574 = vadd.f32 0.0, %v573
  %v575 = vpop.f32.mrf.mxu0
  %v576 = vpop.f32.mrf.mxu0
  %v577 = vadd.f32 0.0, %v576
  %v578 = vpop.f32.mrf.mxu0
  %579 = vmatprep.mubr.bf16.mxu0 0
  %580 = vmatmul.mubr.bf16.gmra.mxu0 %v343
  %v581 = vpop.f32.mrf.mxu0
  %v582 = vadd.f32 0.0, %v581
  %v583 = vpop.f32.mrf.mxu0
  %v584 = vpop.f32.mrf.mxu0
  %v585 = vadd.f32 0.0, %v584
  %v586 = vpop.f32.mrf.mxu0
  %587 = vmatprep.mubr.bf16.mxu0 0
  %588 = vmatmul.mubr.bf16.gmra.mxu0 %v346
  %v589 = vpop.f32.mrf.mxu0
  %v590 = vadd.f32 0.0, %v589
  %v591 = vpop.f32.mrf.mxu0
  %v592 = vpop.f32.mrf.mxu0
  %v593 = vadd.f32 0.0, %v592
  %v594 = vpop.f32.mrf.mxu0
  %595 = vmatprep.mubr.bf16.mxu0 0
  %596 = vmatmul.mubr.bf16.gmra.mxu0 %v349
  %v597 = vpop.f32.mrf.mxu0
  %v598 = vadd.f32 0.0, %v597
  %v599 = vpop.f32.mrf.mxu0
  %v600 = vpop.f32.mrf.mxu0
  %v601 = vadd.f32 0.0, %v600
  %v602 = vpop.f32.mrf.mxu0
  %603 = vmatprep.mubr.bf16.mxu0 0
  %604 = vmatmul.mubr.bf16.gmra.mxu0 %v352
  %v605 = vpop.f32.mrf.mxu0
  %v606 = vadd.f32 0.0, %v605
  %v607 = vpop.f32.mrf.mxu0
  %v608 = vpop.f32.mrf.mxu0
  %v609 = vadd.f32 0.0, %v608
  %v610 = vpop.f32.mrf.mxu0
  %611 = vmatprep.mubr.bf16.mxu0 0
  %612 = vmatmul.mubr.bf16.gmra.mxu0 %v355
  %v613 = vpop.f32.mrf.mxu0
  %v614 = vadd.f32 0.0, %v613
  %v615 = vpop.f32.mrf.mxu0
  %v616 = vpop.f32.mrf.mxu0
  %v617 = vadd.f32 0.0, %v616
  %v618 = vpop.f32.mrf.mxu0
  %619 = vmatprep.mubr.bf16.mxu0 0
  %620 = vmatmul.mubr.bf16.gmra.mxu0 %v358
  %v621 = vpop.f32.mrf.mxu0
  %v622 = vadd.f32 0.0, %v621
  %v623 = vpop.f32.mrf.mxu0
  %v624 = vpop.f32.mrf.mxu0
  %v625 = vadd.f32 0.0, %v624
  %v626 = vpop.f32.mrf.mxu0
  %627 = vmatprep.mubr.bf16.mxu0 0
  %628 = vmatmul.mubr.bf16.gmra.mxu0 %v361
  %v629 = vpop.f32.mrf.mxu0
  %v630 = vadd.f32 0.0, %v629
  %v631 = vpop.f32.mrf.mxu0
  %v632 = vpop.f32.mrf.mxu0
  %v633 = vadd.f32 0.0, %v632
  %v634 = vpop.f32.mrf.mxu0
  %635 = vmatprep.mubr.bf16.mxu0 0
  %636 = vmatmul.mubr.bf16.gmra.mxu0 %v364
  %v637 = vpop.f32.mrf.mxu0
  %v638 = vadd.f32 0.0, %v637
  %v639 = vpop.f32.mrf.mxu0
  %v640 = vpop.f32.mrf.mxu0
  %v641 = vadd.f32 0.0, %v640
  %v642 = vpop.f32.mrf.mxu0
  %643 = vmatprep.mubr.bf16.mxu0 0
  %644 = vmatmul.mubr.bf16.gmra.mxu0 %v367
  %v645 = vpop.f32.mrf.mxu0
  %v646 = vadd.f32 0.0, %v645
  %v647 = vpop.f32.mrf.mxu0
  %v648 = vpop.f32.mrf.mxu0
  %v649 = vadd.f32 0.0, %v648
  %v650 = vpop.f32.mrf.mxu0
  %651 = vmatprep.mubr.bf16.mxu0 0
  %652 = vmatmul.mubr.bf16.gmra.mxu0 %v370
  %v653 = vpop.f32.mrf.mxu0
  %v654 = vadd.f32 0.0, %v653
  %v655 = vpop.f32.mrf.mxu0
  %v656 = vpop.f32.mrf.mxu0
  %v657 = vadd.f32 0.0, %v656
  %v658 = vpop.f32.mrf.mxu0
  %659 = vmatprep.mubr.bf16.mxu0 0
  %660 = vmatmul.mubr.bf16.gmra.mxu0 %v373
  %v661 = vpop.f32.mrf.mxu0
  %v662 = vadd.f32 0.0, %v661
  %v663 = vpop.f32.mrf.mxu0
  %v664 = vpop.f32.mrf.mxu0
  %v665 = vadd.f32 0.0, %v664
  %v666 = vpop.f32.mrf.mxu0
  %667 = vdwg.mxu0
  %vm668 = vcmask 64512
  %v669 = vsel %vm668, %v414, 0.0
  %v670 = vsel %vm668, %v417, 0.0
  %v671 = vadd.f32 %v669, %v670
  %v672 = vsel %vm668, %v422, 0.0
  %v673 = vadd.f32 %v671, %v672
  %v674 = vsel %vm668, %v425, 0.0
  %v675 = vadd.f32 %v673, %v674
  %v676 = vsel %vm668, %v430, 0.0
  %v677 = vadd.f32 %v675, %v676
  %v678 = vsel %vm668, %v433, 0.0
  %v679 = vadd.f32 %v677, %v678
  %v680 = vsel %vm668, %v438, 0.0
  %v681 = vadd.f32 %v679, %v680
  %v682 = vsel %vm668, %v441, 0.0
  %v683 = vadd.f32 %v681, %v682
  %v684 = vsel %vm668, %v446, 0.0
  %v685 = vadd.f32 %v683, %v684
  %v686 = vsel %vm668, %v449, 0.0
  %v687 = vadd.f32 %v685, %v686
  %v688 = vsel %vm668, %v454, 0.0
  %v689 = vadd.f32 %v687, %v688
  %v690 = vsel %vm668, %v457, 0.0
  %v691 = vadd.f32 %v689, %v690
  %v692 = vsel %vm668, %v462, 0.0
  %v693 = vadd.f32 %v691, %v692
  %v694 = vsel %vm668, %v465, 0.0
  %v695 = vadd.f32 %v693, %v694
  %v696 = vsel %vm668, %v470, 0.0
  %v697 = vadd.f32 %v695, %v696
  %v698 = vsel %vm668, %v473, 0.0
  %v699 = vadd.f32 %v697, %v698
  %v700 = vsel %vm668, %v478, 0.0
  %v701 = vadd.f32 %v699, %v700
  %v702 = vsel %vm668, %v481, 0.0
  %v703 = vadd.f32 %v701, %v702
  %v704 = vsel %vm668, %v486, 0.0
  %v705 = vadd.f32 %v703, %v704
  %v706 = vsel %vm668, %v489, 0.0
  %v707 = vadd.f32 %v705, %v706
  %v708 = vsel %vm668, %v494, 0.0
  %v709 = vadd.f32 %v707, %v708
  %v710 = vsel %vm668, %v497, 0.0
  %v711 = vadd.f32 %v709, %v710
  %v712 = vsel %vm668, %v502, 0.0
  %v713 = vadd.f32 %v711, %v712
  %v714 = vsel %vm668, %v505, 0.0
  %v715 = vadd.f32 %v713, %v714
  %v716 = vsel %vm668, %v510, 0.0
  %v717 = vadd.f32 %v715, %v716
  %v718 = vsel %vm668, %v513, 0.0
  %v719 = vadd.f32 %v717, %v718
  %v720 = vsel %vm668, %v518, 0.0
  %v721 = vadd.f32 %v719, %v720
  %v722 = vsel %vm668, %v521, 0.0
  %v723 = vadd.f32 %v721, %v722
  %v724 = vsel %vm668, %v526, 0.0
  %v725 = vadd.f32 %v723, %v724
  %v726 = vsel %vm668, %v529, 0.0
  %v727 = vadd.f32 %v725, %v726
  %v728 = vsel %vm668, %v534, 0.0
  %v729 = vadd.f32 %v727, %v728
  %v730 = vsel %vm668, %v537, 0.0
  %v731 = vadd.f32 %v729, %v730
  %v732 = vsel %vm668, %v542, 0.0
  %v733 = vadd.f32 %v731, %v732
  %v734 = vsel %vm668, %v545, 0.0
  %v735 = vadd.f32 %v733, %v734
  %v736 = vsel %vm668, %v550, 0.0
  %v737 = vadd.f32 %v735, %v736
  %v738 = vsel %vm668, %v553, 0.0
  %v739 = vadd.f32 %v737, %v738
  %v740 = vsel %vm668, %v558, 0.0
  %v741 = vadd.f32 %v739, %v740
  %v742 = vsel %vm668, %v561, 0.0
  %v743 = vadd.f32 %v741, %v742
  %v744 = vsel %vm668, %v566, 0.0
  %v745 = vadd.f32 %v743, %v744
  %v746 = vsel %vm668, %v569, 0.0
  %v747 = vadd.f32 %v745, %v746
  %v748 = vsel %vm668, %v574, 0.0
  %v749 = vadd.f32 %v747, %v748
  %v750 = vsel %vm668, %v577, 0.0
  %v751 = vadd.f32 %v749, %v750
  %v752 = vsel %vm668, %v582, 0.0
  %v753 = vadd.f32 %v751, %v752
  %v754 = vsel %vm668, %v585, 0.0
  %v755 = vadd.f32 %v753, %v754
  %v756 = vsel %vm668, %v590, 0.0
  %v757 = vadd.f32 %v755, %v756
  %v758 = vsel %vm668, %v593, 0.0
  %v759 = vadd.f32 %v757, %v758
  %v760 = vsel %vm668, %v598, 0.0
  %v761 = vadd.f32 %v759, %v760
  %v762 = vsel %vm668, %v601, 0.0
  %v763 = vadd.f32 %v761, %v762
  %v764 = vsel %vm668, %v606, 0.0
  %v765 = vadd.f32 %v763, %v764
  %v766 = vsel %vm668, %v609, 0.0
  %v767 = vadd.f32 %v765, %v766
  %v768 = vsel %vm668, %v614, 0.0
  %v769 = vadd.f32 %v767, %v768
  %v770 = vsel %vm668, %v617, 0.0
  %v771 = vadd.f32 %v769, %v770
  %v772 = vsel %vm668, %v622, 0.0
  %v773 = vadd.f32 %v771, %v772
  %v774 = vsel %vm668, %v625, 0.0
  %v775 = vadd.f32 %v773, %v774
  %v776 = vsel %vm668, %v630, 0.0
  %v777 = vadd.f32 %v775, %v776
  %v778 = vsel %vm668, %v633, 0.0
  %v779 = vadd.f32 %v777, %v778
  %v780 = vsel %vm668, %v638, 0.0
  %v781 = vadd.f32 %v779, %v780
  %v782 = vsel %vm668, %v641, 0.0
  %v783 = vadd.f32 %v781, %v782
  %v784 = vsel %vm668, %v646, 0.0
  %v785 = vadd.f32 %v783, %v784
  %v786 = vsel %vm668, %v649, 0.0
  %v787 = vadd.f32 %v785, %v786
  %v788 = vsel %vm668, %v654, 0.0
  %v789 = vadd.f32 %v787, %v788
  %v790 = vsel %vm668, %v657, 0.0
  %v791 = vadd.f32 %v789, %v790
  %v792 = vsel %vm668, %v662, 0.0
  %v793 = vadd.f32 %v791, %v792
  %v794 = vsel %vm668, %v665, 0.0
  %v795 = vadd.f32 %v793, %v794
  %v796 = vrot.slane %v795, 4
  %v797 = vadd.f32 %v795, %v796
  %v798 = vrot.slane %v797, 2
  %v799 = vadd.f32 %v797, %v798
  %v800 = vrot.slane %v799, 1
  %v801 = vadd.f32 %v799, %v800
  %v802 = vrcp.pop 512.0
  %v803 = vmul.f32 %v801, %v802
  %v804 = vsub.f32 %v414, %v803
  %v805 = vsub.f32 %v417, %v803
  %v806 = vsub.f32 %v422, %v803
  %v807 = vsub.f32 %v425, %v803
  %v808 = vsub.f32 %v430, %v803
  %v809 = vsub.f32 %v433, %v803
  %v810 = vsub.f32 %v438, %v803
  %v811 = vsub.f32 %v441, %v803
  %v812 = vsub.f32 %v446, %v803
  %v813 = vsub.f32 %v449, %v803
  %v814 = vsub.f32 %v454, %v803
  %v815 = vsub.f32 %v457, %v803
  %v816 = vsub.f32 %v462, %v803
  %v817 = vsub.f32 %v465, %v803
  %v818 = vsub.f32 %v470, %v803
  %v819 = vsub.f32 %v473, %v803
  %v820 = vsub.f32 %v478, %v803
  %v821 = vsub.f32 %v481, %v803
  %v822 = vsub.f32 %v486, %v803
  %v823 = vsub.f32 %v489, %v803
  %v824 = vsub.f32 %v494, %v803
  %v825 = vsub.f32 %v497, %v803
  %v826 = vsub.f32 %v502, %v803
  %v827 = vsub.f32 %v505, %v803
  %v828 = vsub.f32 %v510, %v803
  %v829 = vsub.f32 %v513, %v803
  %v830 = vsub.f32 %v518, %v803
  %v831 = vsub.f32 %v521, %v803
  %v832 = vsub.f32 %v526, %v803
  %v833 = vsub.f32 %v529, %v803
  %v834 = vsub.f32 %v534, %v803
  %v835 = vsub.f32 %v537, %v803
  %v836 = vsub.f32 %v542, %v803
  %v837 = vsub.f32 %v545, %v803
  %v838 = vsub.f32 %v550, %v803
  %v839 = vsub.f32 %v553, %v803
  %v840 = vsub.f32 %v558, %v803
  %v841 = vsub.f32 %v561, %v803
  %v842 = vsub.f32 %v566, %v803
  %v843 = vsub.f32 %v569, %v803
  %v844 = vsub.f32 %v574, %v803
  %v845 = vsub.f32 %v577, %v803
  %v846 = vsub.f32 %v582, %v803
  %v847 = vsub.f32 %v585, %v803
  %v848 = vsub.f32 %v590, %v803
  %v849 = vsub.f32 %v593, %v803
  %v850 = vsub.f32 %v598, %v803
  %v851 = vsub.f32 %v601, %v803
  %v852 = vsub.f32 %v606, %v803
  %v853 = vsub.f32 %v609, %v803
  %v854 = vsub.f32 %v614, %v803
  %v855 = vsub.f32 %v617, %v803
  %v856 = vsub.f32 %v622, %v803
  %v857 = vsub.f32 %v625, %v803
  %v858 = vsub.f32 %v630, %v803
  %v859 = vsub.f32 %v633, %v803
  %v860 = vsub.f32 %v638, %v803
  %v861 = vsub.f32 %v641, %v803
  %v862 = vsub.f32 %v646, %v803
  %v863 = vsub.f32 %v649, %v803
  %v864 = vsub.f32 %v654, %v803
  %v865 = vsub.f32 %v657, %v803
  %v866 = vsub.f32 %v662, %v803
  %v867 = vsub.f32 %v665, %v803
  %v868 = vmul.f32 %v804, %v804
  %v869 = vmul.f32 %v805, %v805
  %v870 = vmul.f32 %v806, %v806
  %v871 = vmul.f32 %v807, %v807
  %v872 = vmul.f32 %v808, %v808
  %v873 = vmul.f32 %v809, %v809
  %v874 = vmul.f32 %v810, %v810
  %v875 = vmul.f32 %v811, %v811
  %v876 = vmul.f32 %v812, %v812
  %v877 = vmul.f32 %v813, %v813
  %v878 = vmul.f32 %v814, %v814
  %v879 = vmul.f32 %v815, %v815
  %v880 = vmul.f32 %v816, %v816
  %v881 = vmul.f32 %v817, %v817
  %v882 = vmul.f32 %v818, %v818
  %v883 = vmul.f32 %v819, %v819
  %v884 = vmul.f32 %v820, %v820
  %v885 = vmul.f32 %v821, %v821
  %v886 = vmul.f32 %v822, %v822
  %v887 = vmul.f32 %v823, %v823
  %v888 = vmul.f32 %v824, %v824
  %v889 = vmul.f32 %v825, %v825
  %v890 = vmul.f32 %v826, %v826
  %v891 = vmul.f32 %v827, %v827
  %v892 = vmul.f32 %v828, %v828
  %v893 = vmul.f32 %v829, %v829
  %v894 = vmul.f32 %v830, %v830
  %v895 = vmul.f32 %v831, %v831
  %v896 = vmul.f32 %v832, %v832
  %v897 = vmul.f32 %v833, %v833
  %v898 = vmul.f32 %v834, %v834
  %v899 = vmul.f32 %v835, %v835
  %v900 = vmul.f32 %v836, %v836
  %v901 = vmul.f32 %v837, %v837
  %v902 = vmul.f32 %v838, %v838
  %v903 = vmul.f32 %v839, %v839
  %v904 = vmul.f32 %v840, %v840
  %v905 = vmul.f32 %v841, %v841
  %v906 = vmul.f32 %v842, %v842
  %v907 = vmul.f32 %v843, %v843
  %v908 = vmul.f32 %v844, %v844
  %v909 = vmul.f32 %v845, %v845
  %v910 = vmul.f32 %v846, %v846
  %v911 = vmul.f32 %v847, %v847
  %v912 = vmul.f32 %v848, %v848
  %v913 = vmul.f32 %v849, %v849
  %v914 = vmul.f32 %v850, %v850
  %v915 = vmul.f32 %v851, %v851
  %v916 = vmul.f32 %v852, %v852
  %v917 = vmul.f32 %v853, %v853
  %v918 = vmul.f32 %v854, %v854
  %v919 = vmul.f32 %v855, %v855
  %v920 = vmul.f32 %v856, %v856
  %v921 = vmul.f32 %v857, %v857
  %v922 = vmul.f32 %v858, %v858
  %v923 = vmul.f32 %v859, %v859
  %v924 = vmul.f32 %v860, %v860
  %v925 = vmul.f32 %v861, %v861
  %v926 = vmul.f32 %v862, %v862
  %v927 = vmul.f32 %v863, %v863
  %v928 = vmul.f32 %v864, %v864
  %v929 = vmul.f32 %v865, %v865
  %v930 = vmul.f32 %v866, %v866
  %v931 = vmul.f32 %v867, %v867
  %v932 = vsel %vm668, %v868, 0.0
  %v933 = vsel %vm668, %v869, 0.0
  %v934 = vadd.f32 %v932, %v933
  %v935 = vsel %vm668, %v870, 0.0
  %v936 = vadd.f32 %v934, %v935
  %v937 = vsel %vm668, %v871, 0.0
  %v938 = vadd.f32 %v936, %v937
  %v939 = vsel %vm668, %v872, 0.0
  %v940 = vadd.f32 %v938, %v939
  %v941 = vsel %vm668, %v873, 0.0
  %v942 = vadd.f32 %v940, %v941
  %v943 = vsel %vm668, %v874, 0.0
  %v944 = vadd.f32 %v942, %v943
  %v945 = vsel %vm668, %v875, 0.0
  %v946 = vadd.f32 %v944, %v945
  %v947 = vsel %vm668, %v876, 0.0
  %v948 = vadd.f32 %v946, %v947
  %v949 = vsel %vm668, %v877, 0.0
  %v950 = vadd.f32 %v948, %v949
  %v951 = vsel %vm668, %v878, 0.0
  %v952 = vadd.f32 %v950, %v951
  %v953 = vsel %vm668, %v879, 0.0
  %v954 = vadd.f32 %v952, %v953
  %v955 = vsel %vm668, %v880, 0.0
  %v956 = vadd.f32 %v954, %v955
  %v957 = vsel %vm668, %v881, 0.0
  %v958 = vadd.f32 %v956, %v957
  %v959 = vsel %vm668, %v882, 0.0
  %v960 = vadd.f32 %v958, %v959
  %v961 = vsel %vm668, %v883, 0.0
  %v962 = vadd.f32 %v960, %v961
  %v963 = vsel %vm668, %v884, 0.0
  %v964 = vadd.f32 %v962, %v963
  %v965 = vsel %vm668, %v885, 0.0
  %v966 = vadd.f32 %v964, %v965
  %v967 = vsel %vm668, %v886, 0.0
  %v968 = vadd.f32 %v966, %v967
  %v969 = vsel %vm668, %v887, 0.0
  %v970 = vadd.f32 %v968, %v969
  %v971 = vsel %vm668, %v888, 0.0
  %v972 = vadd.f32 %v970, %v971
  %v973 = vsel %vm668, %v889, 0.0
  %v974 = vadd.f32 %v972, %v973
  %v975 = vsel %vm668, %v890, 0.0
  %v976 = vadd.f32 %v974, %v975
  %v977 = vsel %vm668, %v891, 0.0
  %v978 = vadd.f32 %v976, %v977
  %v979 = vsel %vm668, %v892, 0.0
  %v980 = vadd.f32 %v978, %v979
  %v981 = vsel %vm668, %v893, 0.0
  %v982 = vadd.f32 %v980, %v981
  %v983 = vsel %vm668, %v894, 0.0
  %v984 = vadd.f32 %v982, %v983
  %v985 = vsel %vm668, %v895, 0.0
  %v986 = vadd.f32 %v984, %v985
  %v987 = vsel %vm668, %v896, 0.0
  %v988 = vadd.f32 %v986, %v987
  %v989 = vsel %vm668, %v897, 0.0
  %v990 = vadd.f32 %v988, %v989
  %v991 = vsel %vm668, %v898, 0.0
  %v992 = vadd.f32 %v990, %v991
  %v993 = vsel %vm668, %v899, 0.0
  %v994 = vadd.f32 %v992, %v993
  %v995 = vsel %vm668, %v900, 0.0
  %v996 = vadd.f32 %v994, %v995
  %v997 = vsel %vm668, %v901, 0.0
  %v998 = vadd.f32 %v996, %v997
  %v999 = vsel %vm668, %v902, 0.0
  %v1000 = vadd.f32 %v998, %v999
  %v1001 = vsel %vm668, %v903, 0.0
  %v1002 = vadd.f32 %v1000, %v1001
  %v1003 = vsel %vm668, %v904, 0.0
  %v1004 = vadd.f32 %v1002, %v1003
  %v1005 = vsel %vm668, %v905, 0.0
  %v1006 = vadd.f32 %v1004, %v1005
  %v1007 = vsel %vm668, %v906, 0.0
  %v1008 = vadd.f32 %v1006, %v1007
  %v1009 = vsel %vm668, %v907, 0.0
  %v1010 = vadd.f32 %v1008, %v1009
  %v1011 = vsel %vm668, %v908, 0.0
  %v1012 = vadd.f32 %v1010, %v1011
  %v1013 = vsel %vm668, %v909, 0.0
  %v1014 = vadd.f32 %v1012, %v1013
  %v1015 = vsel %vm668, %v910, 0.0
  %v1016 = vadd.f32 %v1014, %v1015
  %v1017 = vsel %vm668, %v911, 0.0
  %v1018 = vadd.f32 %v1016, %v1017
  %v1019 = vsel %vm668, %v912, 0.0
  %v1020 = vadd.f32 %v1018, %v1019
  %v1021 = vsel %vm668, %v913, 0.0
  %v1022 = vadd.f32 %v1020, %v1021
  %v1023 = vsel %vm668, %v914, 0.0
  %v1024 = vadd.f32 %v1022, %v1023
  %v1025 = vsel %vm668, %v915, 0.0
  %v1026 = vadd.f32 %v1024, %v1025
  %v1027 = vsel %vm668, %v916, 0.0
  %v1028 = vadd.f32 %v1026, %v1027
  %v1029 = vsel %vm668, %v917, 0.0
  %v1030 = vadd.f32 %v1028, %v1029
  %v1031 = vsel %vm668, %v918, 0.0
  %v1032 = vadd.f32 %v1030, %v1031
  %v1033 = vsel %vm668, %v919, 0.0
  %v1034 = vadd.f32 %v1032, %v1033
  %v1035 = vsel %vm668, %v920, 0.0
  %v1036 = vadd.f32 %v1034, %v1035
  %v1037 = vsel %vm668, %v921, 0.0
  %v1038 = vadd.f32 %v1036, %v1037
  %v1039 = vsel %vm668, %v922, 0.0
  %v1040 = vadd.f32 %v1038, %v1039
  %v1041 = vsel %vm668, %v923, 0.0
  %v1042 = vadd.f32 %v1040, %v1041
  %v1043 = vsel %vm668, %v924, 0.0
  %v1044 = vadd.f32 %v1042, %v1043
  %v1045 = vsel %vm668, %v925, 0.0
  %v1046 = vadd.f32 %v1044, %v1045
  %v1047 = vsel %vm668, %v926, 0.0
  %v1048 = vadd.f32 %v1046, %v1047
  %v1049 = vsel %vm668, %v927, 0.0
  %v1050 = vadd.f32 %v1048, %v1049
  %v1051 = vsel %vm668, %v928, 0.0
  %v1052 = vadd.f32 %v1050, %v1051
  %v1053 = vsel %vm668, %v929, 0.0
  %v1054 = vadd.f32 %v1052, %v1053
  %v1055 = vsel %vm668, %v930, 0.0
  %v1056 = vadd.f32 %v1054, %v1055
  %v1057 = vsel %vm668, %v931, 0.0
  %v1058 = vadd.f32 %v1056, %v1057
  %v1059 = vrot.slane %v1058, 4
  %v1060 = vadd.f32 %v1058, %v1059
  %v1061 = vrot.slane %v1060, 2
  %v1062 = vadd.f32 %v1060, %v1061
  %v1063 = vrot.slane %v1062, 1
  %v1064 = vadd.f32 %v1062, %v1063
  %v1065 = vmul.f32 %v1064, %v802
  %v1066 = vld [vmem:[%s2] sm:$0x1]
  %v1067 = vadd.f32 %v1065, 1e-05
  %v1068 = vrsqrt.pop %v1067
  %v1069 = vmul.f32 %v1066, %v1068
  %v1070 = vld [vmem:[%s3] sm:$0x1]
  %v1071 = vmul.f32 %v803, %v1069
  %v1072 = vsub.f32 %v1070, %v1071
  %v1074 = vlaneseq
  %v1075 = vshrl.u32 %v1074, 7
  %v1076 = vsub.s32 0, %v1075
  %v1077 = vrot.slane %v1069, %v1076
  %v1079 = vmul.f32 %v414, %v1077
  %v1080 = vmul.f32 %v417, %v1077
  %v1081 = vmul.f32 %v422, %v1077
  %v1082 = vmul.f32 %v425, %v1077
  %v1083 = vmul.f32 %v430, %v1077
  %v1084 = vmul.f32 %v433, %v1077
  %v1085 = vmul.f32 %v438, %v1077
  %v1086 = vmul.f32 %v441, %v1077
  %v1087 = vmul.f32 %v446, %v1077
  %v1088 = vmul.f32 %v449, %v1077
  %v1089 = vmul.f32 %v454, %v1077
  %v1090 = vmul.f32 %v457, %v1077
  %v1091 = vmul.f32 %v462, %v1077
  %v1092 = vmul.f32 %v465, %v1077
  %v1093 = vmul.f32 %v470, %v1077
  %v1094 = vmul.f32 %v473, %v1077
  %v1095 = vmul.f32 %v478, %v1077
  %v1096 = vmul.f32 %v481, %v1077
  %v1097 = vmul.f32 %v486, %v1077
  %v1098 = vmul.f32 %v489, %v1077
  %v1099 = vmul.f32 %v494, %v1077
  %v1100 = vmul.f32 %v497, %v1077
  %v1101 = vmul.f32 %v502, %v1077
  %v1102 = vmul.f32 %v505, %v1077
  %v1103 = vmul.f32 %v510, %v1077
  %v1104 = vmul.f32 %v513, %v1077
  %v1105 = vmul.f32 %v518, %v1077
  %v1106 = vmul.f32 %v521, %v1077
  %v1107 = vmul.f32 %v526, %v1077
  %v1108 = vmul.f32 %v529, %v1077
  %v1109 = vmul.f32 %v534, %v1077
  %v1110 = vmul.f32 %v537, %v1077
  %v1111 = vmul.f32 %v542, %v1077
  %v1112 = vmul.f32 %v545, %v1077
  %v1113 = vmul.f32 %v550, %v1077
  %v1114 = vmul.f32 %v553, %v1077
  %v1115 = vmul.f32 %v558, %v1077
  %v1116 = vmul.f32 %v561, %v1077
  %v1117 = vmul.f32 %v566, %v1077
  %v1118 = vmul.f32 %v569, %v1077
  %v1119 = vmul.f32 %v574, %v1077
  %v1120 = vmul.f32 %v577, %v1077
  %v1121 = vmul.f32 %v582, %v1077
  %v1122 = vmul.f32 %v585, %v1077
  %v1123 = vmul.f32 %v590, %v1077
  %v1124 = vmul.f32 %v593, %v1077
  %v1125 = vmul.f32 %v598, %v1077
  %v1126 = vmul.f32 %v601, %v1077
  %v1127 = vmul.f32 %v606, %v1077
  %v1128 = vmul.f32 %v609, %v1077
  %v1129 = vmul.f32 %v614, %v1077
  %v1130 = vmul.f32 %v617, %v1077
  %v1131 = vmul.f32 %v622, %v1077
  %v1132 = vmul.f32 %v625, %v1077
  %v1133 = vmul.f32 %v630, %v1077
  %v1134 = vmul.f32 %v633, %v1077
  %v1135 = vmul.f32 %v638, %v1077
  %v1136 = vmul.f32 %v641, %v1077
  %v1137 = vmul.f32 %v646, %v1077
  %v1138 = vmul.f32 %v649, %v1077
  %v1139 = vmul.f32 %v654, %v1077
  %v1140 = vmul.f32 %v657, %v1077
  %v1141 = vmul.f32 %v662, %v1077
  %v1142 = vmul.f32 %v665, %v1077
  %v1144 = vlaneseq
  %v1145 = vshrl.u32 %v1144, 7
  %v1146 = vsub.s32 0, %v1145
  %v1147 = vrot.slane %v1072, %v1146
  %v1149 = vadd.f32 %v1079, %v1147
  %v1150 = vadd.f32 %v1080, %v1147
  %v1151 = vadd.f32 %v1081, %v1147
  %v1152 = vadd.f32 %v1082, %v1147
  %v1153 = vadd.f32 %v1083, %v1147
  %v1154 = vadd.f32 %v1084, %v1147
  %v1155 = vadd.f32 %v1085, %v1147
  %v1156 = vadd.f32 %v1086, %v1147
  %v1157 = vadd.f32 %v1087, %v1147
  %v1158 = vadd.f32 %v1088, %v1147
  %v1159 = vadd.f32 %v1089, %v1147
  %v1160 = vadd.f32 %v1090, %v1147
  %v1161 = vadd.f32 %v1091, %v1147
  %v1162 = vadd.f32 %v1092, %v1147
  %v1163 = vadd.f32 %v1093, %v1147
  %v1164 = vadd.f32 %v1094, %v1147
  %v1165 = vadd.f32 %v1095, %v1147
  %v1166 = vadd.f32 %v1096, %v1147
  %v1167 = vadd.f32 %v1097, %v1147
  %v1168 = vadd.f32 %v1098, %v1147
  %v1169 = vadd.f32 %v1099, %v1147
  %v1170 = vadd.f32 %v1100, %v1147
  %v1171 = vadd.f32 %v1101, %v1147
  %v1172 = vadd.f32 %v1102, %v1147
  %v1173 = vadd.f32 %v1103, %v1147
  %v1174 = vadd.f32 %v1104, %v1147
  %v1175 = vadd.f32 %v1105, %v1147
  %v1176 = vadd.f32 %v1106, %v1147
  %v1177 = vadd.f32 %v1107, %v1147
  %v1178 = vadd.f32 %v1108, %v1147
  %v1179 = vadd.f32 %v1109, %v1147
  %v1180 = vadd.f32 %v1110, %v1147
  %v1181 = vadd.f32 %v1111, %v1147
  %v1182 = vadd.f32 %v1112, %v1147
  %v1183 = vadd.f32 %v1113, %v1147
  %v1184 = vadd.f32 %v1114, %v1147
  %v1185 = vadd.f32 %v1115, %v1147
  %v1186 = vadd.f32 %v1116, %v1147
  %v1187 = vadd.f32 %v1117, %v1147
  %v1188 = vadd.f32 %v1118, %v1147
  %v1189 = vadd.f32 %v1119, %v1147
  %v1190 = vadd.f32 %v1120, %v1147
  %v1191 = vadd.f32 %v1121, %v1147
  %v1192 = vadd.f32 %v1122, %v1147
  %v1193 = vadd.f32 %v1123, %v1147
  %v1194 = vadd.f32 %v1124, %v1147
  %v1195 = vadd.f32 %v1125, %v1147
  %v1196 = vadd.f32 %v1126, %v1147
  %v1197 = vadd.f32 %v1127, %v1147
  %v1198 = vadd.f32 %v1128, %v1147
  %v1199 = vadd.f32 %v1129, %v1147
  %v1200 = vadd.f32 %v1130, %v1147
  %v1201 = vadd.f32 %v1131, %v1147
  %v1202 = vadd.f32 %v1132, %v1147
  %v1203 = vadd.f32 %v1133, %v1147
  %v1204 = vadd.f32 %v1134, %v1147
  %v1205 = vadd.f32 %v1135, %v1147
  %v1206 = vadd.f32 %v1136, %v1147
  %v1207 = vadd.f32 %v1137, %v1147
  %v1208 = vadd.f32 %v1138, %v1147
  %v1209 = vadd.f32 %v1139, %v1147
  %v1210 = vadd.f32 %v1140, %v1147
  %v1211 = vadd.f32 %v1141, %v1147
  %v1212 = vadd.f32 %v1142, %v1147
  %1213 = vst.msk [vmem:[%s4] sm:$0xff] %vm668, %v1149
  %1214 = vst.msk [vmem:[%s4 + $0x8] sm:$0xff] %vm668, %v1150
  %1215 = vst.msk [vmem:[%s4 + $0x10] sm:$0xff] %vm668, %v1151
  %1216 = vst.msk [vmem:[%s4 + $0x18] sm:$0xff] %vm668, %v1152
  %1217 = vst.msk [vmem:[%s4 + $0x20] sm:$0xff] %vm668, %v1153
  %1218 = vst.msk [vmem:[%s4 + $0x28] sm:$0xff] %vm668, %v1154
  %1219 = vst.msk [vmem:[%s4 + $0x30] sm:$0xff] %vm668, %v1155
  %1220 = vst.msk [vmem:[%s4 + $0x38] sm:$0xff] %vm668, %v1156
  %1221 = vst.msk [vmem:[%s4 + $0x40] sm:$0xff] %vm668, %v1157
  %1222 = vst.msk [vmem:[%s4 + $0x48] sm:$0xff] %vm668, %v1158
  %1223 = vst.msk [vmem:[%s4 + $0x50] sm:$0xff] %vm668, %v1159
  %1224 = vst.msk [vmem:[%s4 + $0x58] sm:$0xff] %vm668, %v1160
  %1225 = vst.msk [vmem:[%s4 + $0x60] sm:$0xff] %vm668, %v1161
  %1226 = vst.msk [vmem:[%s4 + $0x68] sm:$0xff] %vm668, %v1162
  %1227 = vst.msk [vmem:[%s4 + $0x70] sm:$0xff] %vm668, %v1163
  %1228 = vst.msk [vmem:[%s4 + $0x78] sm:$0xff] %vm668, %v1164
  %1229 = vst.msk [vmem:[%s4 + $0x80] sm:$0xff] %vm668, %v1165
  %1230 = vst.msk [vmem:[%s4 + $0x88] sm:$0xff] %vm668, %v1166
  %1231 = vst.msk [vmem:[%s4 + $0x90] sm:$0xff] %vm668, %v1167
  %1232 = vst.msk [vmem:[%s4 + $0x98] sm:$0xff] %vm668, %v1168
  %1233 = vst.msk [vmem:[%s4 + $0xa0] sm:$0xff] %vm668, %v1169
  %1234 = vst.msk [vmem:[%s4 + $0xa8] sm:$0xff] %vm668, %v1170
  %1235 = vst.msk [vmem:[%s4 + $0xb0] sm:$0xff] %vm668, %v1171
  %1236 = vst.msk [vmem:[%s4 + $0xb8] sm:$0xff] %vm668, %v1172
  %1237 = vst.msk [vmem:[%s4 + $0xc0] sm:$0xff] %vm668, %v1173
  %1238 = vst.msk [vmem:[%s4 + $0xc8] sm:$0xff] %vm668, %v1174
  %1239 = vst.msk [vmem:[%s4 + $0xd0] sm:$0xff] %vm668, %v1175
  %1240 = vst.msk [vmem:[%s4 + $0xd8] sm:$0xff] %vm668, %v1176
  %1241 = vst.msk [vmem:[%s4 + $0xe0] sm:$0xff] %vm668, %v1177
  %1242 = vst.msk [vmem:[%s4 + $0xe8] sm:$0xff] %vm668, %v1178
  %1243 = vst.msk [vmem:[%s4 + $0xf0] sm:$0xff] %vm668, %v1179
  %1244 = vst.msk [vmem:[%s4 + $0xf8] sm:$0xff] %vm668, %v1180
  %1245 = vst.msk [vmem:[%s4 + $0x100] sm:$0xff] %vm668, %v1181
  %1246 = vst.msk [vmem:[%s4 + $0x108] sm:$0xff] %vm668, %v1182
  %1247 = vst.msk [vmem:[%s4 + $0x110] sm:$0xff] %vm668, %v1183
  %1248 = vst.msk [vmem:[%s4 + $0x118] sm:$0xff] %vm668, %v1184
  %1249 = vst.msk [vmem:[%s4 + $0x120] sm:$0xff] %vm668, %v1185
  %1250 = vst.msk [vmem:[%s4 + $0x128] sm:$0xff] %vm668, %v1186
  %1251 = vst.msk [vmem:[%s4 + $0x130] sm:$0xff] %vm668, %v1187
  %1252 = vst.msk [vmem:[%s4 + $0x138] sm:$0xff] %vm668, %v1188
  %1253 = vst.msk [vmem:[%s4 + $0x140] sm:$0xff] %vm668, %v1189
  %1254 = vst.msk [vmem:[%s4 + $0x148] sm:$0xff] %vm668, %v1190
  %1255 = vst.msk [vmem:[%s4 + $0x150] sm:$0xff] %vm668, %v1191
  %1256 = vst.msk [vmem:[%s4 + $0x158] sm:$0xff] %vm668, %v1192
  %1257 = vst.msk [vmem:[%s4 + $0x160] sm:$0xff] %vm668, %v1193
  %1258 = vst.msk [vmem:[%s4 + $0x168] sm:$0xff] %vm668, %v1194
  %1259 = vst.msk [vmem:[%s4 + $0x170] sm:$0xff] %vm668, %v1195
  %1260 = vst.msk [vmem:[%s4 + $0x178] sm:$0xff] %vm668, %v1196
  %1261 = vst.msk [vmem:[%s4 + $0x180] sm:$0xff] %vm668, %v1197
  %1262 = vst.msk [vmem:[%s4 + $0x188] sm:$0xff] %vm668, %v1198
  %1263 = vst.msk [vmem:[%s4 + $0x190] sm:$0xff] %vm668, %v1199
  %1264 = vst.msk [vmem:[%s4 + $0x198] sm:$0xff] %vm668, %v1200
  %1265 = vst.msk [vmem:[%s4 + $0x1a0] sm:$0xff] %vm668, %v1201
  %1266 = vst.msk [vmem:[%s4 + $0x1a8] sm:$0xff] %vm668, %v1202
  %1267 = vst.msk [vmem:[%s4 + $0x1b0] sm:$0xff] %vm668, %v1203
  %1268 = vst.msk [vmem:[%s4 + $0x1b8] sm:$0xff] %vm668, %v1204
  %1269 = vst.msk [vmem:[%s4 + $0x1c0] sm:$0xff] %vm668, %v1205
  %1270 = vst.msk [vmem:[%s4 + $0x1c8] sm:$0xff] %vm668, %v1206
  %1271 = vst.msk [vmem:[%s4 + $0x1d0] sm:$0xff] %vm668, %v1207
  %1272 = vst.msk [vmem:[%s4 + $0x1d8] sm:$0xff] %vm668, %v1208
  %1273 = vst.msk [vmem:[%s4 + $0x1e0] sm:$0xff] %vm668, %v1209
  %1274 = vst.msk [vmem:[%s4 + $0x1e8] sm:$0xff] %vm668, %v1210
  %1275 = vst.msk [vmem:[%s4 + $0x1f0] sm:$0xff] %vm668, %v1211
  %1276 = vst.msk [vmem:[%s4 + $0x1f8] sm:$0xff] %vm668, %v1212
  // Predicated region
  $region18: #{_lambda_.4} parent=0 // pred_check
    _
  $region19: #{_lambda_.4} parent=0 // pred_check_branch
    %1278 = sbr.rel (0) target = $region21
  $region20: #{_lambda_.4} parent=0 // pred_region
    _
  $region21: #{_lambda_.4} parent=0 // pred_fallthru
    _
  // Predicated region
  $region22: #{_lambda_.4} parent=0 // pred_check
    _
  $region23: #{_lambda_.4} parent=0 // pred_check_branch
    %1280 = sbr.rel (0) target = $region25
  $region24: #{_lambda_.4} parent=0 // pred_region
    _
  $region25: #{_lambda_.4} parent=0 // pred_fallthru
    _

// kernel: _lambda_.5
$region0: #{_lambda_.5}
  #allocation0 [shape = 'u32[]', space=smem, size = 0x4, offset = 0x4, fixed_abs, tag = 'smem constant byte address 0x4 - core index']
  #allocation1 [shape = 'u32[144,128]{1,0:T(1,128)}', space=vmem, size = 0x12000, scoped, tag = 'internal scratch']
  %s0 = inlined_call_operand.vmem [shape: bf16[128,36], index: 0, kind: input, shape index: {}]
  %s1 = inlined_call_operand.vmem [shape: bf16[36,8], index: 1, kind: input, shape index: {}]
  %s2 = inlined_call_operand.vmem [shape: f32[1,8], index: 2, kind: input, shape index: {}]
  %s3 = inlined_call_operand.vmem [shape: f32[1,8], index: 3, kind: input, shape index: {}]
  %s4 = inlined_call_operand.vmem [shape: f32[128,8], index: 4, kind: input, shape index: {}]
  %s5 = inlined_call_operand.vmem [shape: f32[128,8], index: 5, kind: output, shape index: {}]
  %s6 = sld [smem:[#allocation0]]
  $region30: #{_lambda_.5} parent=0
    _
  %s8 = ssub.s32 1, %s6
  %s9 = scalar_select 0, %s8, %s6
  // Predicated region
  $region2: #{_lambda_.5} parent=0 // pred_check
    _
  $region3: #{_lambda_.5} parent=0 // pred_check_branch
    %11 = sbr.rel (0) target = $region5
  $region4: #{_lambda_.5} parent=0 // pred_region
    _
  $region5: #{_lambda_.5} parent=0 // pred_fallthru
    _
  // Predicated region
  $region6: #{_lambda_.5} parent=0 // pred_check
    _
  $region7: #{_lambda_.5} parent=0 // pred_check_branch
    %13 = sbr.rel (0) target = $region9
  $region8: #{_lambda_.5} parent=0 // pred_region
    _
  $region9: #{_lambda_.5} parent=0 // pred_fallthru
    _
  // Predicated region
  $region10: #{_lambda_.5} parent=0 // pred_check
    _
  $region11: #{_lambda_.5} parent=0 // pred_check_branch
    %15 = sbr.rel (0) target = $region13
  $region12: #{_lambda_.5} parent=0 // pred_region
    _
  $region13: #{_lambda_.5} parent=0 // pred_fallthru
    _
  // Predicated region
  $region14: #{_lambda_.5} parent=0 // pred_check
    _
  $region15: #{_lambda_.5} parent=0 // pred_check_branch
    %17 = sbr.rel (0) target = $region17
  $region16: #{_lambda_.5} parent=0 // pred_region
    _
  $region17: #{_lambda_.5} parent=0 // pred_fallthru
    _
  // Predicated region
  $region18: #{_lambda_.5} parent=0 // pred_check
    _
  $region19: #{_lambda_.5} parent=0 // pred_check_branch
    %19 = sbr.rel (0) target = $region21
  $region20: #{_lambda_.5} parent=0 // pred_region
    _
  $region21: #{_lambda_.5} parent=0 // pred_fallthru
    _
  %v21 = vld [vmem:[%s0] sm:$0xf]
  %v22 = vld [vmem:[%s0 + $0x4] sm:$0xf]
  %v23 = vld [vmem:[%s0 + $0x8] sm:$0xf]
  %v24 = vld [vmem:[%s0 + $0xc] sm:$0xf]
  %v25 = vld [vmem:[%s0 + $0x10] sm:$0xf]
  %v26 = vld [vmem:[%s0 + $0x14] sm:$0xf]
  %v27 = vld [vmem:[%s0 + $0x18] sm:$0xf]
  %v28 = vld [vmem:[%s0 + $0x1c] sm:$0xf]
  %v29 = vld [vmem:[%s0 + $0x20] sm:$0xf]
  %v30 = vld [vmem:[%s0 + $0x24] sm:$0xf]
  %v31 = vld [vmem:[%s0 + $0x28] sm:$0xf]
  %v32 = vld [vmem:[%s0 + $0x2c] sm:$0xf]
  %v33 = vld [vmem:[%s0 + $0x30] sm:$0xf]
  %v34 = vld [vmem:[%s0 + $0x34] sm:$0xf]
  %v35 = vld [vmem:[%s0 + $0x38] sm:$0xf]
  %v36 = vld [vmem:[%s0 + $0x3c] sm:$0xf]
  %v37 = vld [vmem:[%s1] sm:$0xf]
  %v38 = vld [vmem:[%s1 + $0x4] sm:$0xf]
  %v39 = vld [vmem:[%s1 + $0x8] sm:$0xf]
  %v40 = vld [vmem:[%s1 + $0xc] sm:$0xf]
  %v41 = vld [vmem:[%s1 + $0x10] sm:$0x3]
  %v58 = vunpack.c.l.b16 %v21
  %v59 = vunpack.c.l.b16 %v22
  %v60 = vunpack.c.l.b16 %v23
  %v61 = vunpack.c.l.b16 %v24
  %v62 = vunpack.c.l.b16 %v25
  %v63 = vunpack.c.l.b16 %v26
  %v64 = vunpack.c.l.b16 %v27
  %v65 = vunpack.c.l.b16 %v28
  %v66 = vunpack.c.l.b16 %v29
  %v67 = vunpack.c.l.b16 %v30
  %v68 = vunpack.c.l.b16 %v31
  %v69 = vunpack.c.l.b16 %v32
  %v70 = vunpack.c.l.b16 %v33
  %v71 = vunpack.c.l.b16 %v34
  %v72 = vunpack.c.l.b16 %v35
  %v73 = vunpack.c.l.b16 %v36
  %v74 = vpack.c.b16 %v59, %v58
  %v75 = vpack.c.b16 %v61, %v60
  %v76 = vpack.c.b16 %v63, %v62
  %v77 = vpack.c.b16 %v65, %v64
  %v78 = vpack.c.b16 %v67, %v66
  %v79 = vpack.c.b16 %v69, %v68
  %v80 = vpack.c.b16 %v71, %v70
  %v81 = vpack.c.b16 %v73, %v72
  %v87 = vunpack.c.l.b16 %v37
  %v88 = vunpack.c.l.b16 %v38
  %v89 = vunpack.c.l.b16 %v39
  %v90 = vunpack.c.l.b16 %v40
  %v91 = vunpack.c.l.b16 %v41
  %v92 = vpack.c.b16 %v88, %v87
  %v93 = vpack.c.b16 %v90, %v89
  %v94 = vpack.c.b16 %v91, %v91
  %vm97 = vcmask 293888
  %v99 = vsel %vm97, %v74, 0
  %v102 = vsel %vm97, %v75, 0
  %v105 = vsel %vm97, %v76, 0
  %v108 = vsel %vm97, %v77, 0
  %v111 = vsel %vm97, %v78, 0
  %v114 = vsel %vm97, %v79, 0
  %v117 = vsel %vm97, %v80, 0
  %v120 = vsel %vm97, %v81, 0
  %vm122 = vcmask 1041408
  %v124 = vsel %vm122, %v94, 0
  %126 = vmatprep.subr.bf16.mxu0 0
  %127 = vmatpush1.bf16.msra.mxu0 0
  %128 = vmatprep.subr.bf16.mxu0 0
  %129 = vmatpush1.bf16.msra.mxu0 0
  %130 = vmatprep.subr.bf16.mxu0 0
  %131 = vmatpush1.bf16.msra.mxu0 0
  %132 = vmatprep.subr.bf16.mxu0 0
  %133 = vmatpush1.bf16.msra.mxu0 0
  %134 = vmatprep.subr.bf16.mxu0 0
  %135 = vmatpush1.bf16.msra.mxu0 0
  %136 = vmatprep.subr.bf16.mxu0 0
  %137 = vmatpush1.bf16.msra.mxu0 %v124
  %138 = vmatprep.subr.bf16.mxu0 0
  %139 = vmatpush1.bf16.msra.mxu0 %v93
  %140 = vmatprep.subr.bf16.mxu0 0
  %141 = vmatpush1.bf16.msra.mxu0 %v92
  %142 = vmatprep.subr.bf16.mxu0 0
  %143 = vmatpush2.bf16.msra.mxu0 0
  %144 = vmatprep.subr.bf16.mxu0 0
  %145 = vmatpush2.bf16.msra.mxu0 0
  %146 = vmatprep.subr.bf16.mxu0 0
  %147 = vmatpush2.bf16.msra.mxu0 0
  %148 = vmatprep.subr.bf16.mxu0 0
  %149 = vmatpush2.bf16.msra.mxu0 0
  %150 = vmatprep.subr.bf16.mxu0 0
  %151 = vmatpush2.bf16.msra.mxu0 0
  %152 = vmatprep.subr.bf16.mxu0 0
  %153 = vmatpush2.bf16.msra.mxu0 0
  %154 = vmatprep.subr.bf16.mxu0 0
  %155 = vmatpush2.bf16.msra.mxu0 0
  %156 = vmatprep.subr.bf16.mxu0 0
  %157 = vmatpush2.bf16.msra.mxu0 0
  %158 = vmatprep.mubr.bf16.mxu0 0
  %159 = vmatmul.mubr.bf16.gmra.mxu0 %v99
  %v160 = vpop.f32.mrf.mxu0
  %v161 = vadd.f32 0.0, %v160
  %v162 = vpop.f32.mrf.mxu0
  %v163 = vpop.f32.mrf.mxu0
  %v164 = vadd.f32 0.0, %v163
  %v165 = vpop.f32.mrf.mxu0
  %166 = vmatprep.mubr.bf16.mxu0 0
  %167 = vmatmul.mubr.bf16.gmra.mxu0 %v102
  %v168 = vpop.f32.mrf.mxu0
  %v169 = vadd.f32 0.0, %v168
  %v170 = vpop.f32.mrf.mxu0
  %v171 = vpop.f32.mrf.mxu0
  %v172 = vadd.f32 0.0, %v171
  %v173 = vpop.f32.mrf.mxu0
  %174 = vmatprep.mubr.bf16.mxu0 0
  %175 = vmatmul.mubr.bf16.gmra.mxu0 %v105
  %v176 = vpop.f32.mrf.mxu0
  %v177 = vadd.f32 0.0, %v176
  %v178 = vpop.f32.mrf.mxu0
  %v179 = vpop.f32.mrf.mxu0
  %v180 = vadd.f32 0.0, %v179
  %v181 = vpop.f32.mrf.mxu0
  %182 = vmatprep.mubr.bf16.mxu0 0
  %183 = vmatmul.mubr.bf16.gmra.mxu0 %v108
  %v184 = vpop.f32.mrf.mxu0
  %v185 = vadd.f32 0.0, %v184
  %v186 = vpop.f32.mrf.mxu0
  %v187 = vpop.f32.mrf.mxu0
  %v188 = vadd.f32 0.0, %v187
  %v189 = vpop.f32.mrf.mxu0
  %190 = vmatprep.mubr.bf16.mxu0 0
  %191 = vmatmul.mubr.bf16.gmra.mxu0 %v111
  %v192 = vpop.f32.mrf.mxu0
  %v193 = vadd.f32 0.0, %v192
  %v194 = vpop.f32.mrf.mxu0
  %v195 = vpop.f32.mrf.mxu0
  %v196 = vadd.f32 0.0, %v195
  %v197 = vpop.f32.mrf.mxu0
  %198 = vmatprep.mubr.bf16.mxu0 0
  %199 = vmatmul.mubr.bf16.gmra.mxu0 %v114
  %v200 = vpop.f32.mrf.mxu0
  %v201 = vadd.f32 0.0, %v200
  %v202 = vpop.f32.mrf.mxu0
  %v203 = vpop.f32.mrf.mxu0
  %v204 = vadd.f32 0.0, %v203
  %v205 = vpop.f32.mrf.mxu0
  %206 = vmatprep.mubr.bf16.mxu0 0
  %207 = vmatmul.mubr.bf16.gmra.mxu0 %v117
  %v208 = vpop.f32.mrf.mxu0
  %v209 = vadd.f32 0.0, %v208
  %v210 = vpop.f32.mrf.mxu0
  %v211 = vpop.f32.mrf.mxu0
  %v212 = vadd.f32 0.0, %v211
  %v213 = vpop.f32.mrf.mxu0
  %214 = vmatprep.mubr.bf16.mxu0 0
  %215 = vmatmul.mubr.bf16.gmra.mxu0 %v120
  %v216 = vpop.f32.mrf.mxu0
  %v217 = vadd.f32 0.0, %v216
  %v218 = vpop.f32.mrf.mxu0
  %v219 = vpop.f32.mrf.mxu0
  %v220 = vadd.f32 0.0, %v219
  %v221 = vpop.f32.mrf.mxu0
  %222 = vdwg.mxu0
  %vm223 = vcmask 64512
  %v224 = vsel %vm223, %v161, 0.0
  %v225 = vsel %vm223, %v164, 0.0
  %v226 = vadd.f32 %v224, %v225
  %v227 = vsel %vm223, %v169, 0.0
  %v228 = vadd.f32 %v226, %v227
  %v229 = vsel %vm223, %v172, 0.0
  %v230 = vadd.f32 %v228, %v229
  %v231 = vsel %vm223, %v177, 0.0
  %v232 = vadd.f32 %v230, %v231
  %v233 = vsel %vm223, %v180, 0.0
  %v234 = vadd.f32 %v232, %v233
  %v235 = vsel %vm223, %v185, 0.0
  %v236 = vadd.f32 %v234, %v235
  %v237 = vsel %vm223, %v188, 0.0
  %v238 = vadd.f32 %v236, %v237
  %v239 = vsel %vm223, %v193, 0.0
  %v240 = vadd.f32 %v238, %v239
  %v241 = vsel %vm223, %v196, 0.0
  %v242 = vadd.f32 %v240, %v241
  %v243 = vsel %vm223, %v201, 0.0
  %v244 = vadd.f32 %v242, %v243
  %v245 = vsel %vm223, %v204, 0.0
  %v246 = vadd.f32 %v244, %v245
  %v247 = vsel %vm223, %v209, 0.0
  %v248 = vadd.f32 %v246, %v247
  %v249 = vsel %vm223, %v212, 0.0
  %v250 = vadd.f32 %v248, %v249
  %v251 = vsel %vm223, %v217, 0.0
  %v252 = vadd.f32 %v250, %v251
  %v253 = vsel %vm223, %v220, 0.0
  %v254 = vadd.f32 %v252, %v253
  %v255 = vrot.slane %v254, 4
  %v256 = vadd.f32 %v254, %v255
  %v257 = vrot.slane %v256, 2
  %v258 = vadd.f32 %v256, %v257
  %v259 = vrot.slane %v258, 1
  %v260 = vadd.f32 %v258, %v259
  %v261 = vrcp.pop 128.0
  %v262 = vmul.f32 %v260, %v261
  %v263 = vsub.f32 %v161, %v262
  %v264 = vsub.f32 %v164, %v262
  %v265 = vsub.f32 %v169, %v262
  %v266 = vsub.f32 %v172, %v262
  %v267 = vsub.f32 %v177, %v262
  %v268 = vsub.f32 %v180, %v262
  %v269 = vsub.f32 %v185, %v262
  %v270 = vsub.f32 %v188, %v262
  %v271 = vsub.f32 %v193, %v262
  %v272 = vsub.f32 %v196, %v262
  %v273 = vsub.f32 %v201, %v262
  %v274 = vsub.f32 %v204, %v262
  %v275 = vsub.f32 %v209, %v262
  %v276 = vsub.f32 %v212, %v262
  %v277 = vsub.f32 %v217, %v262
  %v278 = vsub.f32 %v220, %v262
  %v279 = vmul.f32 %v263, %v263
  %v280 = vmul.f32 %v264, %v264
  %v281 = vmul.f32 %v265, %v265
  %v282 = vmul.f32 %v266, %v266
  %v283 = vmul.f32 %v267, %v267
  %v284 = vmul.f32 %v268, %v268
  %v285 = vmul.f32 %v269, %v269
  %v286 = vmul.f32 %v270, %v270
  %v287 = vmul.f32 %v271, %v271
  %v288 = vmul.f32 %v272, %v272
  %v289 = vmul.f32 %v273, %v273
  %v290 = vmul.f32 %v274, %v274
  %v291 = vmul.f32 %v275, %v275
  %v292 = vmul.f32 %v276, %v276
  %v293 = vmul.f32 %v277, %v277
  %v294 = vmul.f32 %v278, %v278
  %v295 = vsel %vm223, %v279, 0.0
  %v296 = vsel %vm223, %v280, 0.0
  %v297 = vadd.f32 %v295, %v296
  %v298 = vsel %vm223, %v281, 0.0
  %v299 = vadd.f32 %v297, %v298
  %v300 = vsel %vm223, %v282, 0.0
  %v301 = vadd.f32 %v299, %v300
  %v302 = vsel %vm223, %v283, 0.0
  %v303 = vadd.f32 %v301, %v302
  %v304 = vsel %vm223, %v284, 0.0
  %v305 = vadd.f32 %v303, %v304
  %v306 = vsel %vm223, %v285, 0.0
  %v307 = vadd.f32 %v305, %v306
  %v308 = vsel %vm223, %v286, 0.0
  %v309 = vadd.f32 %v307, %v308
  %v310 = vsel %vm223, %v287, 0.0
  %v311 = vadd.f32 %v309, %v310
  %v312 = vsel %vm223, %v288, 0.0
  %v313 = vadd.f32 %v311, %v312
  %v314 = vsel %vm223, %v289, 0.0
  %v315 = vadd.f32 %v313, %v314
  %v316 = vsel %vm223, %v290, 0.0
  %v317 = vadd.f32 %v315, %v316
  %v318 = vsel %vm223, %v291, 0.0
  %v319 = vadd.f32 %v317, %v318
  %v320 = vsel %vm223, %v292, 0.0
  %v321 = vadd.f32 %v319, %v320
  %v322 = vsel %vm223, %v293, 0.0
  %v323 = vadd.f32 %v321, %v322
  %v324 = vsel %vm223, %v294, 0.0
  %v325 = vadd.f32 %v323, %v324
  %v326 = vrot.slane %v325, 4
  %v327 = vadd.f32 %v325, %v326
  %v328 = vrot.slane %v327, 2
  %v329 = vadd.f32 %v327, %v328
  %v330 = vrot.slane %v329, 1
  %v331 = vadd.f32 %v329, %v330
  %v332 = vmul.f32 %v331, %v261
  %v333 = vld [vmem:[%s2] sm:$0x1]
  %v334 = vadd.f32 %v332, 1e-05
  %v335 = vrsqrt.pop %v334
  %v336 = vmul.f32 %v333, %v335
  %v337 = vld [vmem:[%s3] sm:$0x1]
  %v338 = vmul.f32 %v262, %v336
  %v339 = vsub.f32 %v337, %v338
  %v340 = vld [vmem:[%s4] sm:$0xff]
  %v341 = vld [vmem:[%s4 + $0x8] sm:$0xff]
  %v342 = vld [vmem:[%s4 + $0x10] sm:$0xff]
  %v343 = vld [vmem:[%s4 + $0x18] sm:$0xff]
  %v344 = vld [vmem:[%s4 + $0x20] sm:$0xff]
  %v345 = vld [vmem:[%s4 + $0x28] sm:$0xff]
  %v346 = vld [vmem:[%s4 + $0x30] sm:$0xff]
  %v347 = vld [vmem:[%s4 + $0x38] sm:$0xff]
  %v348 = vld [vmem:[%s4 + $0x40] sm:$0xff]
  %v349 = vld [vmem:[%s4 + $0x48] sm:$0xff]
  %v350 = vld [vmem:[%s4 + $0x50] sm:$0xff]
  %v351 = vld [vmem:[%s4 + $0x58] sm:$0xff]
  %v352 = vld [vmem:[%s4 + $0x60] sm:$0xff]
  %v353 = vld [vmem:[%s4 + $0x68] sm:$0xff]
  %v354 = vld [vmem:[%s4 + $0x70] sm:$0xff]
  %v355 = vld [vmem:[%s4 + $0x78] sm:$0xff]
  %v356 = vmul.f32 %v340, 0.11111111
  %v357 = vmul.f32 %v341, 0.11111111
  %v358 = vmul.f32 %v342, 0.11111111
  %v359 = vmul.f32 %v343, 0.11111111
  %v360 = vmul.f32 %v344, 0.11111111
  %v361 = vmul.f32 %v345, 0.11111111
  %v362 = vmul.f32 %v346, 0.11111111
  %v363 = vmul.f32 %v347, 0.11111111
  %v364 = vmul.f32 %v348, 0.11111111
  %v365 = vmul.f32 %v349, 0.11111111
  %v366 = vmul.f32 %v350, 0.11111111
  %v367 = vmul.f32 %v351, 0.11111111
  %v368 = vmul.f32 %v352, 0.11111111
  %v369 = vmul.f32 %v353, 0.11111111
  %v370 = vmul.f32 %v354, 0.11111111
  %v371 = vmul.f32 %v355, 0.11111111
  %v373 = vlaneseq
  %v374 = vshrl.u32 %v373, 7
  %v375 = vsub.s32 0, %v374
  %v376 = vrot.slane %v336, %v375
  %v378 = vmul.f32 %v161, %v376
  %v379 = vmul.f32 %v164, %v376
  %v380 = vmul.f32 %v169, %v376
  %v381 = vmul.f32 %v172, %v376
  %v382 = vmul.f32 %v177, %v376
  %v383 = vmul.f32 %v180, %v376
  %v384 = vmul.f32 %v185, %v376
  %v385 = vmul.f32 %v188, %v376
  %v386 = vmul.f32 %v193, %v376
  %v387 = vmul.f32 %v196, %v376
  %v388 = vmul.f32 %v201, %v376
  %v389 = vmul.f32 %v204, %v376
  %v390 = vmul.f32 %v209, %v376
  %v391 = vmul.f32 %v212, %v376
  %v392 = vmul.f32 %v217, %v376
  %v393 = vmul.f32 %v220, %v376
  %v394 = vadd.f32 %v356, %v378
  %v395 = vadd.f32 %v357, %v379
  %v396 = vadd.f32 %v358, %v380
  %v397 = vadd.f32 %v359, %v381
  %v398 = vadd.f32 %v360, %v382
  %v399 = vadd.f32 %v361, %v383
  %v400 = vadd.f32 %v362, %v384
  %v401 = vadd.f32 %v363, %v385
  %v402 = vadd.f32 %v364, %v386
  %v403 = vadd.f32 %v365, %v387
  %v404 = vadd.f32 %v366, %v388
  %v405 = vadd.f32 %v367, %v389
  %v406 = vadd.f32 %v368, %v390
  %v407 = vadd.f32 %v369, %v391
  %v408 = vadd.f32 %v370, %v392
  %v409 = vadd.f32 %v371, %v393
  %v411 = vlaneseq
  %v412 = vshrl.u32 %v411, 7
  %v413 = vsub.s32 0, %v412
  %v414 = vrot.slane %v339, %v413
  %v416 = vadd.f32 %v394, %v414
  %v417 = vadd.f32 %v395, %v414
  %v418 = vadd.f32 %v396, %v414
  %v419 = vadd.f32 %v397, %v414
  %v420 = vadd.f32 %v398, %v414
  %v421 = vadd.f32 %v399, %v414
  %v422 = vadd.f32 %v400, %v414
  %v423 = vadd.f32 %v401, %v414
  %v424 = vadd.f32 %v402, %v414
  %v425 = vadd.f32 %v403, %v414
  %v426 = vadd.f32 %v404, %v414
  %v427 = vadd.f32 %v405, %v414
  %v428 = vadd.f32 %v406, %v414
  %v429 = vadd.f32 %v407, %v414
  %v430 = vadd.f32 %v408, %v414
  %v431 = vadd.f32 %v409, %v414
  %432 = vst.msk [vmem:[%s5] sm:$0xff] %vm223, %v416
  %433 = vst.msk [vmem:[%s5 + $0x8] sm:$0xff] %vm223, %v417
  %434 = vst.msk [vmem:[%s5 + $0x10] sm:$0xff] %vm223, %v418
  %435 = vst.msk [vmem:[%s5 + $0x18] sm:$0xff] %vm223, %v419
  %436 = vst.msk [vmem:[%s5 + $0x20] sm:$0xff] %vm223, %v420
  %437 = vst.msk [vmem:[%s5 + $0x28] sm:$0xff] %vm223, %v421
  %438 = vst.msk [vmem:[%s5 + $0x30] sm:$0xff] %vm223, %v422
  %439 = vst.msk [vmem:[%s5 + $0x38] sm:$0xff] %vm223, %v423
  %440 = vst.msk [vmem:[%s5 + $0x40] sm:$0xff] %vm223, %v424
  %441 = vst.msk [vmem:[%s5 + $0x48] sm:$0xff] %vm223, %v425
  %442 = vst.msk [vmem:[%s5 + $0x50] sm:$0xff] %vm223, %v426
  %443 = vst.msk [vmem:[%s5 + $0x58] sm:$0xff] %vm223, %v427
  %444 = vst.msk [vmem:[%s5 + $0x60] sm:$0xff] %vm223, %v428
  %445 = vst.msk [vmem:[%s5 + $0x68] sm:$0xff] %vm223, %v429
  %446 = vst.msk [vmem:[%s5 + $0x70] sm:$0xff] %vm223, %v430
  %447 = vst.msk [vmem:[%s5 + $0x78] sm:$0xff] %vm223, %v431
  // Predicated region
  $region22: #{_lambda_.5} parent=0 // pred_check
    _
  $region23: #{_lambda_.5} parent=0 // pred_check_branch
    %449 = sbr.rel (0) target = $region25
  $region24: #{_lambda_.5} parent=0 // pred_region
    _
  $region25: #{_lambda_.5} parent=0 // pred_fallthru
    _
  // Predicated region
  $region26: #{_lambda_.5} parent=0 // pred_check
    _
  $region27: #{_lambda_.5} parent=0 // pred_check_branch
    %451 = sbr.rel (0) target = $region29
  $region28: #{_lambda_.5} parent=0 // pred_region
    _
  $region29: #{_lambda_.5} parent=0 // pred_fallthru
    _

</llo_original>
